<compile_context>
chip_gen: v6e
topology: v6e:2x2x1
jax: 0.10.0
libtpu: 0.0.40
codegen_flags: <defaults>
</compile_context>

<pallas_src>
import functools

import jax
import jax.numpy as jnp
import numpy as np
from jax.experimental import pallas as pl
from jax.experimental.pallas import tpu as pltpu


_HEAD_LANES = 128  # lane-dense padded width of the fused value||advantage head


def _swish(x):
    return x * jax.nn.sigmoid(x)


def _conv_out(n, k, s):
    return (n - k) // s + 1


# ---------------------------------------------------------------------------
# Pallas kernel: full DuelingDQN forward for one (padded) batch
# ---------------------------------------------------------------------------
def _fused_forward_kernel(
    x_ref,                  # (tb, H, W*C) f32   NHWC rows, batch zero-padded
    w1_ref, b1_ref,         # (kh1*W*C,   wo1*32) bf16 , (1, wo1*32) f32
    w2_ref, b2_ref,         # (k2*wo1*32, wo2*64) bf16 , (1, wo2*64) f32
    w3_ref, b3_ref,         # (k3*wo2*64, wo3*64) bf16 , (1, wo3*64) f32
    wl_ref, bl_ref,         # (flat, 512) bf16 , (1, 512) f32
    wh_ref, bh_ref,         # (512, 128)  bf16 , (1, 128) f32  (value || adv, 0-pad)
    out_ref,                # (tb, 128) f32 : Q-values in lanes [:num_actions]
    *, tb, b_real, dims, num_actions,
):
    (kh1, s1, ho1), (k2, s2, ho2), (k3, s3, ho3) = dims
    f32, bf16 = jnp.float32, jnp.bfloat16

    def conv_rows(src, n_rows, k, s, w_ref, b_ref):
        # src[r] : (tb, in_lanes) lane-contiguous input row r.
        # One M-stacked matmul against a widened (banded) weight produces all
        # output x-positions of every output row at once.
        rows = [jnp.concatenate([src[oh * s + i] for i in range(k)], axis=-1)
                for oh in range(n_rows)]                       # each (tb, k*in_lanes)
        m = jnp.stack(rows, axis=0).reshape(n_rows * tb, -1).astype(bf16)
        y = jnp.dot(m, w_ref[...], preferred_element_type=f32)  # (n_rows*tb, out_lanes)
        y = _swish(y + b_ref[...]).astype(bf16)
        return y.reshape(n_rows, tb, y.shape[-1])                # [oh][b, ow*Cout + c]

    x = x_ref[...]                                               # (tb, H, W*C) f32
    src0 = [x[:, r, :] for r in range(x.shape[1])]               # H lane-contiguous rows

    h1 = conv_rows(src0, ho1, kh1, s1, w1_ref, b1_ref)           # (ho1, tb, wo1*32)
    h2 = conv_rows(h1, ho2, k2, s2, w2_ref, b2_ref)              # (ho2, tb, wo2*64)
    h3 = conv_rows(h2, ho3, k3, s3, w3_ref, b3_ref)              # (ho3, tb, wo3*64)

    # NHWC flatten: lanes ordered (h, w, c) — wl rows were permuted to match.
    flat = jnp.concatenate([h3[r] for r in range(ho3)], axis=-1)  # (tb, flat) bf16

    hid = jnp.dot(flat, wl_ref[...], preferred_element_type=f32)
    hid = _swish(hid + bl_ref[...]).astype(bf16)                  # (tb, 512)

    # fused dueling head: one lane-dense 128-wide MXU dot
    slab = jnp.dot(hid, wh_ref[...], preferred_element_type=f32) + bh_ref[...]
    adv = slab[:, num_actions:num_actions + 1]                    # (tb, 1)
    # torch.mean(advantage): mean over ALL (real) batch elements
    adv_mean = jnp.sum(adv[:b_real]) / b_real
    out_ref[...] = slab + (adv - adv_mean)   # lanes [:A] are the Q-values


# ---------------------------------------------------------------------------
# One-time weight re-layout: widened "row-Toeplitz" conv weights, fused head
# ---------------------------------------------------------------------------
def prepare_params(params, image_shape, num_actions):
    c, h, w = image_shape
    ho1, wo1 = _conv_out(h, 8, 4), _conv_out(w, 8, 4)
    ho2, wo2 = _conv_out(ho1, 4, 2), _conv_out(wo1, 4, 2)
    ho3, wo3 = _conv_out(ho2, 3, 1), _conv_out(wo2, 3, 1)
    flat = 64 * ho3 * wo3
    assert num_actions + 1 <= _HEAD_LANES
    bf16, f32 = jnp.bfloat16, jnp.float32
    a = num_actions

    def widen(w_oihw, in_w, in_c, stride):
        # (cout, cin, kh, kw) -> (kh*in_w*in_c, wo*cout) zero-banded weight so
        # that [row-of-kh-input-rows] @ W_big == conv output row (all ow at once).
        w_np = np.asarray(w_oihw, np.float32)
        cout, cin, kh, kw = w_np.shape
        wo = _conv_out(in_w, kw, stride)
        wp = np.transpose(w_np, (2, 3, 1, 0))                 # (kh, kw, cin, cout)
        big = np.zeros((kh * in_w * in_c, wo * cout), np.float32)
        for ow in range(wo):
            for i in range(kh):
                r0 = i * in_w * in_c + ow * stride * in_c
                big[r0:r0 + kw * in_c, ow * cout:(ow + 1) * cout] = \
                    wp[i].reshape(kw * in_c, cout)
        return big

    def tile_bias(b, wo):
        return np.tile(np.asarray(b, np.float32), wo).reshape(1, -1)

    w1 = widen(params["w1"], w, c, 4)          # (8*W*C,      wo1*32)
    w2 = widen(params["w2"], wo1, 32, 2)       # (4*wo1*32,   wo2*64)
    w3 = widen(params["w3"], wo2, 64, 1)       # (3*wo2*64,   wo3*64)

    # linear rows permuted from torch NCHW-flatten order (c,h,w) to NHWC (h,w,c)
    wl = (np.asarray(params["wl"], np.float32)
          .reshape(64, ho3, wo3, 512).transpose(1, 2, 0, 3).reshape(flat, 512))

    # fused lane-padded dueling head: cols [:A] = value, col A = advantage
    wh = np.zeros((512, _HEAD_LANES), np.float32)
    wh[:, :a] = np.asarray(params["wv"], np.float32)
    wh[:, a] = np.asarray(params["wa"], np.float32)[:, 0]
    bh = np.zeros((1, _HEAD_LANES), np.float32)
    bh[0, :a] = np.asarray(params["bv"], np.float32)
    bh[0, a] = np.asarray(params["ba"], np.float32)[0]

    return {
        "w1": jnp.asarray(w1, bf16), "b1": jnp.asarray(tile_bias(params["b1"], wo1), f32),
        "w2": jnp.asarray(w2, bf16), "b2": jnp.asarray(tile_bias(params["b2"], wo2), f32),
        "w3": jnp.asarray(w3, bf16), "b3": jnp.asarray(tile_bias(params["b3"], wo3), f32),
        "wl": jnp.asarray(wl, bf16), "bl": jnp.asarray(params["bl"], f32).reshape(1, 512),
        "wh": jnp.asarray(wh, bf16), "bh": jnp.asarray(bh, f32),
    }


# ---------------------------------------------------------------------------
# JAX wrapper
# ---------------------------------------------------------------------------
@functools.partial(jax.jit, static_argnames=("num_actions",))
def dueling_dqn_forward(x_nchw, prep, *, num_actions):
    B, C, H, W = x_nchw.shape
    ho1, wo1 = _conv_out(H, 8, 4), _conv_out(W, 8, 4)
    ho2, wo2 = _conv_out(ho1, 4, 2), _conv_out(wo1, 4, 2)
    ho3, wo3 = _conv_out(ho2, 3, 1), _conv_out(wo2, 3, 1)
    flat = 64 * ho3 * wo3

    # pad batch to a sublane multiple; single full-batch tile, head fused
    tb = ((B + 7) // 8) * 8
    xr = jnp.transpose(x_nchw, (0, 2, 3, 1)).reshape(B, H, W * C)   # NHWC rows
    if tb != B:
        xr = jnp.concatenate([xr, jnp.zeros((tb - B, H, W * C), xr.dtype)], axis=0)

    dims = ((8, 4, ho1), (4, 2, ho2), (3, 1, ho3))
    kernel = functools.partial(_fused_forward_kernel, tb=tb, b_real=B,
                               dims=dims, num_actions=num_actions)

    def resident(arr):
        # full-array block, constant index_map -> stays VMEM-resident
        return pl.BlockSpec(arr.shape, lambda i, _n=arr.ndim: (0,) * _n)

    flops = 2 * tb * (ho1 * (8 * W * C) * (wo1 * 32)
                      + ho2 * (4 * wo1 * 32) * (wo2 * 64)
                      + ho3 * (3 * wo2 * 64) * (wo3 * 64)
                      + flat * 512 + 512 * _HEAD_LANES)
    transc = tb * (ho1 * wo1 * 32 + ho2 * wo2 * 64 + ho3 * wo3 * 64 + 512)
    bytes_accessed = int(xr.size * xr.dtype.itemsize
                         + sum(int(v.size) * v.dtype.itemsize for v in prep.values())
                         + tb * _HEAD_LANES * 4)

    slab = pl.pallas_call(
        kernel,
        out_shape=jax.ShapeDtypeStruct((tb, _HEAD_LANES), jnp.float32),
        grid=(1,),
        in_specs=[
            resident(xr),
            resident(prep["w1"]), resident(prep["b1"]),
            resident(prep["w2"]), resident(prep["b2"]),
            resident(prep["w3"]), resident(prep["b3"]),
            resident(prep["wl"]), resident(prep["bl"]),
            resident(prep["wh"]), resident(prep["bh"]),
        ],
        out_specs=pl.BlockSpec((tb, _HEAD_LANES), lambda i: (0, 0)),
        compiler_params=pltpu.CompilerParams(
            dimension_semantics=("arbitrary",),
            vmem_limit_bytes=32 * 1024 * 1024),
        cost_estimate=pl.CostEstimate(
            flops=flops, transcendentals=transc, bytes_accessed=bytes_accessed),
    )(xr, prep["w1"], prep["b1"], prep["w2"], prep["b2"],
      prep["w3"], prep["b3"], prep["wl"], prep["bl"], prep["wh"], prep["bh"])

    return slab[:B, :num_actions]


# ---------------------------------------------------------------------------
# Parameter init (matches the PyTorch module's layer shapes) + f32 reference
# ---------------------------------------------------------------------------
def init_params(key, image_shape, output_size):
    c, h, w = image_shape
    h1, w1 = _conv_out(h, 8, 4), _conv_out(w, 8, 4)
    h2, w2 = _conv_out(h1, 4, 2), _conv_out(w1, 4, 2)
    h3, w3 = _conv_out(h2, 3, 1), _conv_out(w2, 3, 1)
    flat = 64 * h3 * w3
    keys = jax.random.split(key, 12)

    def u(k, shape, fan_in):
        bound = 1.0 / np.sqrt(fan_in)
        return jax.random.uniform(k, shape, jnp.float32, -bound, bound)

    return {
        "w1": u(keys[0], (32, c, 8, 8), c * 8 * 8),
        "b1": u(keys[1], (32,), c * 8 * 8),
        "w2": u(keys[2], (64, 32, 4, 4), 32 * 4 * 4),
        "b2": u(keys[3], (64,), 32 * 4 * 4),
        "w3": u(keys[4], (64, 64, 3, 3), 64 * 3 * 3),
        "b3": u(keys[5], (64,), 64 * 3 * 3),
        "wl": u(keys[6], (flat, 512), flat),
        "bl": u(keys[7], (512,), flat),
        "wv": u(keys[8], (512, output_size), 512),   # linear_value: 512 -> A
        "bv": u(keys[9], (output_size,), 512),
        "wa": u(keys[10], (512, 1), 512),            # linear_advantage: 512 -> 1
        "ba": u(keys[11], (1,), 512),
    }


def reference_forward(x, p):
    def conv(x, w, b, stride):
        y = jax.lax.conv_general_dilated(
            x, w, stride, "VALID", dimension_numbers=("NCHW", "OIHW", "NCHW"))
        y = y + b[None, :, None, None]
        return y * jax.nn.sigmoid(y)

    net = conv(x, p["w1"], p["b1"], (4, 4))
    net = conv(net, p["w2"], p["b2"], (2, 2))
    net = conv(net, p["w3"], p["b3"], (1, 1))
    flat = net.reshape(net.shape[0], -1)
    h = flat @ p["wl"] + p["bl"]
    h = h * jax.nn.sigmoid(h)
    value = h @ p["wv"] + p["bv"]
    adv = h @ p["wa"] + p["ba"]
    return value + (adv - jnp.mean(adv))


if __name__ == "__main__":
    key = jax.random.PRNGKey(0)
    k_params, k_x1, k_x2 = jax.random.split(key, 3)

    image_shape = (4, 36, 36)      # smallest (C,H,W) that survives the conv stack
    output_size = 6

    params = init_params(k_params, image_shape, output_size)
    prep = prepare_params(params, image_shape, output_size)

    # batch=2  : exercises the zero-padded batch (tb=8) + masked advantage mean
    # batch=16 : sublane-aligned full-batch tile
    for batch, k_x in ((2, k_x1), (16, k_x2)):
        x = jax.random.normal(k_x, (batch,) + image_shape, dtype=jnp.float32)
        q = jax.block_until_ready(
            dueling_dqn_forward(x, prep, num_actions=output_size))
        q_ref = jax.block_until_ready(reference_forward(x, params))
        # bf16 MXU operands with f32 accumulation -> relaxed (but tight) tolerance
        np.testing.assert_allclose(np.asarray(q), np.asarray(q_ref),
                                   rtol=1e-2, atol=1e-2)

    print("KERNEL_OK")
</pallas_src>

<mosaic_0001>
module attributes {stable_mosaic.version = 11 : i64} {
  func.func @_fused_forward_kernel(%arg0: i32, %arg1: memref<8x36x144xf32, #tpu.memory_space<vmem>>, %arg2: memref<1152x256xbf16, #tpu.memory_space<vmem>>, %arg3: memref<1x256xf32, #tpu.memory_space<vmem>>, %arg4: memref<1024x192xbf16, #tpu.memory_space<vmem>>, %arg5: memref<1x192xf32, #tpu.memory_space<vmem>>, %arg6: memref<576x64xbf16, #tpu.memory_space<vmem>>, %arg7: memref<1x64xf32, #tpu.memory_space<vmem>>, %arg8: memref<64x512xbf16, #tpu.memory_space<vmem>>, %arg9: memref<1x512xf32, #tpu.memory_space<vmem>>, %arg10: memref<512x128xbf16, #tpu.memory_space<vmem>>, %arg11: memref<1x128xf32, #tpu.memory_space<vmem>>, %arg12: memref<8x128xf32, #tpu.memory_space<vmem>>) attributes {dimension_semantics = [#tpu.dimension_semantics<arbitrary>], iteration_bounds = array<i64: 1>, scalar_prefetch = 0 : i64, scratch_operands = 0 : i64, tpu.core_type = #tpu.core_type<tc>, window_params = [{pipeline_mode = #tpu.pipeline_mode<synchronous>, transform_indices = @transform_0, window_bounds = array<i64: 8, 36, 144>}, {pipeline_mode = #tpu.pipeline_mode<synchronous>, transform_indices = @transform_1, window_bounds = array<i64: 1152, 256>}, {pipeline_mode = #tpu.pipeline_mode<synchronous>, transform_indices = @transform_2, window_bounds = array<i64: 1, 256>}, {pipeline_mode = #tpu.pipeline_mode<synchronous>, transform_indices = @transform_3, window_bounds = array<i64: 1024, 192>}, {pipeline_mode = #tpu.pipeline_mode<synchronous>, transform_indices = @transform_4, window_bounds = array<i64: 1, 192>}, {pipeline_mode = #tpu.pipeline_mode<synchronous>, transform_indices = @transform_5, window_bounds = array<i64: 576, 64>}, {pipeline_mode = #tpu.pipeline_mode<synchronous>, transform_indices = @transform_6, window_bounds = array<i64: 1, 64>}, {pipeline_mode = #tpu.pipeline_mode<synchronous>, transform_indices = @transform_7, window_bounds = array<i64: 64, 512>}, {pipeline_mode = #tpu.pipeline_mode<synchronous>, transform_indices = @transform_8, window_bounds = array<i64: 1, 512>}, {pipeline_mode = #tpu.pipeline_mode<synchronous>, transform_indices = @transform_9, window_bounds = array<i64: 512, 128>}, {pipeline_mode = #tpu.pipeline_mode<synchronous>, transform_indices = @transform_10, window_bounds = array<i64: 1, 128>}, {pipeline_mode = #tpu.pipeline_mode<synchronous>, transform_indices = @transform_11, window_bounds = array<i64: 8, 128>}]} {
    %c0 = arith.constant 0 : index
    %c0_0 = arith.constant 0 : index
    %c0_1 = arith.constant 0 : index
    %0 = vector.load %arg1[%c0, %c0_0, %c0_1] : memref<8x36x144xf32, #tpu.memory_space<vmem>>, vector<8x36x144xf32>
    %1 = vector.extract_strided_slice %0 {offsets = [0, 0, 0], sizes = [8, 1, 144], strides = [1, 1, 1]} : vector<8x36x144xf32> to vector<8x1x144xf32>
    %2 = vector.shape_cast %1 : vector<8x1x144xf32> to vector<8x144xf32>
    %3 = vector.extract_strided_slice %0 {offsets = [0, 1, 0], sizes = [8, 1, 144], strides = [1, 1, 1]} : vector<8x36x144xf32> to vector<8x1x144xf32>
    %4 = vector.shape_cast %3 : vector<8x1x144xf32> to vector<8x144xf32>
    %5 = vector.extract_strided_slice %0 {offsets = [0, 2, 0], sizes = [8, 1, 144], strides = [1, 1, 1]} : vector<8x36x144xf32> to vector<8x1x144xf32>
    %6 = vector.shape_cast %5 : vector<8x1x144xf32> to vector<8x144xf32>
    %7 = vector.extract_strided_slice %0 {offsets = [0, 3, 0], sizes = [8, 1, 144], strides = [1, 1, 1]} : vector<8x36x144xf32> to vector<8x1x144xf32>
    %8 = vector.shape_cast %7 : vector<8x1x144xf32> to vector<8x144xf32>
    %9 = vector.extract_strided_slice %0 {offsets = [0, 4, 0], sizes = [8, 1, 144], strides = [1, 1, 1]} : vector<8x36x144xf32> to vector<8x1x144xf32>
    %10 = vector.shape_cast %9 : vector<8x1x144xf32> to vector<8x144xf32>
    %11 = vector.extract_strided_slice %0 {offsets = [0, 5, 0], sizes = [8, 1, 144], strides = [1, 1, 1]} : vector<8x36x144xf32> to vector<8x1x144xf32>
    %12 = vector.shape_cast %11 : vector<8x1x144xf32> to vector<8x144xf32>
    %13 = vector.extract_strided_slice %0 {offsets = [0, 6, 0], sizes = [8, 1, 144], strides = [1, 1, 1]} : vector<8x36x144xf32> to vector<8x1x144xf32>
    %14 = vector.shape_cast %13 : vector<8x1x144xf32> to vector<8x144xf32>
    %15 = vector.extract_strided_slice %0 {offsets = [0, 7, 0], sizes = [8, 1, 144], strides = [1, 1, 1]} : vector<8x36x144xf32> to vector<8x1x144xf32>
    %16 = vector.shape_cast %15 : vector<8x1x144xf32> to vector<8x144xf32>
    %17 = vector.extract_strided_slice %0 {offsets = [0, 8, 0], sizes = [8, 1, 144], strides = [1, 1, 1]} : vector<8x36x144xf32> to vector<8x1x144xf32>
    %18 = vector.shape_cast %17 : vector<8x1x144xf32> to vector<8x144xf32>
    %19 = vector.extract_strided_slice %0 {offsets = [0, 9, 0], sizes = [8, 1, 144], strides = [1, 1, 1]} : vector<8x36x144xf32> to vector<8x1x144xf32>
    %20 = vector.shape_cast %19 : vector<8x1x144xf32> to vector<8x144xf32>
    %21 = vector.extract_strided_slice %0 {offsets = [0, 10, 0], sizes = [8, 1, 144], strides = [1, 1, 1]} : vector<8x36x144xf32> to vector<8x1x144xf32>
    %22 = vector.shape_cast %21 : vector<8x1x144xf32> to vector<8x144xf32>
    %23 = vector.extract_strided_slice %0 {offsets = [0, 11, 0], sizes = [8, 1, 144], strides = [1, 1, 1]} : vector<8x36x144xf32> to vector<8x1x144xf32>
    %24 = vector.shape_cast %23 : vector<8x1x144xf32> to vector<8x144xf32>
    %25 = vector.extract_strided_slice %0 {offsets = [0, 12, 0], sizes = [8, 1, 144], strides = [1, 1, 1]} : vector<8x36x144xf32> to vector<8x1x144xf32>
    %26 = vector.shape_cast %25 : vector<8x1x144xf32> to vector<8x144xf32>
    %27 = vector.extract_strided_slice %0 {offsets = [0, 13, 0], sizes = [8, 1, 144], strides = [1, 1, 1]} : vector<8x36x144xf32> to vector<8x1x144xf32>
    %28 = vector.shape_cast %27 : vector<8x1x144xf32> to vector<8x144xf32>
    %29 = vector.extract_strided_slice %0 {offsets = [0, 14, 0], sizes = [8, 1, 144], strides = [1, 1, 1]} : vector<8x36x144xf32> to vector<8x1x144xf32>
    %30 = vector.shape_cast %29 : vector<8x1x144xf32> to vector<8x144xf32>
    %31 = vector.extract_strided_slice %0 {offsets = [0, 15, 0], sizes = [8, 1, 144], strides = [1, 1, 1]} : vector<8x36x144xf32> to vector<8x1x144xf32>
    %32 = vector.shape_cast %31 : vector<8x1x144xf32> to vector<8x144xf32>
    %33 = vector.extract_strided_slice %0 {offsets = [0, 16, 0], sizes = [8, 1, 144], strides = [1, 1, 1]} : vector<8x36x144xf32> to vector<8x1x144xf32>
    %34 = vector.shape_cast %33 : vector<8x1x144xf32> to vector<8x144xf32>
    %35 = vector.extract_strided_slice %0 {offsets = [0, 17, 0], sizes = [8, 1, 144], strides = [1, 1, 1]} : vector<8x36x144xf32> to vector<8x1x144xf32>
    %36 = vector.shape_cast %35 : vector<8x1x144xf32> to vector<8x144xf32>
    %37 = vector.extract_strided_slice %0 {offsets = [0, 18, 0], sizes = [8, 1, 144], strides = [1, 1, 1]} : vector<8x36x144xf32> to vector<8x1x144xf32>
    %38 = vector.shape_cast %37 : vector<8x1x144xf32> to vector<8x144xf32>
    %39 = vector.extract_strided_slice %0 {offsets = [0, 19, 0], sizes = [8, 1, 144], strides = [1, 1, 1]} : vector<8x36x144xf32> to vector<8x1x144xf32>
    %40 = vector.shape_cast %39 : vector<8x1x144xf32> to vector<8x144xf32>
    %41 = vector.extract_strided_slice %0 {offsets = [0, 20, 0], sizes = [8, 1, 144], strides = [1, 1, 1]} : vector<8x36x144xf32> to vector<8x1x144xf32>
    %42 = vector.shape_cast %41 : vector<8x1x144xf32> to vector<8x144xf32>
    %43 = vector.extract_strided_slice %0 {offsets = [0, 21, 0], sizes = [8, 1, 144], strides = [1, 1, 1]} : vector<8x36x144xf32> to vector<8x1x144xf32>
    %44 = vector.shape_cast %43 : vector<8x1x144xf32> to vector<8x144xf32>
    %45 = vector.extract_strided_slice %0 {offsets = [0, 22, 0], sizes = [8, 1, 144], strides = [1, 1, 1]} : vector<8x36x144xf32> to vector<8x1x144xf32>
    %46 = vector.shape_cast %45 : vector<8x1x144xf32> to vector<8x144xf32>
    %47 = vector.extract_strided_slice %0 {offsets = [0, 23, 0], sizes = [8, 1, 144], strides = [1, 1, 1]} : vector<8x36x144xf32> to vector<8x1x144xf32>
    %48 = vector.shape_cast %47 : vector<8x1x144xf32> to vector<8x144xf32>
    %49 = vector.extract_strided_slice %0 {offsets = [0, 24, 0], sizes = [8, 1, 144], strides = [1, 1, 1]} : vector<8x36x144xf32> to vector<8x1x144xf32>
    %50 = vector.shape_cast %49 : vector<8x1x144xf32> to vector<8x144xf32>
    %51 = vector.extract_strided_slice %0 {offsets = [0, 25, 0], sizes = [8, 1, 144], strides = [1, 1, 1]} : vector<8x36x144xf32> to vector<8x1x144xf32>
    %52 = vector.shape_cast %51 : vector<8x1x144xf32> to vector<8x144xf32>
    %53 = vector.extract_strided_slice %0 {offsets = [0, 26, 0], sizes = [8, 1, 144], strides = [1, 1, 1]} : vector<8x36x144xf32> to vector<8x1x144xf32>
    %54 = vector.shape_cast %53 : vector<8x1x144xf32> to vector<8x144xf32>
    %55 = vector.extract_strided_slice %0 {offsets = [0, 27, 0], sizes = [8, 1, 144], strides = [1, 1, 1]} : vector<8x36x144xf32> to vector<8x1x144xf32>
    %56 = vector.shape_cast %55 : vector<8x1x144xf32> to vector<8x144xf32>
    %57 = vector.extract_strided_slice %0 {offsets = [0, 28, 0], sizes = [8, 1, 144], strides = [1, 1, 1]} : vector<8x36x144xf32> to vector<8x1x144xf32>
    %58 = vector.shape_cast %57 : vector<8x1x144xf32> to vector<8x144xf32>
    %59 = vector.extract_strided_slice %0 {offsets = [0, 29, 0], sizes = [8, 1, 144], strides = [1, 1, 1]} : vector<8x36x144xf32> to vector<8x1x144xf32>
    %60 = vector.shape_cast %59 : vector<8x1x144xf32> to vector<8x144xf32>
    %61 = vector.extract_strided_slice %0 {offsets = [0, 30, 0], sizes = [8, 1, 144], strides = [1, 1, 1]} : vector<8x36x144xf32> to vector<8x1x144xf32>
    %62 = vector.shape_cast %61 : vector<8x1x144xf32> to vector<8x144xf32>
    %63 = vector.extract_strided_slice %0 {offsets = [0, 31, 0], sizes = [8, 1, 144], strides = [1, 1, 1]} : vector<8x36x144xf32> to vector<8x1x144xf32>
    %64 = vector.shape_cast %63 : vector<8x1x144xf32> to vector<8x144xf32>
    %65 = vector.extract_strided_slice %0 {offsets = [0, 32, 0], sizes = [8, 1, 144], strides = [1, 1, 1]} : vector<8x36x144xf32> to vector<8x1x144xf32>
    %66 = vector.shape_cast %65 : vector<8x1x144xf32> to vector<8x144xf32>
    %67 = vector.extract_strided_slice %0 {offsets = [0, 33, 0], sizes = [8, 1, 144], strides = [1, 1, 1]} : vector<8x36x144xf32> to vector<8x1x144xf32>
    %68 = vector.shape_cast %67 : vector<8x1x144xf32> to vector<8x144xf32>
    %69 = vector.extract_strided_slice %0 {offsets = [0, 34, 0], sizes = [8, 1, 144], strides = [1, 1, 1]} : vector<8x36x144xf32> to vector<8x1x144xf32>
    %70 = vector.shape_cast %69 : vector<8x1x144xf32> to vector<8x144xf32>
    %71 = vector.extract_strided_slice %0 {offsets = [0, 35, 0], sizes = [8, 1, 144], strides = [1, 1, 1]} : vector<8x36x144xf32> to vector<8x1x144xf32>
    %72 = vector.shape_cast %71 : vector<8x1x144xf32> to vector<8x144xf32>
    %73 = tpu.concatenate %2, %4, %6, %8, %10, %12, %14, %16 in 1 : vector<8x144xf32>, vector<8x144xf32>, vector<8x144xf32>, vector<8x144xf32>, vector<8x144xf32>, vector<8x144xf32>, vector<8x144xf32>, vector<8x144xf32> -> vector<8x1152xf32>
    %74 = tpu.concatenate %10, %12, %14, %16, %18, %20, %22, %24 in 1 : vector<8x144xf32>, vector<8x144xf32>, vector<8x144xf32>, vector<8x144xf32>, vector<8x144xf32>, vector<8x144xf32>, vector<8x144xf32>, vector<8x144xf32> -> vector<8x1152xf32>
    %75 = tpu.concatenate %18, %20, %22, %24, %26, %28, %30, %32 in 1 : vector<8x144xf32>, vector<8x144xf32>, vector<8x144xf32>, vector<8x144xf32>, vector<8x144xf32>, vector<8x144xf32>, vector<8x144xf32>, vector<8x144xf32> -> vector<8x1152xf32>
    %76 = tpu.concatenate %26, %28, %30, %32, %34, %36, %38, %40 in 1 : vector<8x144xf32>, vector<8x144xf32>, vector<8x144xf32>, vector<8x144xf32>, vector<8x144xf32>, vector<8x144xf32>, vector<8x144xf32>, vector<8x144xf32> -> vector<8x1152xf32>
    %77 = tpu.concatenate %34, %36, %38, %40, %42, %44, %46, %48 in 1 : vector<8x144xf32>, vector<8x144xf32>, vector<8x144xf32>, vector<8x144xf32>, vector<8x144xf32>, vector<8x144xf32>, vector<8x144xf32>, vector<8x144xf32> -> vector<8x1152xf32>
    %78 = tpu.concatenate %42, %44, %46, %48, %50, %52, %54, %56 in 1 : vector<8x144xf32>, vector<8x144xf32>, vector<8x144xf32>, vector<8x144xf32>, vector<8x144xf32>, vector<8x144xf32>, vector<8x144xf32>, vector<8x144xf32> -> vector<8x1152xf32>
    %79 = tpu.concatenate %50, %52, %54, %56, %58, %60, %62, %64 in 1 : vector<8x144xf32>, vector<8x144xf32>, vector<8x144xf32>, vector<8x144xf32>, vector<8x144xf32>, vector<8x144xf32>, vector<8x144xf32>, vector<8x144xf32> -> vector<8x1152xf32>
    %80 = tpu.concatenate %58, %60, %62, %64, %66, %68, %70, %72 in 1 : vector<8x144xf32>, vector<8x144xf32>, vector<8x144xf32>, vector<8x144xf32>, vector<8x144xf32>, vector<8x144xf32>, vector<8x144xf32>, vector<8x144xf32> -> vector<8x1152xf32>
    %81 = vector.shape_cast %73 : vector<8x1152xf32> to vector<1x8x1152xf32>
    %82 = vector.shape_cast %74 : vector<8x1152xf32> to vector<1x8x1152xf32>
    %83 = vector.shape_cast %75 : vector<8x1152xf32> to vector<1x8x1152xf32>
    %84 = vector.shape_cast %76 : vector<8x1152xf32> to vector<1x8x1152xf32>
    %85 = vector.shape_cast %77 : vector<8x1152xf32> to vector<1x8x1152xf32>
    %86 = vector.shape_cast %78 : vector<8x1152xf32> to vector<1x8x1152xf32>
    %87 = vector.shape_cast %79 : vector<8x1152xf32> to vector<1x8x1152xf32>
    %88 = vector.shape_cast %80 : vector<8x1152xf32> to vector<1x8x1152xf32>
    %89 = tpu.concatenate %81, %82, %83, %84, %85, %86, %87, %88 in 0 : vector<1x8x1152xf32>, vector<1x8x1152xf32>, vector<1x8x1152xf32>, vector<1x8x1152xf32>, vector<1x8x1152xf32>, vector<1x8x1152xf32>, vector<1x8x1152xf32>, vector<1x8x1152xf32> -> vector<8x8x1152xf32>
    %90 = vector.shape_cast %89 : vector<8x8x1152xf32> to vector<64x1152xf32>
    %91 = arith.truncf %90 : vector<64x1152xf32> to vector<64x1152xbf16>
    %c0_2 = arith.constant 0 : index
    %c0_3 = arith.constant 0 : index
    %92 = vector.load %arg2[%c0_2, %c0_3] : memref<1152x256xbf16, #tpu.memory_space<vmem>>, vector<1152x256xbf16>
    %cst = arith.constant dense<0.000000e+00> : vector<64x256xf32>
    %93 = tpu.matmul %91, %92, %cst {dimension_numbers = #tpu.dot_dimension_numbers<[1], [0], [0], [1], [0, 0, 1, 1], [], []>} : vector<64x1152xbf16>, vector<1152x256xbf16>, vector<64x256xf32> -> vector<64x256xf32>
    %c0_4 = arith.constant 0 : index
    %c0_5 = arith.constant 0 : index
    %94 = vector.load %arg3[%c0_4, %c0_5] : memref<1x256xf32, #tpu.memory_space<vmem>>, vector<1x256xf32>
    %95 = vector.broadcast %94 : vector<1x256xf32> to vector<64x256xf32>
    %96 = arith.addf %93, %95 : vector<64x256xf32>
    %97 = arith.negf %96 : vector<64x256xf32>
    %98 = math.exp %97 : vector<64x256xf32>
    %cst_6 = arith.constant 1.000000e+00 : f32
    %99 = vector.broadcast %cst_6 : f32 to vector<64x256xf32>
    %100 = arith.addf %99, %98 : vector<64x256xf32>
    %101 = arith.divf %99, %100 : vector<64x256xf32>
    %102 = arith.mulf %96, %101 : vector<64x256xf32>
    %103 = arith.truncf %102 : vector<64x256xf32> to vector<64x256xbf16>
    %104 = vector.shape_cast %103 : vector<64x256xbf16> to vector<8x8x256xbf16>
    %105 = vector.extract_strided_slice %104 {offsets = [0, 0, 0], sizes = [1, 8, 256], strides = [1, 1, 1]} : vector<8x8x256xbf16> to vector<1x8x256xbf16>
    %106 = vector.shape_cast %105 : vector<1x8x256xbf16> to vector<8x256xbf16>
    %107 = vector.extract_strided_slice %104 {offsets = [1, 0, 0], sizes = [1, 8, 256], strides = [1, 1, 1]} : vector<8x8x256xbf16> to vector<1x8x256xbf16>
    %108 = vector.shape_cast %107 : vector<1x8x256xbf16> to vector<8x256xbf16>
    %109 = vector.extract_strided_slice %104 {offsets = [2, 0, 0], sizes = [1, 8, 256], strides = [1, 1, 1]} : vector<8x8x256xbf16> to vector<1x8x256xbf16>
    %110 = vector.shape_cast %109 : vector<1x8x256xbf16> to vector<8x256xbf16>
    %111 = vector.extract_strided_slice %104 {offsets = [3, 0, 0], sizes = [1, 8, 256], strides = [1, 1, 1]} : vector<8x8x256xbf16> to vector<1x8x256xbf16>
    %112 = vector.shape_cast %111 : vector<1x8x256xbf16> to vector<8x256xbf16>
    %113 = tpu.concatenate %106, %108, %110, %112 in 1 : vector<8x256xbf16>, vector<8x256xbf16>, vector<8x256xbf16>, vector<8x256xbf16> -> vector<8x1024xbf16>
    %114 = vector.extract_strided_slice %104 {offsets = [2, 0, 0], sizes = [1, 8, 256], strides = [1, 1, 1]} : vector<8x8x256xbf16> to vector<1x8x256xbf16>
    %115 = vector.shape_cast %114 : vector<1x8x256xbf16> to vector<8x256xbf16>
    %116 = vector.extract_strided_slice %104 {offsets = [3, 0, 0], sizes = [1, 8, 256], strides = [1, 1, 1]} : vector<8x8x256xbf16> to vector<1x8x256xbf16>
    %117 = vector.shape_cast %116 : vector<1x8x256xbf16> to vector<8x256xbf16>
    %118 = vector.extract_strided_slice %104 {offsets = [4, 0, 0], sizes = [1, 8, 256], strides = [1, 1, 1]} : vector<8x8x256xbf16> to vector<1x8x256xbf16>
    %119 = vector.shape_cast %118 : vector<1x8x256xbf16> to vector<8x256xbf16>
    %120 = vector.extract_strided_slice %104 {offsets = [5, 0, 0], sizes = [1, 8, 256], strides = [1, 1, 1]} : vector<8x8x256xbf16> to vector<1x8x256xbf16>
    %121 = vector.shape_cast %120 : vector<1x8x256xbf16> to vector<8x256xbf16>
    %122 = tpu.concatenate %115, %117, %119, %121 in 1 : vector<8x256xbf16>, vector<8x256xbf16>, vector<8x256xbf16>, vector<8x256xbf16> -> vector<8x1024xbf16>
    %123 = vector.extract_strided_slice %104 {offsets = [4, 0, 0], sizes = [1, 8, 256], strides = [1, 1, 1]} : vector<8x8x256xbf16> to vector<1x8x256xbf16>
    %124 = vector.shape_cast %123 : vector<1x8x256xbf16> to vector<8x256xbf16>
    %125 = vector.extract_strided_slice %104 {offsets = [5, 0, 0], sizes = [1, 8, 256], strides = [1, 1, 1]} : vector<8x8x256xbf16> to vector<1x8x256xbf16>
    %126 = vector.shape_cast %125 : vector<1x8x256xbf16> to vector<8x256xbf16>
    %127 = vector.extract_strided_slice %104 {offsets = [6, 0, 0], sizes = [1, 8, 256], strides = [1, 1, 1]} : vector<8x8x256xbf16> to vector<1x8x256xbf16>
    %128 = vector.shape_cast %127 : vector<1x8x256xbf16> to vector<8x256xbf16>
    %129 = vector.extract_strided_slice %104 {offsets = [7, 0, 0], sizes = [1, 8, 256], strides = [1, 1, 1]} : vector<8x8x256xbf16> to vector<1x8x256xbf16>
    %130 = vector.shape_cast %129 : vector<1x8x256xbf16> to vector<8x256xbf16>
    %131 = tpu.concatenate %124, %126, %128, %130 in 1 : vector<8x256xbf16>, vector<8x256xbf16>, vector<8x256xbf16>, vector<8x256xbf16> -> vector<8x1024xbf16>
    %132 = vector.shape_cast %113 : vector<8x1024xbf16> to vector<1x8x1024xbf16>
    %133 = vector.shape_cast %122 : vector<8x1024xbf16> to vector<1x8x1024xbf16>
    %134 = vector.shape_cast %131 : vector<8x1024xbf16> to vector<1x8x1024xbf16>
    %135 = tpu.concatenate %132, %133, %134 in 0 : vector<1x8x1024xbf16>, vector<1x8x1024xbf16>, vector<1x8x1024xbf16> -> vector<3x8x1024xbf16>
    %136 = vector.shape_cast %135 : vector<3x8x1024xbf16> to vector<24x1024xbf16>
    %c0_7 = arith.constant 0 : index
    %c0_8 = arith.constant 0 : index
    %137 = vector.load %arg4[%c0_7, %c0_8] : memref<1024x192xbf16, #tpu.memory_space<vmem>>, vector<1024x192xbf16>
    %cst_9 = arith.constant dense<0.000000e+00> : vector<24x192xf32>
    %138 = tpu.matmul %136, %137, %cst_9 {dimension_numbers = #tpu.dot_dimension_numbers<[1], [0], [0], [1], [0, 0, 1, 1], [], []>} : vector<24x1024xbf16>, vector<1024x192xbf16>, vector<24x192xf32> -> vector<24x192xf32>
    %c0_10 = arith.constant 0 : index
    %c0_11 = arith.constant 0 : index
    %139 = vector.load %arg5[%c0_10, %c0_11] : memref<1x192xf32, #tpu.memory_space<vmem>>, vector<1x192xf32>
    %140 = vector.broadcast %139 : vector<1x192xf32> to vector<24x192xf32>
    %141 = arith.addf %138, %140 : vector<24x192xf32>
    %142 = arith.negf %141 : vector<24x192xf32>
    %143 = math.exp %142 : vector<24x192xf32>
    %cst_12 = arith.constant 1.000000e+00 : f32
    %144 = vector.broadcast %cst_12 : f32 to vector<24x192xf32>
    %145 = arith.addf %144, %143 : vector<24x192xf32>
    %146 = arith.divf %144, %145 : vector<24x192xf32>
    %147 = arith.mulf %141, %146 : vector<24x192xf32>
    %148 = arith.truncf %147 : vector<24x192xf32> to vector<24x192xbf16>
    %149 = vector.shape_cast %148 : vector<24x192xbf16> to vector<3x8x192xbf16>
    %150 = vector.extract_strided_slice %149 {offsets = [0, 0, 0], sizes = [1, 8, 192], strides = [1, 1, 1]} : vector<3x8x192xbf16> to vector<1x8x192xbf16>
    %151 = vector.shape_cast %150 : vector<1x8x192xbf16> to vector<8x192xbf16>
    %152 = vector.extract_strided_slice %149 {offsets = [1, 0, 0], sizes = [1, 8, 192], strides = [1, 1, 1]} : vector<3x8x192xbf16> to vector<1x8x192xbf16>
    %153 = vector.shape_cast %152 : vector<1x8x192xbf16> to vector<8x192xbf16>
    %154 = vector.extract_strided_slice %149 {offsets = [2, 0, 0], sizes = [1, 8, 192], strides = [1, 1, 1]} : vector<3x8x192xbf16> to vector<1x8x192xbf16>
    %155 = vector.shape_cast %154 : vector<1x8x192xbf16> to vector<8x192xbf16>
    %156 = tpu.concatenate %151, %153, %155 in 1 : vector<8x192xbf16>, vector<8x192xbf16>, vector<8x192xbf16> -> vector<8x576xbf16>
    %157 = vector.shape_cast %156 : vector<8x576xbf16> to vector<1x8x576xbf16>
    %158 = vector.shape_cast %157 : vector<1x8x576xbf16> to vector<8x576xbf16>
    %c0_13 = arith.constant 0 : index
    %c0_14 = arith.constant 0 : index
    %159 = vector.load %arg6[%c0_13, %c0_14] : memref<576x64xbf16, #tpu.memory_space<vmem>>, vector<576x64xbf16>
    %cst_15 = arith.constant dense<0.000000e+00> : vector<8x64xf32>
    %160 = tpu.matmul %158, %159, %cst_15 {dimension_numbers = #tpu.dot_dimension_numbers<[1], [0], [0], [1], [0, 0, 1, 1], [], []>} : vector<8x576xbf16>, vector<576x64xbf16>, vector<8x64xf32> -> vector<8x64xf32>
    %c0_16 = arith.constant 0 : index
    %c0_17 = arith.constant 0 : index
    %161 = vector.load %arg7[%c0_16, %c0_17] : memref<1x64xf32, #tpu.memory_space<vmem>>, vector<1x64xf32>
    %162 = vector.broadcast %161 : vector<1x64xf32> to vector<8x64xf32>
    %163 = arith.addf %160, %162 : vector<8x64xf32>
    %164 = arith.negf %163 : vector<8x64xf32>
    %165 = math.exp %164 : vector<8x64xf32>
    %cst_18 = arith.constant 1.000000e+00 : f32
    %166 = vector.broadcast %cst_18 : f32 to vector<8x64xf32>
    %167 = arith.addf %166, %165 : vector<8x64xf32>
    %168 = arith.divf %166, %167 : vector<8x64xf32>
    %169 = arith.mulf %163, %168 : vector<8x64xf32>
    %170 = arith.truncf %169 : vector<8x64xf32> to vector<8x64xbf16>
    %171 = vector.shape_cast %170 : vector<8x64xbf16> to vector<1x8x64xbf16>
    %172 = vector.shape_cast %171 : vector<1x8x64xbf16> to vector<8x64xbf16>
    %c0_19 = arith.constant 0 : index
    %c0_20 = arith.constant 0 : index
    %173 = vector.load %arg8[%c0_19, %c0_20] : memref<64x512xbf16, #tpu.memory_space<vmem>>, vector<64x512xbf16>
    %cst_21 = arith.constant dense<0.000000e+00> : vector<8x512xf32>
    %174 = tpu.matmul %172, %173, %cst_21 {dimension_numbers = #tpu.dot_dimension_numbers<[1], [0], [0], [1], [0, 0, 1, 1], [], []>} : vector<8x64xbf16>, vector<64x512xbf16>, vector<8x512xf32> -> vector<8x512xf32>
    %c0_22 = arith.constant 0 : index
    %c0_23 = arith.constant 0 : index
    %175 = vector.load %arg9[%c0_22, %c0_23] : memref<1x512xf32, #tpu.memory_space<vmem>>, vector<1x512xf32>
    %176 = vector.broadcast %175 : vector<1x512xf32> to vector<8x512xf32>
    %177 = arith.addf %174, %176 : vector<8x512xf32>
    %178 = arith.negf %177 : vector<8x512xf32>
    %179 = math.exp %178 : vector<8x512xf32>
    %cst_24 = arith.constant 1.000000e+00 : f32
    %180 = vector.broadcast %cst_24 : f32 to vector<8x512xf32>
    %181 = arith.addf %180, %179 : vector<8x512xf32>
    %182 = arith.divf %180, %181 : vector<8x512xf32>
    %183 = arith.mulf %177, %182 : vector<8x512xf32>
    %184 = arith.truncf %183 : vector<8x512xf32> to vector<8x512xbf16>
    %c0_25 = arith.constant 0 : index
    %c0_26 = arith.constant 0 : index
    %185 = vector.load %arg10[%c0_25, %c0_26] : memref<512x128xbf16, #tpu.memory_space<vmem>>, vector<512x128xbf16>
    %cst_27 = arith.constant dense<0.000000e+00> : vector<8x128xf32>
    %186 = tpu.matmul %184, %185, %cst_27 {dimension_numbers = #tpu.dot_dimension_numbers<[1], [0], [0], [1], [0, 0, 1, 1], [], []>} : vector<8x512xbf16>, vector<512x128xbf16>, vector<8x128xf32> -> vector<8x128xf32>
    %c0_28 = arith.constant 0 : index
    %c0_29 = arith.constant 0 : index
    %187 = vector.load %arg11[%c0_28, %c0_29] : memref<1x128xf32, #tpu.memory_space<vmem>>, vector<1x128xf32>
    %188 = vector.broadcast %187 : vector<1x128xf32> to vector<8x128xf32>
    %189 = arith.addf %186, %188 : vector<8x128xf32>
    %190 = vector.extract_strided_slice %189 {offsets = [0, 6], sizes = [8, 1], strides = [1, 1]} : vector<8x128xf32> to vector<8x1xf32>
    %191 = vector.extract_strided_slice %190 {offsets = [0, 0], sizes = [2, 1], strides = [1, 1]} : vector<8x1xf32> to vector<2x1xf32>
    %192 = vector.shape_cast %191 : vector<2x1xf32> to vector<1x2x1xf32>
    %cst_30 = arith.constant dense<0.000000e+00> : vector<1xf32>
    %193 = vector.multi_reduction <add>, %192, %cst_30 [1, 2] : vector<1x2x1xf32> to vector<1xf32>
    %194 = vector.shape_cast %193 : vector<1xf32> to vector<1x1x1xf32>
    %195 = vector.extract %194[0, 0, 0] : f32 from vector<1x1x1xf32>
    %cst_31 = arith.constant 2.000000e+00 : f32
    %196 = arith.divf %195, %cst_31 : f32
    %197 = vector.broadcast %196 : f32 to vector<8x1xf32>
    %198 = arith.subf %190, %197 : vector<8x1xf32>
    %199 = vector.broadcast %198 : vector<8x1xf32> to vector<8x128xf32>
    %200 = arith.addf %189, %199 : vector<8x128xf32>
    %c0_32 = arith.constant 0 : index
    %c0_33 = arith.constant 0 : index
    %201 = vector.load %arg12[%c0_32, %c0_33] : memref<8x128xf32, #tpu.memory_space<vmem>>, vector<8x128xf32>
    tpu.vector_store %arg12[%c0_32, %c0_33], %200 {strides = array<i32>} : memref<8x128xf32, #tpu.memory_space<vmem>>, vector<8x128xf32>,
    return
  }
  func.func @transform_0(%arg0: i32) -> (i32, i32, i32) {
    %c0_i32 = arith.constant 0 : i32
    %c0_i32_0 = arith.constant 0 : i32
    %c0_i32_1 = arith.constant 0 : i32
    %c0_i32_2 = arith.constant 0 : i32
    return %c0_i32, %c0_i32_0, %c0_i32_1 : i32, i32, i32
  }
  func.func @transform_1(%arg0: i32) -> (i32, i32) {
    %c0_i32 = arith.constant 0 : i32
    %c0_i32_0 = arith.constant 0 : i32
    %c0_i32_1 = arith.constant 0 : i32
    return %c0_i32, %c0_i32_0 : i32, i32
  }
  func.func @transform_2(%arg0: i32) -> (i32, i32) {
    %c0_i32 = arith.constant 0 : i32
    %c0_i32_0 = arith.constant 0 : i32
    %c0_i32_1 = arith.constant 0 : i32
    return %c0_i32, %c0_i32_0 : i32, i32
  }
  func.func @transform_3(%arg0: i32) -> (i32, i32) {
    %c0_i32 = arith.constant 0 : i32
    %c0_i32_0 = arith.constant 0 : i32
    %c0_i32_1 = arith.constant 0 : i32
    return %c0_i32, %c0_i32_0 : i32, i32
  }
  func.func @transform_4(%arg0: i32) -> (i32, i32) {
    %c0_i32 = arith.constant 0 : i32
    %c0_i32_0 = arith.constant 0 : i32
    %c0_i32_1 = arith.constant 0 : i32
    return %c0_i32, %c0_i32_0 : i32, i32
  }
  func.func @transform_5(%arg0: i32) -> (i32, i32) {
    %c0_i32 = arith.constant 0 : i32
    %c0_i32_0 = arith.constant 0 : i32
    %c0_i32_1 = arith.constant 0 : i32
    return %c0_i32, %c0_i32_0 : i32, i32
  }
  func.func @transform_6(%arg0: i32) -> (i32, i32) {
    %c0_i32 = arith.constant 0 : i32
    %c0_i32_0 = arith.constant 0 : i32
    %c0_i32_1 = arith.constant 0 : i32
    return %c0_i32, %c0_i32_0 : i32, i32
  }
  func.func @transform_7(%arg0: i32) -> (i32, i32) {
    %c0_i32 = arith.constant 0 : i32
    %c0_i32_0 = arith.constant 0 : i32
    %c0_i32_1 = arith.constant 0 : i32
    return %c0_i32, %c0_i32_0 : i32, i32
  }
  func.func @transform_8(%arg0: i32) -> (i32, i32) {
    %c0_i32 = arith.constant 0 : i32
    %c0_i32_0 = arith.constant 0 : i32
    %c0_i32_1 = arith.constant 0 : i32
    return %c0_i32, %c0_i32_0 : i32, i32
  }
  func.func @transform_9(%arg0: i32) -> (i32, i32) {
    %c0_i32 = arith.constant 0 : i32
    %c0_i32_0 = arith.constant 0 : i32
    %c0_i32_1 = arith.constant 0 : i32
    return %c0_i32, %c0_i32_0 : i32, i32
  }
  func.func @transform_10(%arg0: i32) -> (i32, i32) {
    %c0_i32 = arith.constant 0 : i32
    %c0_i32_0 = arith.constant 0 : i32
    %c0_i32_1 = arith.constant 0 : i32
    return %c0_i32, %c0_i32_0 : i32, i32
  }
  func.func @transform_11(%arg0: i32) -> (i32, i32) {
    %c0_i32 = arith.constant 0 : i32
    %c0_i32_0 = arith.constant 0 : i32
    %c0_i32_1 = arith.constant 0 : i32
    return %c0_i32, %c0_i32_0 : i32, i32
  }
}

</mosaic_0001>

<llo_original>
// kernel: dueling_dqn_forward.1
$region0: #{dueling_dqn_forward.1}
  #allocation0 [shape = 'u32[]', space=smem, size = 0x4, offset = 0x4, fixed_abs, tag = 'smem constant byte address 0x4 - core index']
  #allocation1 [shape = 'u32[144,128]{1,0:T(1,128)}', space=vmem, size = 0x12000, scoped, tag = 'internal scratch']
  %s0 = inlined_call_operand.vmem [shape: f32[8,36,144], index: 0, kind: input, shape index: {}]
  %s1 = inlined_call_operand.vmem [shape: bf16[1152,256], index: 1, kind: input, shape index: {}]
  %s2 = inlined_call_operand.vmem [shape: f32[1,256], index: 2, kind: input, shape index: {}]
  %s3 = inlined_call_operand.vmem [shape: bf16[1024,192], index: 3, kind: input, shape index: {}]
  %s4 = inlined_call_operand.vmem [shape: f32[1,192], index: 4, kind: input, shape index: {}]
  %s5 = inlined_call_operand.vmem [shape: bf16[576,64], index: 5, kind: input, shape index: {}]
  %s6 = inlined_call_operand.vmem [shape: f32[1,64], index: 6, kind: input, shape index: {}]
  %s7 = inlined_call_operand.vmem [shape: bf16[64,512], index: 7, kind: input, shape index: {}]
  %s8 = inlined_call_operand.vmem [shape: f32[1,512], index: 8, kind: input, shape index: {}]
  %s9 = inlined_call_operand.vmem [shape: bf16[512,128], index: 9, kind: input, shape index: {}]
  %s10 = inlined_call_operand.vmem [shape: f32[1,128], index: 10, kind: input, shape index: {}]
  %s11 = inlined_call_operand.vmem [shape: f32[8,128], index: 11, kind: output, shape index: {}]
  %s12 = sld [smem:[#allocation0]]
  $region54: #{dueling_dqn_forward.1} parent=0
    _
  %s14 = ssub.s32 1, %s12
  %s15 = scalar_select 0, %s14, %s12
  // Predicated region
  $region2: #{dueling_dqn_forward.1} parent=0 // pred_check
    _
  $region3: #{dueling_dqn_forward.1} parent=0 // pred_check_branch
    %17 = sbr.rel (0) target = $region5
  $region4: #{dueling_dqn_forward.1} parent=0 // pred_region
    _
  $region5: #{dueling_dqn_forward.1} parent=0 // pred_fallthru
    _
  // Predicated region
  $region6: #{dueling_dqn_forward.1} parent=0 // pred_check
    _
  $region7: #{dueling_dqn_forward.1} parent=0 // pred_check_branch
    %19 = sbr.rel (0) target = $region9
  $region8: #{dueling_dqn_forward.1} parent=0 // pred_region
    _
  $region9: #{dueling_dqn_forward.1} parent=0 // pred_fallthru
    _
  // Predicated region
  $region10: #{dueling_dqn_forward.1} parent=0 // pred_check
    _
  $region11: #{dueling_dqn_forward.1} parent=0 // pred_check_branch
    %21 = sbr.rel (0) target = $region13
  $region12: #{dueling_dqn_forward.1} parent=0 // pred_region
    _
  $region13: #{dueling_dqn_forward.1} parent=0 // pred_fallthru
    _
  // Predicated region
  $region14: #{dueling_dqn_forward.1} parent=0 // pred_check
    _
  $region15: #{dueling_dqn_forward.1} parent=0 // pred_check_branch
    %23 = sbr.rel (0) target = $region17
  $region16: #{dueling_dqn_forward.1} parent=0 // pred_region
    _
  $region17: #{dueling_dqn_forward.1} parent=0 // pred_fallthru
    _
  // Predicated region
  $region18: #{dueling_dqn_forward.1} parent=0 // pred_check
    _
  $region19: #{dueling_dqn_forward.1} parent=0 // pred_check_branch
    %25 = sbr.rel (0) target = $region21
  $region20: #{dueling_dqn_forward.1} parent=0 // pred_region
    _
  $region21: #{dueling_dqn_forward.1} parent=0 // pred_fallthru
    _
  // Predicated region
  $region22: #{dueling_dqn_forward.1} parent=0 // pred_check
    _
  $region23: #{dueling_dqn_forward.1} parent=0 // pred_check_branch
    %27 = sbr.rel (0) target = $region25
  $region24: #{dueling_dqn_forward.1} parent=0 // pred_region
    _
  $region25: #{dueling_dqn_forward.1} parent=0 // pred_fallthru
    _
  // Predicated region
  $region26: #{dueling_dqn_forward.1} parent=0 // pred_check
    _
  $region27: #{dueling_dqn_forward.1} parent=0 // pred_check_branch
    %29 = sbr.rel (0) target = $region29
  $region28: #{dueling_dqn_forward.1} parent=0 // pred_region
    _
  $region29: #{dueling_dqn_forward.1} parent=0 // pred_fallthru
    _
  // Predicated region
  $region30: #{dueling_dqn_forward.1} parent=0 // pred_check
    _
  $region31: #{dueling_dqn_forward.1} parent=0 // pred_check_branch
    %31 = sbr.rel (0) target = $region33
  $region32: #{dueling_dqn_forward.1} parent=0 // pred_region
    _
  $region33: #{dueling_dqn_forward.1} parent=0 // pred_fallthru
    _
  // Predicated region
  $region34: #{dueling_dqn_forward.1} parent=0 // pred_check
    _
  $region35: #{dueling_dqn_forward.1} parent=0 // pred_check_branch
    %33 = sbr.rel (0) target = $region37
  $region36: #{dueling_dqn_forward.1} parent=0 // pred_region
    _
  $region37: #{dueling_dqn_forward.1} parent=0 // pred_fallthru
    _
  // Predicated region
  $region38: #{dueling_dqn_forward.1} parent=0 // pred_check
    _
  $region39: #{dueling_dqn_forward.1} parent=0 // pred_check_branch
    %35 = sbr.rel (0) target = $region41
  $region40: #{dueling_dqn_forward.1} parent=0 // pred_region
    _
  $region41: #{dueling_dqn_forward.1} parent=0 // pred_fallthru
    _
  // Predicated region
  $region42: #{dueling_dqn_forward.1} parent=0 // pred_check
    _
  $region43: #{dueling_dqn_forward.1} parent=0 // pred_check_branch
    %37 = sbr.rel (0) target = $region45
  $region44: #{dueling_dqn_forward.1} parent=0 // pred_region
    _
  $region45: #{dueling_dqn_forward.1} parent=0 // pred_fallthru
    _
  %v39 = vld [vmem:[%s0] sm:$0xff]
  %v40 = vld [vmem:[%s0 + $0x8] sm:$0xff]
  %v41 = vld [vmem:[%s0 + $0x10] sm:$0xff]
  %v42 = vld [vmem:[%s0 + $0x18] sm:$0xff]
  %v43 = vld [vmem:[%s0 + $0x20] sm:$0xff]
  %v44 = vld [vmem:[%s0 + $0x28] sm:$0xff]
  %v45 = vld [vmem:[%s0 + $0x30] sm:$0xff]
  %v46 = vld [vmem:[%s0 + $0x38] sm:$0xff]
  %v47 = vld [vmem:[%s0 + $0x40] sm:$0xf]
  %v48 = vld [vmem:[%s0 + $0x48] sm:$0xf]
  %v49 = vld [vmem:[%s0 + $0x50] sm:$0xff]
  %v50 = vld [vmem:[%s0 + $0x58] sm:$0xff]
  %v51 = vld [vmem:[%s0 + $0x60] sm:$0xff]
  %v52 = vld [vmem:[%s0 + $0x68] sm:$0xff]
  %v53 = vld [vmem:[%s0 + $0x70] sm:$0xff]
  %v54 = vld [vmem:[%s0 + $0x78] sm:$0xff]
  %v55 = vld [vmem:[%s0 + $0x80] sm:$0xff]
  %v56 = vld [vmem:[%s0 + $0x88] sm:$0xff]
  %v57 = vld [vmem:[%s0 + $0x90] sm:$0xf]
  %v58 = vld [vmem:[%s0 + $0x98] sm:$0xf]
  %v59 = vld [vmem:[%s0 + $0xa0] sm:$0xff]
  %v60 = vld [vmem:[%s0 + $0xa8] sm:$0xff]
  %v61 = vld [vmem:[%s0 + $0xb0] sm:$0xff]
  %v62 = vld [vmem:[%s0 + $0xb8] sm:$0xff]
  %v63 = vld [vmem:[%s0 + $0xc0] sm:$0xff]
  %v64 = vld [vmem:[%s0 + $0xc8] sm:$0xff]
  %v65 = vld [vmem:[%s0 + $0xd0] sm:$0xff]
  %v66 = vld [vmem:[%s0 + $0xd8] sm:$0xff]
  %v67 = vld [vmem:[%s0 + $0xe0] sm:$0xf]
  %v68 = vld [vmem:[%s0 + $0xe8] sm:$0xf]
  %v69 = vld [vmem:[%s0 + $0xf0] sm:$0xff]
  %v70 = vld [vmem:[%s0 + $0xf8] sm:$0xff]
  %v71 = vld [vmem:[%s0 + $0x100] sm:$0xff]
  %v72 = vld [vmem:[%s0 + $0x108] sm:$0xff]
  %v73 = vld [vmem:[%s0 + $0x110] sm:$0xff]
  %v74 = vld [vmem:[%s0 + $0x118] sm:$0xff]
  %v75 = vld [vmem:[%s0 + $0x120] sm:$0xff]
  %v76 = vld [vmem:[%s0 + $0x128] sm:$0xff]
  %v77 = vld [vmem:[%s0 + $0x130] sm:$0xf]
  %v78 = vld [vmem:[%s0 + $0x138] sm:$0xf]
  %v79 = vld [vmem:[%s0 + $0x140] sm:$0xff]
  %v80 = vld [vmem:[%s0 + $0x148] sm:$0xff]
  %v81 = vld [vmem:[%s0 + $0x150] sm:$0xff]
  %v82 = vld [vmem:[%s0 + $0x158] sm:$0xff]
  %v83 = vld [vmem:[%s0 + $0x160] sm:$0xff]
  %v84 = vld [vmem:[%s0 + $0x168] sm:$0xff]
  %v85 = vld [vmem:[%s0 + $0x170] sm:$0xff]
  %v86 = vld [vmem:[%s0 + $0x178] sm:$0xff]
  %v87 = vld [vmem:[%s0 + $0x180] sm:$0xf]
  %v88 = vld [vmem:[%s0 + $0x188] sm:$0xf]
  %v89 = vld [vmem:[%s0 + $0x190] sm:$0xff]
  %v90 = vld [vmem:[%s0 + $0x198] sm:$0xff]
  %v91 = vld [vmem:[%s0 + $0x1a0] sm:$0xff]
  %v92 = vld [vmem:[%s0 + $0x1a8] sm:$0xff]
  %v93 = vld [vmem:[%s0 + $0x1b0] sm:$0xff]
  %v94 = vld [vmem:[%s0 + $0x1b8] sm:$0xff]
  %v95 = vld [vmem:[%s0 + $0x1c0] sm:$0xff]
  %v96 = vld [vmem:[%s0 + $0x1c8] sm:$0xff]
  %v97 = vld [vmem:[%s0 + $0x1d0] sm:$0xf]
  %v98 = vld [vmem:[%s0 + $0x1d8] sm:$0xf]
  %v99 = vld [vmem:[%s0 + $0x1e0] sm:$0xff]
  %v100 = vld [vmem:[%s0 + $0x1e8] sm:$0xff]
  %v101 = vld [vmem:[%s0 + $0x1f0] sm:$0xff]
  %v102 = vld [vmem:[%s0 + $0x1f8] sm:$0xff]
  %v103 = vld [vmem:[%s0 + $0x200] sm:$0xff]
  %v104 = vld [vmem:[%s0 + $0x208] sm:$0xff]
  %v105 = vld [vmem:[%s0 + $0x210] sm:$0xff]
  %v106 = vld [vmem:[%s0 + $0x218] sm:$0xff]
  %v107 = vld [vmem:[%s0 + $0x220] sm:$0xf]
  %v108 = vld [vmem:[%s0 + $0x228] sm:$0xf]
  %v109 = vld [vmem:[%s0 + $0x230] sm:$0xff]
  %v110 = vld [vmem:[%s0 + $0x238] sm:$0xff]
  %v111 = vld [vmem:[%s0 + $0x240] sm:$0xff]
  %v112 = vld [vmem:[%s0 + $0x248] sm:$0xff]
  %v113 = vld [vmem:[%s0 + $0x250] sm:$0xff]
  %v114 = vld [vmem:[%s0 + $0x258] sm:$0xff]
  %v115 = vld [vmem:[%s0 + $0x260] sm:$0xff]
  %v116 = vld [vmem:[%s0 + $0x268] sm:$0xff]
  %v117 = vld [vmem:[%s0 + $0x270] sm:$0xf]
  %v118 = vld [vmem:[%s0 + $0x278] sm:$0xf]
  %v135 = vrot.slane %v49, 7
  %vm136 = vcmask 1041409
  %v137 = vsel %vm136, %v135, %v39
  %v138 = vrot.slane %v59, 6
  %vm139 = vcmask 1042434
  %v140 = vsel %vm139, %v138, %v137
  %v141 = vrot.slane %v69, 5
  %vm142 = vcmask 1043459
  %v143 = vsel %vm142, %v141, %v140
  %v144 = vrot.slane %v79, 4
  %vm145 = vcmask 1044484
  %v146 = vsel %vm145, %v144, %v143
  %v147 = vrot.slane %v89, 3
  %vm148 = vcmask 1045509
  %v149 = vsel %vm148, %v147, %v146
  %v150 = vrot.slane %v99, 2
  %vm151 = vcmask 1046534
  %v152 = vsel %vm151, %v150, %v149
  %v153 = vrot.slane %v109, 1
  %vm154 = vcmask 1047559
  %v155 = vsel %vm154, %v153, %v152
  %v156 = vrot.slane %v50, 7
  %v157 = vsel %vm136, %v156, %v40
  %v158 = vrot.slane %v60, 6
  %v159 = vsel %vm139, %v158, %v157
  %v160 = vrot.slane %v70, 5
  %v161 = vsel %vm142, %v160, %v159
  %v162 = vrot.slane %v80, 4
  %v163 = vsel %vm145, %v162, %v161
  %v164 = vrot.slane %v90, 3
  %v165 = vsel %vm148, %v164, %v163
  %v166 = vrot.slane %v100, 2
  %v167 = vsel %vm151, %v166, %v165
  %v168 = vrot.slane %v110, 1
  %v169 = vsel %vm154, %v168, %v167
  %v172 = vrot.slane %v39, 1
  %v173 = vsel %vm136, %v49, %v172
  %v174 = vrot.slane %v59, 7
  %v175 = vsel %vm139, %v174, %v173
  %v176 = vrot.slane %v69, 6
  %v177 = vsel %vm142, %v176, %v175
  %v178 = vrot.slane %v79, 5
  %v179 = vsel %vm145, %v178, %v177
  %v180 = vrot.slane %v89, 4
  %v181 = vsel %vm148, %v180, %v179
  %v182 = vrot.slane %v99, 3
  %v183 = vsel %vm151, %v182, %v181
  %v184 = vrot.slane %v109, 2
  %v185 = vsel %vm154, %v184, %v183
  %v186 = vrot.slane %v40, 1
  %v187 = vsel %vm136, %v50, %v186
  %v188 = vrot.slane %v60, 7
  %v189 = vsel %vm139, %v188, %v187
  %v190 = vrot.slane %v70, 6
  %v191 = vsel %vm142, %v190, %v189
  %v192 = vrot.slane %v80, 5
  %v193 = vsel %vm145, %v192, %v191
  %v194 = vrot.slane %v90, 4
  %v195 = vsel %vm148, %v194, %v193
  %v196 = vrot.slane %v100, 3
  %v197 = vsel %vm151, %v196, %v195
  %v198 = vrot.slane %v110, 2
  %v199 = vsel %vm154, %v198, %v197
  %200 = vrot.lane.b32.xlu0 %v185, 16
  %v201 = vpop.permute.xlu0 %200
  %202 = vrot.lane.b32.xlu0 %v199, 16
  %v203 = vpop.permute.xlu0 %202
  %vm204 = vcmask 130048
  %v205 = vsel %vm204, %v201, %v203
  %v208 = vrot.slane %v39, 2
  %v209 = vrot.slane %v49, 1
  %v210 = vsel %vm136, %v209, %v208
  %v211 = vsel %vm139, %v59, %v210
  %v212 = vrot.slane %v69, 7
  %v213 = vsel %vm142, %v212, %v211
  %v214 = vrot.slane %v79, 6
  %v215 = vsel %vm145, %v214, %v213
  %v216 = vrot.slane %v89, 5
  %v217 = vsel %vm148, %v216, %v215
  %v218 = vrot.slane %v99, 4
  %v219 = vsel %vm151, %v218, %v217
  %v220 = vrot.slane %v109, 3
  %v221 = vsel %vm154, %v220, %v219
  %v222 = vrot.slane %v40, 2
  %v223 = vrot.slane %v50, 1
  %v224 = vsel %vm136, %v223, %v222
  %v225 = vsel %vm139, %v60, %v224
  %v226 = vrot.slane %v70, 7
  %v227 = vsel %vm142, %v226, %v225
  %v228 = vrot.slane %v80, 6
  %v229 = vsel %vm145, %v228, %v227
  %v230 = vrot.slane %v90, 5
  %v231 = vsel %vm148, %v230, %v229
  %v232 = vrot.slane %v100, 4
  %v233 = vsel %vm151, %v232, %v231
  %v234 = vrot.slane %v110, 3
  %v235 = vsel %vm154, %v234, %v233
  %236 = vrot.lane.b32.xlu0 %v221, 32
  %v237 = vpop.permute.xlu0 %236
  %238 = vrot.lane.b32.xlu0 %v235, 32
  %v239 = vpop.permute.xlu0 %238
  %vm240 = vcmask 261120
  %v241 = vsel %vm240, %v237, %v239
  %v244 = vrot.slane %v39, 3
  %v245 = vrot.slane %v49, 2
  %v246 = vsel %vm136, %v245, %v244
  %v247 = vrot.slane %v59, 1
  %v248 = vsel %vm139, %v247, %v246
  %v249 = vsel %vm142, %v69, %v248
  %v250 = vrot.slane %v79, 7
  %v251 = vsel %vm145, %v250, %v249
  %v252 = vrot.slane %v89, 6
  %v253 = vsel %vm148, %v252, %v251
  %v254 = vrot.slane %v99, 5
  %v255 = vsel %vm151, %v254, %v253
  %v256 = vrot.slane %v109, 4
  %v257 = vsel %vm154, %v256, %v255
  %v258 = vrot.slane %v40, 3
  %v259 = vrot.slane %v50, 2
  %v260 = vsel %vm136, %v259, %v258
  %v261 = vrot.slane %v60, 1
  %v262 = vsel %vm139, %v261, %v260
  %v263 = vsel %vm142, %v70, %v262
  %v264 = vrot.slane %v80, 7
  %v265 = vsel %vm145, %v264, %v263
  %v266 = vrot.slane %v90, 6
  %v267 = vsel %vm148, %v266, %v265
  %v268 = vrot.slane %v100, 5
  %v269 = vsel %vm151, %v268, %v267
  %v270 = vrot.slane %v110, 4
  %v271 = vsel %vm154, %v270, %v269
  %272 = vrot.lane.b32.xlu0 %v257, 48
  %v273 = vpop.permute.xlu0 %272
  %274 = vrot.lane.b32.xlu0 %v271, 48
  %v275 = vpop.permute.xlu0 %274
  %vm276 = vcmask 392192
  %v277 = vsel %vm276, %v273, %v275
  %v280 = vrot.slane %v39, 4
  %v281 = vrot.slane %v49, 3
  %v282 = vsel %vm136, %v281, %v280
  %v283 = vrot.slane %v59, 2
  %v284 = vsel %vm139, %v283, %v282
  %v285 = vrot.slane %v69, 1
  %v286 = vsel %vm142, %v285, %v284
  %v287 = vsel %vm145, %v79, %v286
  %v288 = vrot.slane %v89, 7
  %v289 = vsel %vm148, %v288, %v287
  %v290 = vrot.slane %v99, 6
  %v291 = vsel %vm151, %v290, %v289
  %v292 = vrot.slane %v109, 5
  %v293 = vsel %vm154, %v292, %v291
  %v294 = vrot.slane %v40, 4
  %v295 = vrot.slane %v50, 3
  %v296 = vsel %vm136, %v295, %v294
  %v297 = vrot.slane %v60, 2
  %v298 = vsel %vm139, %v297, %v296
  %v299 = vrot.slane %v70, 1
  %v300 = vsel %vm142, %v299, %v298
  %v301 = vsel %vm145, %v80, %v300
  %v302 = vrot.slane %v90, 7
  %v303 = vsel %vm148, %v302, %v301
  %v304 = vrot.slane %v100, 6
  %v305 = vsel %vm151, %v304, %v303
  %v306 = vrot.slane %v110, 5
  %v307 = vsel %vm154, %v306, %v305
  %308 = vrot.lane.b32.xlu0 %v293, 64
  %v309 = vpop.permute.xlu0 %308
  %310 = vrot.lane.b32.xlu0 %v307, 64
  %v311 = vpop.permute.xlu0 %310
  %vm312 = vcmask 523264
  %v313 = vsel %vm312, %v309, %v311
  %v316 = vrot.slane %v39, 5
  %v317 = vrot.slane %v49, 4
  %v318 = vsel %vm136, %v317, %v316
  %v319 = vrot.slane %v59, 3
  %v320 = vsel %vm139, %v319, %v318
  %v321 = vrot.slane %v69, 2
  %v322 = vsel %vm142, %v321, %v320
  %v323 = vrot.slane %v79, 1
  %v324 = vsel %vm145, %v323, %v322
  %v325 = vsel %vm148, %v89, %v324
  %v326 = vrot.slane %v99, 7
  %v327 = vsel %vm151, %v326, %v325
  %v328 = vrot.slane %v109, 6
  %v329 = vsel %vm154, %v328, %v327
  %v330 = vrot.slane %v40, 5
  %v331 = vrot.slane %v50, 4
  %v332 = vsel %vm136, %v331, %v330
  %v333 = vrot.slane %v60, 3
  %v334 = vsel %vm139, %v333, %v332
  %v335 = vrot.slane %v70, 2
  %v336 = vsel %vm142, %v335, %v334
  %v337 = vrot.slane %v80, 1
  %v338 = vsel %vm145, %v337, %v336
  %v339 = vsel %vm148, %v90, %v338
  %v340 = vrot.slane %v100, 7
  %v341 = vsel %vm151, %v340, %v339
  %v342 = vrot.slane %v110, 6
  %v343 = vsel %vm154, %v342, %v341
  %344 = vrot.lane.b32.xlu0 %v329, 80
  %v345 = vpop.permute.xlu0 %344
  %346 = vrot.lane.b32.xlu0 %v343, 80
  %v347 = vpop.permute.xlu0 %346
  %vm348 = vcmask 654336
  %v349 = vsel %vm348, %v345, %v347
  %v352 = vrot.slane %v39, 6
  %v353 = vrot.slane %v49, 5
  %v354 = vsel %vm136, %v353, %v352
  %v355 = vrot.slane %v59, 4
  %v356 = vsel %vm139, %v355, %v354
  %v357 = vrot.slane %v69, 3
  %v358 = vsel %vm142, %v357, %v356
  %v359 = vrot.slane %v79, 2
  %v360 = vsel %vm145, %v359, %v358
  %v361 = vrot.slane %v89, 1
  %v362 = vsel %vm148, %v361, %v360
  %v363 = vsel %vm151, %v99, %v362
  %v364 = vrot.slane %v109, 7
  %v365 = vsel %vm154, %v364, %v363
  %v366 = vrot.slane %v40, 6
  %v367 = vrot.slane %v50, 5
  %v368 = vsel %vm136, %v367, %v366
  %v369 = vrot.slane %v60, 4
  %v370 = vsel %vm139, %v369, %v368
  %v371 = vrot.slane %v70, 3
  %v372 = vsel %vm142, %v371, %v370
  %v373 = vrot.slane %v80, 2
  %v374 = vsel %vm145, %v373, %v372
  %v375 = vrot.slane %v90, 1
  %v376 = vsel %vm148, %v375, %v374
  %v377 = vsel %vm151, %v100, %v376
  %v378 = vrot.slane %v110, 7
  %v379 = vsel %vm154, %v378, %v377
  %380 = vrot.lane.b32.xlu0 %v365, 96
  %v381 = vpop.permute.xlu0 %380
  %382 = vrot.lane.b32.xlu0 %v379, 96
  %v383 = vpop.permute.xlu0 %382
  %vm384 = vcmask 785408
  %v385 = vsel %vm384, %v381, %v383
  %v388 = vrot.slane %v39, 7
  %v389 = vrot.slane %v49, 6
  %v390 = vsel %vm136, %v389, %v388
  %v391 = vrot.slane %v59, 5
  %v392 = vsel %vm139, %v391, %v390
  %v393 = vrot.slane %v69, 4
  %v394 = vsel %vm142, %v393, %v392
  %v395 = vrot.slane %v79, 3
  %v396 = vsel %vm145, %v395, %v394
  %v397 = vrot.slane %v89, 2
  %v398 = vsel %vm148, %v397, %v396
  %v399 = vrot.slane %v99, 1
  %v400 = vsel %vm151, %v399, %v398
  %v401 = vsel %vm154, %v109, %v400
  %v402 = vrot.slane %v40, 7
  %v403 = vrot.slane %v50, 6
  %v404 = vsel %vm136, %v403, %v402
  %v405 = vrot.slane %v60, 5
  %v406 = vsel %vm139, %v405, %v404
  %v407 = vrot.slane %v70, 4
  %v408 = vsel %vm142, %v407, %v406
  %v409 = vrot.slane %v80, 3
  %v410 = vsel %vm145, %v409, %v408
  %v411 = vrot.slane %v90, 2
  %v412 = vsel %vm148, %v411, %v410
  %v413 = vrot.slane %v100, 1
  %v414 = vsel %vm151, %v413, %v412
  %v415 = vsel %vm154, %v110, %v414
  %416 = vrot.lane.b32.xlu0 %v401, 112
  %v417 = vpop.permute.xlu0 %416
  %418 = vrot.lane.b32.xlu0 %v415, 112
  %v419 = vpop.permute.xlu0 %418
  %vm420 = vcmask 916480
  %v421 = vsel %vm420, %v417, %v419
  %v424 = vsel %vm204, %v169, %v201
  %v425 = vsel %vm240, %v205, %v237
  %v426 = vsel %vm276, %v241, %v273
  %v427 = vsel %vm312, %v277, %v309
  %v428 = vsel %vm348, %v313, %v345
  %v429 = vsel %vm384, %v349, %v381
  %v430 = vsel %vm420, %v385, %v417
  %v431 = vsel %vm148, %v135, %v39
  %v432 = vsel %vm151, %v138, %v431
  %v433 = vsel %vm154, %v141, %v432
  %v434 = vsel %vm148, %v156, %v40
  %v435 = vsel %vm151, %v158, %v434
  %v436 = vsel %vm154, %v160, %v435
  %v437 = vsel %vm136, %v147, %v144
  %v438 = vsel %vm139, %v150, %v437
  %v439 = vsel %vm142, %v153, %v438
  %v440 = vsel %vm136, %v164, %v162
  %v441 = vsel %vm139, %v166, %v440
  %v442 = vsel %vm142, %v168, %v441
  %v445 = vsel %vm148, %v49, %v172
  %v446 = vsel %vm151, %v174, %v445
  %v447 = vsel %vm154, %v176, %v446
  %v448 = vsel %vm148, %v50, %v186
  %v449 = vsel %vm151, %v188, %v448
  %v450 = vsel %vm154, %v190, %v449
  %v451 = vsel %vm136, %v180, %v178
  %v452 = vsel %vm139, %v182, %v451
  %v453 = vsel %vm142, %v184, %v452
  %v454 = vsel %vm136, %v194, %v192
  %v455 = vsel %vm139, %v196, %v454
  %v456 = vsel %vm142, %v198, %v455
  %457 = vrot.lane.b32.xlu0 %v447, 16
  %v458 = vpop.permute.xlu0 %457
  %459 = vrot.lane.b32.xlu0 %v450, 16
  %v460 = vpop.permute.xlu0 %459
  %461 = vrot.lane.b32.xlu0 %v453, 16
  %v462 = vpop.permute.xlu0 %461
  %463 = vrot.lane.b32.xlu0 %v456, 16
  %v464 = vpop.permute.xlu0 %463
  %v465 = vsel %vm204, %v458, %v460
  %v466 = vsel %vm204, %v462, %v464
  %v471 = vsel %vm148, %v209, %v208
  %v472 = vsel %vm151, %v59, %v471
  %v473 = vsel %vm154, %v212, %v472
  %v474 = vsel %vm148, %v223, %v222
  %v475 = vsel %vm151, %v60, %v474
  %v476 = vsel %vm154, %v226, %v475
  %v477 = vsel %vm136, %v216, %v214
  %v478 = vsel %vm139, %v218, %v477
  %v479 = vsel %vm142, %v220, %v478
  %v480 = vsel %vm136, %v230, %v228
  %v481 = vsel %vm139, %v232, %v480
  %v482 = vsel %vm142, %v234, %v481
  %483 = vrot.lane.b32.xlu0 %v473, 32
  %v484 = vpop.permute.xlu0 %483
  %485 = vrot.lane.b32.xlu0 %v476, 32
  %v486 = vpop.permute.xlu0 %485
  %487 = vrot.lane.b32.xlu0 %v479, 32
  %v488 = vpop.permute.xlu0 %487
  %489 = vrot.lane.b32.xlu0 %v482, 32
  %v490 = vpop.permute.xlu0 %489
  %v491 = vsel %vm240, %v484, %v486
  %v492 = vsel %vm240, %v488, %v490
  %v497 = vsel %vm148, %v245, %v244
  %v498 = vsel %vm151, %v247, %v497
  %v499 = vsel %vm154, %v69, %v498
  %v500 = vsel %vm148, %v259, %v258
  %v501 = vsel %vm151, %v261, %v500
  %v502 = vsel %vm154, %v70, %v501
  %v503 = vsel %vm136, %v252, %v250
  %v504 = vsel %vm139, %v254, %v503
  %v505 = vsel %vm142, %v256, %v504
  %v506 = vsel %vm136, %v266, %v264
  %v507 = vsel %vm139, %v268, %v506
  %v508 = vsel %vm142, %v270, %v507
  %509 = vrot.lane.b32.xlu0 %v499, 48
  %v510 = vpop.permute.xlu0 %509
  %511 = vrot.lane.b32.xlu0 %v502, 48
  %v512 = vpop.permute.xlu0 %511
  %513 = vrot.lane.b32.xlu0 %v505, 48
  %v514 = vpop.permute.xlu0 %513
  %515 = vrot.lane.b32.xlu0 %v508, 48
  %v516 = vpop.permute.xlu0 %515
  %v517 = vsel %vm276, %v510, %v512
  %v518 = vsel %vm276, %v514, %v516
  %v539 = vrot.slane %v41, 4
  %v540 = vrot.slane %v51, 3
  %v541 = vsel %vm148, %v540, %v539
  %v542 = vrot.slane %v61, 2
  %v543 = vsel %vm151, %v542, %v541
  %v544 = vrot.slane %v71, 1
  %v545 = vsel %vm154, %v544, %v543
  %v546 = vrot.slane %v42, 4
  %v547 = vrot.slane %v52, 3
  %v548 = vsel %vm148, %v547, %v546
  %v549 = vrot.slane %v62, 2
  %v550 = vsel %vm151, %v549, %v548
  %v551 = vrot.slane %v72, 1
  %v552 = vsel %vm154, %v551, %v550
  %v553 = vrot.slane %v91, 7
  %v554 = vsel %vm136, %v553, %v81
  %v555 = vrot.slane %v101, 6
  %v556 = vsel %vm139, %v555, %v554
  %v557 = vrot.slane %v111, 5
  %v558 = vsel %vm142, %v557, %v556
  %v559 = vrot.slane %v92, 7
  %v560 = vsel %vm136, %v559, %v82
  %v561 = vrot.slane %v102, 6
  %v562 = vsel %vm139, %v561, %v560
  %v563 = vrot.slane %v112, 5
  %v564 = vsel %vm142, %v563, %v562
  %565 = vrot.lane.b32.xlu0 %v545, 64
  %v566 = vpop.permute.xlu0 %565
  %567 = vrot.lane.b32.xlu0 %v552, 64
  %v568 = vpop.permute.xlu0 %567
  %569 = vrot.lane.b32.xlu0 %v558, 64
  %v570 = vpop.permute.xlu0 %569
  %571 = vrot.lane.b32.xlu0 %v564, 64
  %v572 = vpop.permute.xlu0 %571
  %v573 = vsel %vm312, %v566, %v568
  %v574 = vsel %vm312, %v570, %v572
  %v579 = vrot.slane %v41, 5
  %v580 = vrot.slane %v51, 4
  %v581 = vsel %vm148, %v580, %v579
  %v582 = vrot.slane %v61, 3
  %v583 = vsel %vm151, %v582, %v581
  %v584 = vrot.slane %v71, 2
  %v585 = vsel %vm154, %v584, %v583
  %v586 = vrot.slane %v42, 5
  %v587 = vrot.slane %v52, 4
  %v588 = vsel %vm148, %v587, %v586
  %v589 = vrot.slane %v62, 3
  %v590 = vsel %vm151, %v589, %v588
  %v591 = vrot.slane %v72, 2
  %v592 = vsel %vm154, %v591, %v590
  %v593 = vrot.slane %v81, 1
  %v594 = vsel %vm136, %v91, %v593
  %v595 = vrot.slane %v101, 7
  %v596 = vsel %vm139, %v595, %v594
  %v597 = vrot.slane %v111, 6
  %v598 = vsel %vm142, %v597, %v596
  %v599 = vrot.slane %v82, 1
  %v600 = vsel %vm136, %v92, %v599
  %v601 = vrot.slane %v102, 7
  %v602 = vsel %vm139, %v601, %v600
  %v603 = vrot.slane %v112, 6
  %v604 = vsel %vm142, %v603, %v602
  %605 = vrot.lane.b32.xlu0 %v585, 80
  %v606 = vpop.permute.xlu0 %605
  %607 = vrot.lane.b32.xlu0 %v592, 80
  %v608 = vpop.permute.xlu0 %607
  %609 = vrot.lane.b32.xlu0 %v598, 80
  %v610 = vpop.permute.xlu0 %609
  %611 = vrot.lane.b32.xlu0 %v604, 80
  %v612 = vpop.permute.xlu0 %611
  %v613 = vsel %vm348, %v606, %v608
  %v614 = vsel %vm348, %v610, %v612
  %v619 = vrot.slane %v41, 6
  %v620 = vrot.slane %v51, 5
  %v621 = vsel %vm148, %v620, %v619
  %v622 = vrot.slane %v61, 4
  %v623 = vsel %vm151, %v622, %v621
  %v624 = vrot.slane %v71, 3
  %v625 = vsel %vm154, %v624, %v623
  %v626 = vrot.slane %v42, 6
  %v627 = vrot.slane %v52, 5
  %v628 = vsel %vm148, %v627, %v626
  %v629 = vrot.slane %v62, 4
  %v630 = vsel %vm151, %v629, %v628
  %v631 = vrot.slane %v72, 3
  %v632 = vsel %vm154, %v631, %v630
  %v633 = vrot.slane %v81, 2
  %v634 = vrot.slane %v91, 1
  %v635 = vsel %vm136, %v634, %v633
  %v636 = vsel %vm139, %v101, %v635
  %v637 = vrot.slane %v111, 7
  %v638 = vsel %vm142, %v637, %v636
  %v639 = vrot.slane %v82, 2
  %v640 = vrot.slane %v92, 1
  %v641 = vsel %vm136, %v640, %v639
  %v642 = vsel %vm139, %v102, %v641
  %v643 = vrot.slane %v112, 7
  %v644 = vsel %vm142, %v643, %v642
  %645 = vrot.lane.b32.xlu0 %v625, 96
  %v646 = vpop.permute.xlu0 %645
  %647 = vrot.lane.b32.xlu0 %v632, 96
  %v648 = vpop.permute.xlu0 %647
  %649 = vrot.lane.b32.xlu0 %v638, 96
  %v650 = vpop.permute.xlu0 %649
  %651 = vrot.lane.b32.xlu0 %v644, 96
  %v652 = vpop.permute.xlu0 %651
  %v653 = vsel %vm384, %v646, %v648
  %v654 = vsel %vm384, %v650, %v652
  %v659 = vrot.slane %v41, 7
  %v660 = vrot.slane %v51, 6
  %v661 = vsel %vm148, %v660, %v659
  %v662 = vrot.slane %v61, 5
  %v663 = vsel %vm151, %v662, %v661
  %v664 = vrot.slane %v71, 4
  %v665 = vsel %vm154, %v664, %v663
  %v666 = vrot.slane %v42, 7
  %v667 = vrot.slane %v52, 6
  %v668 = vsel %vm148, %v667, %v666
  %v669 = vrot.slane %v62, 5
  %v670 = vsel %vm151, %v669, %v668
  %v671 = vrot.slane %v72, 4
  %v672 = vsel %vm154, %v671, %v670
  %v673 = vrot.slane %v81, 3
  %v674 = vrot.slane %v91, 2
  %v675 = vsel %vm136, %v674, %v673
  %v676 = vrot.slane %v101, 1
  %v677 = vsel %vm139, %v676, %v675
  %v678 = vsel %vm142, %v111, %v677
  %v679 = vrot.slane %v82, 3
  %v680 = vrot.slane %v92, 2
  %v681 = vsel %vm136, %v680, %v679
  %v682 = vrot.slane %v102, 1
  %v683 = vsel %vm139, %v682, %v681
  %v684 = vsel %vm142, %v112, %v683
  %685 = vrot.lane.b32.xlu0 %v665, 112
  %v686 = vpop.permute.xlu0 %685
  %687 = vrot.lane.b32.xlu0 %v672, 112
  %v688 = vpop.permute.xlu0 %687
  %689 = vrot.lane.b32.xlu0 %v678, 112
  %v690 = vpop.permute.xlu0 %689
  %691 = vrot.lane.b32.xlu0 %v684, 112
  %v692 = vpop.permute.xlu0 %691
  %v693 = vsel %vm420, %v686, %v688
  %v694 = vsel %vm420, %v690, %v692
  %v697 = vsel %vm204, %v436, %v458
  %v698 = vsel %vm204, %v442, %v462
  %v699 = vsel %vm240, %v465, %v484
  %v700 = vsel %vm240, %v466, %v488
  %v701 = vsel %vm276, %v491, %v510
  %v702 = vsel %vm276, %v492, %v514
  %v703 = vsel %vm312, %v517, %v566
  %v704 = vsel %vm312, %v518, %v570
  %v705 = vsel %vm348, %v573, %v606
  %v706 = vsel %vm348, %v574, %v610
  %v707 = vsel %vm384, %v613, %v646
  %v708 = vsel %vm384, %v614, %v650
  %v709 = vsel %vm420, %v653, %v686
  %v710 = vsel %vm420, %v654, %v690
  %v711 = vrot.slane %v51, 7
  %v712 = vsel %vm136, %v711, %v41
  %v713 = vrot.slane %v61, 6
  %v714 = vsel %vm139, %v713, %v712
  %v715 = vrot.slane %v71, 5
  %v716 = vsel %vm142, %v715, %v714
  %v717 = vrot.slane %v81, 4
  %v718 = vsel %vm145, %v717, %v716
  %v719 = vrot.slane %v91, 3
  %v720 = vsel %vm148, %v719, %v718
  %v721 = vrot.slane %v101, 2
  %v722 = vsel %vm151, %v721, %v720
  %v723 = vrot.slane %v111, 1
  %v724 = vsel %vm154, %v723, %v722
  %v725 = vrot.slane %v52, 7
  %v726 = vsel %vm136, %v725, %v42
  %v727 = vrot.slane %v62, 6
  %v728 = vsel %vm139, %v727, %v726
  %v729 = vrot.slane %v72, 5
  %v730 = vsel %vm142, %v729, %v728
  %v731 = vrot.slane %v82, 4
  %v732 = vsel %vm145, %v731, %v730
  %v733 = vrot.slane %v92, 3
  %v734 = vsel %vm148, %v733, %v732
  %v735 = vrot.slane %v102, 2
  %v736 = vsel %vm151, %v735, %v734
  %v737 = vrot.slane %v112, 1
  %v738 = vsel %vm154, %v737, %v736
  %v741 = vrot.slane %v41, 1
  %v742 = vsel %vm136, %v51, %v741
  %v743 = vrot.slane %v61, 7
  %v744 = vsel %vm139, %v743, %v742
  %v745 = vrot.slane %v71, 6
  %v746 = vsel %vm142, %v745, %v744
  %v747 = vrot.slane %v81, 5
  %v748 = vsel %vm145, %v747, %v746
  %v749 = vrot.slane %v91, 4
  %v750 = vsel %vm148, %v749, %v748
  %v751 = vrot.slane %v101, 3
  %v752 = vsel %vm151, %v751, %v750
  %v753 = vrot.slane %v111, 2
  %v754 = vsel %vm154, %v753, %v752
  %v755 = vrot.slane %v42, 1
  %v756 = vsel %vm136, %v52, %v755
  %v757 = vrot.slane %v62, 7
  %v758 = vsel %vm139, %v757, %v756
  %v759 = vrot.slane %v72, 6
  %v760 = vsel %vm142, %v759, %v758
  %v761 = vrot.slane %v82, 5
  %v762 = vsel %vm145, %v761, %v760
  %v763 = vrot.slane %v92, 4
  %v764 = vsel %vm148, %v763, %v762
  %v765 = vrot.slane %v102, 3
  %v766 = vsel %vm151, %v765, %v764
  %v767 = vrot.slane %v112, 2
  %v768 = vsel %vm154, %v767, %v766
  %769 = vrot.lane.b32.xlu0 %v754, 16
  %v770 = vpop.permute.xlu0 %769
  %771 = vrot.lane.b32.xlu0 %v768, 16
  %v772 = vpop.permute.xlu0 %771
  %v773 = vsel %vm204, %v770, %v772
  %v776 = vrot.slane %v41, 2
  %v777 = vrot.slane %v51, 1
  %v778 = vsel %vm136, %v777, %v776
  %v779 = vsel %vm139, %v61, %v778
  %v780 = vrot.slane %v71, 7
  %v781 = vsel %vm142, %v780, %v779
  %v782 = vrot.slane %v81, 6
  %v783 = vsel %vm145, %v782, %v781
  %v784 = vrot.slane %v91, 5
  %v785 = vsel %vm148, %v784, %v783
  %v786 = vrot.slane %v101, 4
  %v787 = vsel %vm151, %v786, %v785
  %v788 = vrot.slane %v111, 3
  %v789 = vsel %vm154, %v788, %v787
  %v790 = vrot.slane %v42, 2
  %v791 = vrot.slane %v52, 1
  %v792 = vsel %vm136, %v791, %v790
  %v793 = vsel %vm139, %v62, %v792
  %v794 = vrot.slane %v72, 7
  %v795 = vsel %vm142, %v794, %v793
  %v796 = vrot.slane %v82, 6
  %v797 = vsel %vm145, %v796, %v795
  %v798 = vrot.slane %v92, 5
  %v799 = vsel %vm148, %v798, %v797
  %v800 = vrot.slane %v102, 4
  %v801 = vsel %vm151, %v800, %v799
  %v802 = vrot.slane %v112, 3
  %v803 = vsel %vm154, %v802, %v801
  %804 = vrot.lane.b32.xlu0 %v789, 32
  %v805 = vpop.permute.xlu0 %804
  %806 = vrot.lane.b32.xlu0 %v803, 32
  %v807 = vpop.permute.xlu0 %806
  %v808 = vsel %vm240, %v805, %v807
  %v811 = vrot.slane %v41, 3
  %v812 = vrot.slane %v51, 2
  %v813 = vsel %vm136, %v812, %v811
  %v814 = vrot.slane %v61, 1
  %v815 = vsel %vm139, %v814, %v813
  %v816 = vsel %vm142, %v71, %v815
  %v817 = vrot.slane %v81, 7
  %v818 = vsel %vm145, %v817, %v816
  %v819 = vrot.slane %v91, 6
  %v820 = vsel %vm148, %v819, %v818
  %v821 = vrot.slane %v101, 5
  %v822 = vsel %vm151, %v821, %v820
  %v823 = vrot.slane %v111, 4
  %v824 = vsel %vm154, %v823, %v822
  %v825 = vrot.slane %v42, 3
  %v826 = vrot.slane %v52, 2
  %v827 = vsel %vm136, %v826, %v825
  %v828 = vrot.slane %v62, 1
  %v829 = vsel %vm139, %v828, %v827
  %v830 = vsel %vm142, %v72, %v829
  %v831 = vrot.slane %v82, 7
  %v832 = vsel %vm145, %v831, %v830
  %v833 = vrot.slane %v92, 6
  %v834 = vsel %vm148, %v833, %v832
  %v835 = vrot.slane %v102, 5
  %v836 = vsel %vm151, %v835, %v834
  %v837 = vrot.slane %v112, 4
  %v838 = vsel %vm154, %v837, %v836
  %839 = vrot.lane.b32.xlu0 %v824, 48
  %v840 = vpop.permute.xlu0 %839
  %841 = vrot.lane.b32.xlu0 %v838, 48
  %v842 = vpop.permute.xlu0 %841
  %v843 = vsel %vm276, %v840, %v842
  %v846 = vsel %vm136, %v540, %v539
  %v847 = vsel %vm139, %v542, %v846
  %v848 = vsel %vm142, %v544, %v847
  %v849 = vsel %vm145, %v81, %v848
  %v850 = vsel %vm148, %v553, %v849
  %v851 = vsel %vm151, %v555, %v850
  %v852 = vsel %vm154, %v557, %v851
  %v853 = vsel %vm136, %v547, %v546
  %v854 = vsel %vm139, %v549, %v853
  %v855 = vsel %vm142, %v551, %v854
  %v856 = vsel %vm145, %v82, %v855
  %v857 = vsel %vm148, %v559, %v856
  %v858 = vsel %vm151, %v561, %v857
  %v859 = vsel %vm154, %v563, %v858
  %860 = vrot.lane.b32.xlu0 %v852, 64
  %v861 = vpop.permute.xlu0 %860
  %862 = vrot.lane.b32.xlu0 %v859, 64
  %v863 = vpop.permute.xlu0 %862
  %v864 = vsel %vm312, %v861, %v863
  %v867 = vsel %vm136, %v580, %v579
  %v868 = vsel %vm139, %v582, %v867
  %v869 = vsel %vm142, %v584, %v868
  %v870 = vsel %vm145, %v593, %v869
  %v871 = vsel %vm148, %v91, %v870
  %v872 = vsel %vm151, %v595, %v871
  %v873 = vsel %vm154, %v597, %v872
  %v874 = vsel %vm136, %v587, %v586
  %v875 = vsel %vm139, %v589, %v874
  %v876 = vsel %vm142, %v591, %v875
  %v877 = vsel %vm145, %v599, %v876
  %v878 = vsel %vm148, %v92, %v877
  %v879 = vsel %vm151, %v601, %v878
  %v880 = vsel %vm154, %v603, %v879
  %881 = vrot.lane.b32.xlu0 %v873, 80
  %v882 = vpop.permute.xlu0 %881
  %883 = vrot.lane.b32.xlu0 %v880, 80
  %v884 = vpop.permute.xlu0 %883
  %v885 = vsel %vm348, %v882, %v884
  %v888 = vsel %vm136, %v620, %v619
  %v889 = vsel %vm139, %v622, %v888
  %v890 = vsel %vm142, %v624, %v889
  %v891 = vsel %vm145, %v633, %v890
  %v892 = vsel %vm148, %v634, %v891
  %v893 = vsel %vm151, %v101, %v892
  %v894 = vsel %vm154, %v637, %v893
  %v895 = vsel %vm136, %v627, %v626
  %v896 = vsel %vm139, %v629, %v895
  %v897 = vsel %vm142, %v631, %v896
  %v898 = vsel %vm145, %v639, %v897
  %v899 = vsel %vm148, %v640, %v898
  %v900 = vsel %vm151, %v102, %v899
  %v901 = vsel %vm154, %v643, %v900
  %902 = vrot.lane.b32.xlu0 %v894, 96
  %v903 = vpop.permute.xlu0 %902
  %904 = vrot.lane.b32.xlu0 %v901, 96
  %v905 = vpop.permute.xlu0 %904
  %v906 = vsel %vm384, %v903, %v905
  %v909 = vsel %vm136, %v660, %v659
  %v910 = vsel %vm139, %v662, %v909
  %v911 = vsel %vm142, %v664, %v910
  %v912 = vsel %vm145, %v673, %v911
  %v913 = vsel %vm148, %v674, %v912
  %v914 = vsel %vm151, %v676, %v913
  %v915 = vsel %vm154, %v111, %v914
  %v916 = vsel %vm136, %v667, %v666
  %v917 = vsel %vm139, %v669, %v916
  %v918 = vsel %vm142, %v671, %v917
  %v919 = vsel %vm145, %v679, %v918
  %v920 = vsel %vm148, %v680, %v919
  %v921 = vsel %vm151, %v682, %v920
  %v922 = vsel %vm154, %v112, %v921
  %923 = vrot.lane.b32.xlu0 %v915, 112
  %v924 = vpop.permute.xlu0 %923
  %925 = vrot.lane.b32.xlu0 %v922, 112
  %v926 = vpop.permute.xlu0 %925
  %v927 = vsel %vm420, %v924, %v926
  %v930 = vsel %vm204, %v738, %v770
  %v931 = vsel %vm240, %v773, %v805
  %v932 = vsel %vm276, %v808, %v840
  %v933 = vsel %vm312, %v843, %v861
  %v934 = vsel %vm348, %v864, %v882
  %v935 = vsel %vm384, %v885, %v903
  %v936 = vsel %vm420, %v906, %v924
  %v937 = vsel %vm148, %v711, %v41
  %v938 = vsel %vm151, %v713, %v937
  %v939 = vsel %vm154, %v715, %v938
  %v940 = vsel %vm148, %v725, %v42
  %v941 = vsel %vm151, %v727, %v940
  %v942 = vsel %vm154, %v729, %v941
  %v943 = vsel %vm136, %v719, %v717
  %v944 = vsel %vm139, %v721, %v943
  %v945 = vsel %vm142, %v723, %v944
  %v946 = vsel %vm136, %v733, %v731
  %v947 = vsel %vm139, %v735, %v946
  %v948 = vsel %vm142, %v737, %v947
  %v951 = vsel %vm148, %v51, %v741
  %v952 = vsel %vm151, %v743, %v951
  %v953 = vsel %vm154, %v745, %v952
  %v954 = vsel %vm148, %v52, %v755
  %v955 = vsel %vm151, %v757, %v954
  %v956 = vsel %vm154, %v759, %v955
  %v957 = vsel %vm136, %v749, %v747
  %v958 = vsel %vm139, %v751, %v957
  %v959 = vsel %vm142, %v753, %v958
  %v960 = vsel %vm136, %v763, %v761
  %v961 = vsel %vm139, %v765, %v960
  %v962 = vsel %vm142, %v767, %v961
  %963 = vrot.lane.b32.xlu0 %v953, 16
  %v964 = vpop.permute.xlu0 %963
  %965 = vrot.lane.b32.xlu0 %v956, 16
  %v966 = vpop.permute.xlu0 %965
  %967 = vrot.lane.b32.xlu0 %v959, 16
  %v968 = vpop.permute.xlu0 %967
  %969 = vrot.lane.b32.xlu0 %v962, 16
  %v970 = vpop.permute.xlu0 %969
  %v971 = vsel %vm204, %v964, %v966
  %v972 = vsel %vm204, %v968, %v970
  %v977 = vsel %vm148, %v777, %v776
  %v978 = vsel %vm151, %v61, %v977
  %v979 = vsel %vm154, %v780, %v978
  %v980 = vsel %vm148, %v791, %v790
  %v981 = vsel %vm151, %v62, %v980
  %v982 = vsel %vm154, %v794, %v981
  %v983 = vsel %vm136, %v784, %v782
  %v984 = vsel %vm139, %v786, %v983
  %v985 = vsel %vm142, %v788, %v984
  %v986 = vsel %vm136, %v798, %v796
  %v987 = vsel %vm139, %v800, %v986
  %v988 = vsel %vm142, %v802, %v987
  %989 = vrot.lane.b32.xlu0 %v979, 32
  %v990 = vpop.permute.xlu0 %989
  %991 = vrot.lane.b32.xlu0 %v982, 32
  %v992 = vpop.permute.xlu0 %991
  %993 = vrot.lane.b32.xlu0 %v985, 32
  %v994 = vpop.permute.xlu0 %993
  %995 = vrot.lane.b32.xlu0 %v988, 32
  %v996 = vpop.permute.xlu0 %995
  %v997 = vsel %vm240, %v990, %v992
  %v998 = vsel %vm240, %v994, %v996
  %v1003 = vsel %vm148, %v812, %v811
  %v1004 = vsel %vm151, %v814, %v1003
  %v1005 = vsel %vm154, %v71, %v1004
  %v1006 = vsel %vm148, %v826, %v825
  %v1007 = vsel %vm151, %v828, %v1006
  %v1008 = vsel %vm154, %v72, %v1007
  %v1009 = vsel %vm136, %v819, %v817
  %v1010 = vsel %vm139, %v821, %v1009
  %v1011 = vsel %vm142, %v823, %v1010
  %v1012 = vsel %vm136, %v833, %v831
  %v1013 = vsel %vm139, %v835, %v1012
  %v1014 = vsel %vm142, %v837, %v1013
  %1015 = vrot.lane.b32.xlu0 %v1005, 48
  %v1016 = vpop.permute.xlu0 %1015
  %1017 = vrot.lane.b32.xlu0 %v1008, 48
  %v1018 = vpop.permute.xlu0 %1017
  %1019 = vrot.lane.b32.xlu0 %v1011, 48
  %v1020 = vpop.permute.xlu0 %1019
  %1021 = vrot.lane.b32.xlu0 %v1014, 48
  %v1022 = vpop.permute.xlu0 %1021
  %v1023 = vsel %vm276, %v1016, %v1018
  %v1024 = vsel %vm276, %v1020, %v1022
  %v1045 = vrot.slane %v43, 4
  %v1046 = vrot.slane %v53, 3
  %v1047 = vsel %vm148, %v1046, %v1045
  %v1048 = vrot.slane %v63, 2
  %v1049 = vsel %vm151, %v1048, %v1047
  %v1050 = vrot.slane %v73, 1
  %v1051 = vsel %vm154, %v1050, %v1049
  %v1052 = vrot.slane %v44, 4
  %v1053 = vrot.slane %v54, 3
  %v1054 = vsel %vm148, %v1053, %v1052
  %v1055 = vrot.slane %v64, 2
  %v1056 = vsel %vm151, %v1055, %v1054
  %v1057 = vrot.slane %v74, 1
  %v1058 = vsel %vm154, %v1057, %v1056
  %v1059 = vrot.slane %v93, 7
  %v1060 = vsel %vm136, %v1059, %v83
  %v1061 = vrot.slane %v103, 6
  %v1062 = vsel %vm139, %v1061, %v1060
  %v1063 = vrot.slane %v113, 5
  %v1064 = vsel %vm142, %v1063, %v1062
  %v1065 = vrot.slane %v94, 7
  %v1066 = vsel %vm136, %v1065, %v84
  %v1067 = vrot.slane %v104, 6
  %v1068 = vsel %vm139, %v1067, %v1066
  %v1069 = vrot.slane %v114, 5
  %v1070 = vsel %vm142, %v1069, %v1068
  %1071 = vrot.lane.b32.xlu0 %v1051, 64
  %v1072 = vpop.permute.xlu0 %1071
  %1073 = vrot.lane.b32.xlu0 %v1058, 64
  %v1074 = vpop.permute.xlu0 %1073
  %1075 = vrot.lane.b32.xlu0 %v1064, 64
  %v1076 = vpop.permute.xlu0 %1075
  %1077 = vrot.lane.b32.xlu0 %v1070, 64
  %v1078 = vpop.permute.xlu0 %1077
  %v1079 = vsel %vm312, %v1072, %v1074
  %v1080 = vsel %vm312, %v1076, %v1078
  %v1085 = vrot.slane %v43, 5
  %v1086 = vrot.slane %v53, 4
  %v1087 = vsel %vm148, %v1086, %v1085
  %v1088 = vrot.slane %v63, 3
  %v1089 = vsel %vm151, %v1088, %v1087
  %v1090 = vrot.slane %v73, 2
  %v1091 = vsel %vm154, %v1090, %v1089
  %v1092 = vrot.slane %v44, 5
  %v1093 = vrot.slane %v54, 4
  %v1094 = vsel %vm148, %v1093, %v1092
  %v1095 = vrot.slane %v64, 3
  %v1096 = vsel %vm151, %v1095, %v1094
  %v1097 = vrot.slane %v74, 2
  %v1098 = vsel %vm154, %v1097, %v1096
  %v1099 = vrot.slane %v83, 1
  %v1100 = vsel %vm136, %v93, %v1099
  %v1101 = vrot.slane %v103, 7
  %v1102 = vsel %vm139, %v1101, %v1100
  %v1103 = vrot.slane %v113, 6
  %v1104 = vsel %vm142, %v1103, %v1102
  %v1105 = vrot.slane %v84, 1
  %v1106 = vsel %vm136, %v94, %v1105
  %v1107 = vrot.slane %v104, 7
  %v1108 = vsel %vm139, %v1107, %v1106
  %v1109 = vrot.slane %v114, 6
  %v1110 = vsel %vm142, %v1109, %v1108
  %1111 = vrot.lane.b32.xlu0 %v1091, 80
  %v1112 = vpop.permute.xlu0 %1111
  %1113 = vrot.lane.b32.xlu0 %v1098, 80
  %v1114 = vpop.permute.xlu0 %1113
  %1115 = vrot.lane.b32.xlu0 %v1104, 80
  %v1116 = vpop.permute.xlu0 %1115
  %1117 = vrot.lane.b32.xlu0 %v1110, 80
  %v1118 = vpop.permute.xlu0 %1117
  %v1119 = vsel %vm348, %v1112, %v1114
  %v1120 = vsel %vm348, %v1116, %v1118
  %v1125 = vrot.slane %v43, 6
  %v1126 = vrot.slane %v53, 5
  %v1127 = vsel %vm148, %v1126, %v1125
  %v1128 = vrot.slane %v63, 4
  %v1129 = vsel %vm151, %v1128, %v1127
  %v1130 = vrot.slane %v73, 3
  %v1131 = vsel %vm154, %v1130, %v1129
  %v1132 = vrot.slane %v44, 6
  %v1133 = vrot.slane %v54, 5
  %v1134 = vsel %vm148, %v1133, %v1132
  %v1135 = vrot.slane %v64, 4
  %v1136 = vsel %vm151, %v1135, %v1134
  %v1137 = vrot.slane %v74, 3
  %v1138 = vsel %vm154, %v1137, %v1136
  %v1139 = vrot.slane %v83, 2
  %v1140 = vrot.slane %v93, 1
  %v1141 = vsel %vm136, %v1140, %v1139
  %v1142 = vsel %vm139, %v103, %v1141
  %v1143 = vrot.slane %v113, 7
  %v1144 = vsel %vm142, %v1143, %v1142
  %v1145 = vrot.slane %v84, 2
  %v1146 = vrot.slane %v94, 1
  %v1147 = vsel %vm136, %v1146, %v1145
  %v1148 = vsel %vm139, %v104, %v1147
  %v1149 = vrot.slane %v114, 7
  %v1150 = vsel %vm142, %v1149, %v1148
  %1151 = vrot.lane.b32.xlu0 %v1131, 96
  %v1152 = vpop.permute.xlu0 %1151
  %1153 = vrot.lane.b32.xlu0 %v1138, 96
  %v1154 = vpop.permute.xlu0 %1153
  %1155 = vrot.lane.b32.xlu0 %v1144, 96
  %v1156 = vpop.permute.xlu0 %1155
  %1157 = vrot.lane.b32.xlu0 %v1150, 96
  %v1158 = vpop.permute.xlu0 %1157
  %v1159 = vsel %vm384, %v1152, %v1154
  %v1160 = vsel %vm384, %v1156, %v1158
  %v1165 = vrot.slane %v43, 7
  %v1166 = vrot.slane %v53, 6
  %v1167 = vsel %vm148, %v1166, %v1165
  %v1168 = vrot.slane %v63, 5
  %v1169 = vsel %vm151, %v1168, %v1167
  %v1170 = vrot.slane %v73, 4
  %v1171 = vsel %vm154, %v1170, %v1169
  %v1172 = vrot.slane %v44, 7
  %v1173 = vrot.slane %v54, 6
  %v1174 = vsel %vm148, %v1173, %v1172
  %v1175 = vrot.slane %v64, 5
  %v1176 = vsel %vm151, %v1175, %v1174
  %v1177 = vrot.slane %v74, 4
  %v1178 = vsel %vm154, %v1177, %v1176
  %v1179 = vrot.slane %v83, 3
  %v1180 = vrot.slane %v93, 2
  %v1181 = vsel %vm136, %v1180, %v1179
  %v1182 = vrot.slane %v103, 1
  %v1183 = vsel %vm139, %v1182, %v1181
  %v1184 = vsel %vm142, %v113, %v1183
  %v1185 = vrot.slane %v84, 3
  %v1186 = vrot.slane %v94, 2
  %v1187 = vsel %vm136, %v1186, %v1185
  %v1188 = vrot.slane %v104, 1
  %v1189 = vsel %vm139, %v1188, %v1187
  %v1190 = vsel %vm142, %v114, %v1189
  %1191 = vrot.lane.b32.xlu0 %v1171, 112
  %v1192 = vpop.permute.xlu0 %1191
  %1193 = vrot.lane.b32.xlu0 %v1178, 112
  %v1194 = vpop.permute.xlu0 %1193
  %1195 = vrot.lane.b32.xlu0 %v1184, 112
  %v1196 = vpop.permute.xlu0 %1195
  %1197 = vrot.lane.b32.xlu0 %v1190, 112
  %v1198 = vpop.permute.xlu0 %1197
  %v1199 = vsel %vm420, %v1192, %v1194
  %v1200 = vsel %vm420, %v1196, %v1198
  %v1203 = vsel %vm204, %v942, %v964
  %v1204 = vsel %vm204, %v948, %v968
  %v1205 = vsel %vm240, %v971, %v990
  %v1206 = vsel %vm240, %v972, %v994
  %v1207 = vsel %vm276, %v997, %v1016
  %v1208 = vsel %vm276, %v998, %v1020
  %v1209 = vsel %vm312, %v1023, %v1072
  %v1210 = vsel %vm312, %v1024, %v1076
  %v1211 = vsel %vm348, %v1079, %v1112
  %v1212 = vsel %vm348, %v1080, %v1116
  %v1213 = vsel %vm384, %v1119, %v1152
  %v1214 = vsel %vm384, %v1120, %v1156
  %v1215 = vsel %vm420, %v1159, %v1192
  %v1216 = vsel %vm420, %v1160, %v1196
  %v1217 = vrot.slane %v53, 7
  %v1218 = vsel %vm136, %v1217, %v43
  %v1219 = vrot.slane %v63, 6
  %v1220 = vsel %vm139, %v1219, %v1218
  %v1221 = vrot.slane %v73, 5
  %v1222 = vsel %vm142, %v1221, %v1220
  %v1223 = vrot.slane %v83, 4
  %v1224 = vsel %vm145, %v1223, %v1222
  %v1225 = vrot.slane %v93, 3
  %v1226 = vsel %vm148, %v1225, %v1224
  %v1227 = vrot.slane %v103, 2
  %v1228 = vsel %vm151, %v1227, %v1226
  %v1229 = vrot.slane %v113, 1
  %v1230 = vsel %vm154, %v1229, %v1228
  %v1231 = vrot.slane %v54, 7
  %v1232 = vsel %vm136, %v1231, %v44
  %v1233 = vrot.slane %v64, 6
  %v1234 = vsel %vm139, %v1233, %v1232
  %v1235 = vrot.slane %v74, 5
  %v1236 = vsel %vm142, %v1235, %v1234
  %v1237 = vrot.slane %v84, 4
  %v1238 = vsel %vm145, %v1237, %v1236
  %v1239 = vrot.slane %v94, 3
  %v1240 = vsel %vm148, %v1239, %v1238
  %v1241 = vrot.slane %v104, 2
  %v1242 = vsel %vm151, %v1241, %v1240
  %v1243 = vrot.slane %v114, 1
  %v1244 = vsel %vm154, %v1243, %v1242
  %v1247 = vrot.slane %v43, 1
  %v1248 = vsel %vm136, %v53, %v1247
  %v1249 = vrot.slane %v63, 7
  %v1250 = vsel %vm139, %v1249, %v1248
  %v1251 = vrot.slane %v73, 6
  %v1252 = vsel %vm142, %v1251, %v1250
  %v1253 = vrot.slane %v83, 5
  %v1254 = vsel %vm145, %v1253, %v1252
  %v1255 = vrot.slane %v93, 4
  %v1256 = vsel %vm148, %v1255, %v1254
  %v1257 = vrot.slane %v103, 3
  %v1258 = vsel %vm151, %v1257, %v1256
  %v1259 = vrot.slane %v113, 2
  %v1260 = vsel %vm154, %v1259, %v1258
  %v1261 = vrot.slane %v44, 1
  %v1262 = vsel %vm136, %v54, %v1261
  %v1263 = vrot.slane %v64, 7
  %v1264 = vsel %vm139, %v1263, %v1262
  %v1265 = vrot.slane %v74, 6
  %v1266 = vsel %vm142, %v1265, %v1264
  %v1267 = vrot.slane %v84, 5
  %v1268 = vsel %vm145, %v1267, %v1266
  %v1269 = vrot.slane %v94, 4
  %v1270 = vsel %vm148, %v1269, %v1268
  %v1271 = vrot.slane %v104, 3
  %v1272 = vsel %vm151, %v1271, %v1270
  %v1273 = vrot.slane %v114, 2
  %v1274 = vsel %vm154, %v1273, %v1272
  %1275 = vrot.lane.b32.xlu0 %v1260, 16
  %v1276 = vpop.permute.xlu0 %1275
  %1277 = vrot.lane.b32.xlu0 %v1274, 16
  %v1278 = vpop.permute.xlu0 %1277
  %v1279 = vsel %vm204, %v1276, %v1278
  %v1282 = vrot.slane %v43, 2
  %v1283 = vrot.slane %v53, 1
  %v1284 = vsel %vm136, %v1283, %v1282
  %v1285 = vsel %vm139, %v63, %v1284
  %v1286 = vrot.slane %v73, 7
  %v1287 = vsel %vm142, %v1286, %v1285
  %v1288 = vrot.slane %v83, 6
  %v1289 = vsel %vm145, %v1288, %v1287
  %v1290 = vrot.slane %v93, 5
  %v1291 = vsel %vm148, %v1290, %v1289
  %v1292 = vrot.slane %v103, 4
  %v1293 = vsel %vm151, %v1292, %v1291
  %v1294 = vrot.slane %v113, 3
  %v1295 = vsel %vm154, %v1294, %v1293
  %v1296 = vrot.slane %v44, 2
  %v1297 = vrot.slane %v54, 1
  %v1298 = vsel %vm136, %v1297, %v1296
  %v1299 = vsel %vm139, %v64, %v1298
  %v1300 = vrot.slane %v74, 7
  %v1301 = vsel %vm142, %v1300, %v1299
  %v1302 = vrot.slane %v84, 6
  %v1303 = vsel %vm145, %v1302, %v1301
  %v1304 = vrot.slane %v94, 5
  %v1305 = vsel %vm148, %v1304, %v1303
  %v1306 = vrot.slane %v104, 4
  %v1307 = vsel %vm151, %v1306, %v1305
  %v1308 = vrot.slane %v114, 3
  %v1309 = vsel %vm154, %v1308, %v1307
  %1310 = vrot.lane.b32.xlu0 %v1295, 32
  %v1311 = vpop.permute.xlu0 %1310
  %1312 = vrot.lane.b32.xlu0 %v1309, 32
  %v1313 = vpop.permute.xlu0 %1312
  %v1314 = vsel %vm240, %v1311, %v1313
  %v1317 = vrot.slane %v43, 3
  %v1318 = vrot.slane %v53, 2
  %v1319 = vsel %vm136, %v1318, %v1317
  %v1320 = vrot.slane %v63, 1
  %v1321 = vsel %vm139, %v1320, %v1319
  %v1322 = vsel %vm142, %v73, %v1321
  %v1323 = vrot.slane %v83, 7
  %v1324 = vsel %vm145, %v1323, %v1322
  %v1325 = vrot.slane %v93, 6
  %v1326 = vsel %vm148, %v1325, %v1324
  %v1327 = vrot.slane %v103, 5
  %v1328 = vsel %vm151, %v1327, %v1326
  %v1329 = vrot.slane %v113, 4
  %v1330 = vsel %vm154, %v1329, %v1328
  %v1331 = vrot.slane %v44, 3
  %v1332 = vrot.slane %v54, 2
  %v1333 = vsel %vm136, %v1332, %v1331
  %v1334 = vrot.slane %v64, 1
  %v1335 = vsel %vm139, %v1334, %v1333
  %v1336 = vsel %vm142, %v74, %v1335
  %v1337 = vrot.slane %v84, 7
  %v1338 = vsel %vm145, %v1337, %v1336
  %v1339 = vrot.slane %v94, 6
  %v1340 = vsel %vm148, %v1339, %v1338
  %v1341 = vrot.slane %v104, 5
  %v1342 = vsel %vm151, %v1341, %v1340
  %v1343 = vrot.slane %v114, 4
  %v1344 = vsel %vm154, %v1343, %v1342
  %1345 = vrot.lane.b32.xlu0 %v1330, 48
  %v1346 = vpop.permute.xlu0 %1345
  %1347 = vrot.lane.b32.xlu0 %v1344, 48
  %v1348 = vpop.permute.xlu0 %1347
  %v1349 = vsel %vm276, %v1346, %v1348
  %v1352 = vsel %vm136, %v1046, %v1045
  %v1353 = vsel %vm139, %v1048, %v1352
  %v1354 = vsel %vm142, %v1050, %v1353
  %v1355 = vsel %vm145, %v83, %v1354
  %v1356 = vsel %vm148, %v1059, %v1355
  %v1357 = vsel %vm151, %v1061, %v1356
  %v1358 = vsel %vm154, %v1063, %v1357
  %v1359 = vsel %vm136, %v1053, %v1052
  %v1360 = vsel %vm139, %v1055, %v1359
  %v1361 = vsel %vm142, %v1057, %v1360
  %v1362 = vsel %vm145, %v84, %v1361
  %v1363 = vsel %vm148, %v1065, %v1362
  %v1364 = vsel %vm151, %v1067, %v1363
  %v1365 = vsel %vm154, %v1069, %v1364
  %1366 = vrot.lane.b32.xlu0 %v1358, 64
  %v1367 = vpop.permute.xlu0 %1366
  %1368 = vrot.lane.b32.xlu0 %v1365, 64
  %v1369 = vpop.permute.xlu0 %1368
  %v1370 = vsel %vm312, %v1367, %v1369
  %v1373 = vsel %vm136, %v1086, %v1085
  %v1374 = vsel %vm139, %v1088, %v1373
  %v1375 = vsel %vm142, %v1090, %v1374
  %v1376 = vsel %vm145, %v1099, %v1375
  %v1377 = vsel %vm148, %v93, %v1376
  %v1378 = vsel %vm151, %v1101, %v1377
  %v1379 = vsel %vm154, %v1103, %v1378
  %v1380 = vsel %vm136, %v1093, %v1092
  %v1381 = vsel %vm139, %v1095, %v1380
  %v1382 = vsel %vm142, %v1097, %v1381
  %v1383 = vsel %vm145, %v1105, %v1382
  %v1384 = vsel %vm148, %v94, %v1383
  %v1385 = vsel %vm151, %v1107, %v1384
  %v1386 = vsel %vm154, %v1109, %v1385
  %1387 = vrot.lane.b32.xlu0 %v1379, 80
  %v1388 = vpop.permute.xlu0 %1387
  %1389 = vrot.lane.b32.xlu0 %v1386, 80
  %v1390 = vpop.permute.xlu0 %1389
  %v1391 = vsel %vm348, %v1388, %v1390
  %v1394 = vsel %vm136, %v1126, %v1125
  %v1395 = vsel %vm139, %v1128, %v1394
  %v1396 = vsel %vm142, %v1130, %v1395
  %v1397 = vsel %vm145, %v1139, %v1396
  %v1398 = vsel %vm148, %v1140, %v1397
  %v1399 = vsel %vm151, %v103, %v1398
  %v1400 = vsel %vm154, %v1143, %v1399
  %v1401 = vsel %vm136, %v1133, %v1132
  %v1402 = vsel %vm139, %v1135, %v1401
  %v1403 = vsel %vm142, %v1137, %v1402
  %v1404 = vsel %vm145, %v1145, %v1403
  %v1405 = vsel %vm148, %v1146, %v1404
  %v1406 = vsel %vm151, %v104, %v1405
  %v1407 = vsel %vm154, %v1149, %v1406
  %1408 = vrot.lane.b32.xlu0 %v1400, 96
  %v1409 = vpop.permute.xlu0 %1408
  %1410 = vrot.lane.b32.xlu0 %v1407, 96
  %v1411 = vpop.permute.xlu0 %1410
  %v1412 = vsel %vm384, %v1409, %v1411
  %v1415 = vsel %vm136, %v1166, %v1165
  %v1416 = vsel %vm139, %v1168, %v1415
  %v1417 = vsel %vm142, %v1170, %v1416
  %v1418 = vsel %vm145, %v1179, %v1417
  %v1419 = vsel %vm148, %v1180, %v1418
  %v1420 = vsel %vm151, %v1182, %v1419
  %v1421 = vsel %vm154, %v113, %v1420
  %v1422 = vsel %vm136, %v1173, %v1172
  %v1423 = vsel %vm139, %v1175, %v1422
  %v1424 = vsel %vm142, %v1177, %v1423
  %v1425 = vsel %vm145, %v1185, %v1424
  %v1426 = vsel %vm148, %v1186, %v1425
  %v1427 = vsel %vm151, %v1188, %v1426
  %v1428 = vsel %vm154, %v114, %v1427
  %1429 = vrot.lane.b32.xlu0 %v1421, 112
  %v1430 = vpop.permute.xlu0 %1429
  %1431 = vrot.lane.b32.xlu0 %v1428, 112
  %v1432 = vpop.permute.xlu0 %1431
  %v1433 = vsel %vm420, %v1430, %v1432
  %v1436 = vsel %vm204, %v1244, %v1276
  %v1437 = vsel %vm240, %v1279, %v1311
  %v1438 = vsel %vm276, %v1314, %v1346
  %v1439 = vsel %vm312, %v1349, %v1367
  %v1440 = vsel %vm348, %v1370, %v1388
  %v1441 = vsel %vm384, %v1391, %v1409
  %v1442 = vsel %vm420, %v1412, %v1430
  %v1443 = vsel %vm148, %v1217, %v43
  %v1444 = vsel %vm151, %v1219, %v1443
  %v1445 = vsel %vm154, %v1221, %v1444
  %v1446 = vsel %vm148, %v1231, %v44
  %v1447 = vsel %vm151, %v1233, %v1446
  %v1448 = vsel %vm154, %v1235, %v1447
  %v1449 = vsel %vm136, %v1225, %v1223
  %v1450 = vsel %vm139, %v1227, %v1449
  %v1451 = vsel %vm142, %v1229, %v1450
  %v1452 = vsel %vm136, %v1239, %v1237
  %v1453 = vsel %vm139, %v1241, %v1452
  %v1454 = vsel %vm142, %v1243, %v1453
  %v1457 = vsel %vm148, %v53, %v1247
  %v1458 = vsel %vm151, %v1249, %v1457
  %v1459 = vsel %vm154, %v1251, %v1458
  %v1460 = vsel %vm148, %v54, %v1261
  %v1461 = vsel %vm151, %v1263, %v1460
  %v1462 = vsel %vm154, %v1265, %v1461
  %v1463 = vsel %vm136, %v1255, %v1253
  %v1464 = vsel %vm139, %v1257, %v1463
  %v1465 = vsel %vm142, %v1259, %v1464
  %v1466 = vsel %vm136, %v1269, %v1267
  %v1467 = vsel %vm139, %v1271, %v1466
  %v1468 = vsel %vm142, %v1273, %v1467
  %1469 = vrot.lane.b32.xlu0 %v1459, 16
  %v1470 = vpop.permute.xlu0 %1469
  %1471 = vrot.lane.b32.xlu0 %v1462, 16
  %v1472 = vpop.permute.xlu0 %1471
  %1473 = vrot.lane.b32.xlu0 %v1465, 16
  %v1474 = vpop.permute.xlu0 %1473
  %1475 = vrot.lane.b32.xlu0 %v1468, 16
  %v1476 = vpop.permute.xlu0 %1475
  %v1477 = vsel %vm204, %v1470, %v1472
  %v1478 = vsel %vm204, %v1474, %v1476
  %v1483 = vsel %vm148, %v1283, %v1282
  %v1484 = vsel %vm151, %v63, %v1483
  %v1485 = vsel %vm154, %v1286, %v1484
  %v1486 = vsel %vm148, %v1297, %v1296
  %v1487 = vsel %vm151, %v64, %v1486
  %v1488 = vsel %vm154, %v1300, %v1487
  %v1489 = vsel %vm136, %v1290, %v1288
  %v1490 = vsel %vm139, %v1292, %v1489
  %v1491 = vsel %vm142, %v1294, %v1490
  %v1492 = vsel %vm136, %v1304, %v1302
  %v1493 = vsel %vm139, %v1306, %v1492
  %v1494 = vsel %vm142, %v1308, %v1493
  %1495 = vrot.lane.b32.xlu0 %v1485, 32
  %v1496 = vpop.permute.xlu0 %1495
  %1497 = vrot.lane.b32.xlu0 %v1488, 32
  %v1498 = vpop.permute.xlu0 %1497
  %1499 = vrot.lane.b32.xlu0 %v1491, 32
  %v1500 = vpop.permute.xlu0 %1499
  %1501 = vrot.lane.b32.xlu0 %v1494, 32
  %v1502 = vpop.permute.xlu0 %1501
  %v1503 = vsel %vm240, %v1496, %v1498
  %v1504 = vsel %vm240, %v1500, %v1502
  %v1509 = vsel %vm148, %v1318, %v1317
  %v1510 = vsel %vm151, %v1320, %v1509
  %v1511 = vsel %vm154, %v73, %v1510
  %v1512 = vsel %vm148, %v1332, %v1331
  %v1513 = vsel %vm151, %v1334, %v1512
  %v1514 = vsel %vm154, %v74, %v1513
  %v1515 = vsel %vm136, %v1325, %v1323
  %v1516 = vsel %vm139, %v1327, %v1515
  %v1517 = vsel %vm142, %v1329, %v1516
  %v1518 = vsel %vm136, %v1339, %v1337
  %v1519 = vsel %vm139, %v1341, %v1518
  %v1520 = vsel %vm142, %v1343, %v1519
  %1521 = vrot.lane.b32.xlu0 %v1511, 48
  %v1522 = vpop.permute.xlu0 %1521
  %1523 = vrot.lane.b32.xlu0 %v1514, 48
  %v1524 = vpop.permute.xlu0 %1523
  %1525 = vrot.lane.b32.xlu0 %v1517, 48
  %v1526 = vpop.permute.xlu0 %1525
  %1527 = vrot.lane.b32.xlu0 %v1520, 48
  %v1528 = vpop.permute.xlu0 %1527
  %v1529 = vsel %vm276, %v1522, %v1524
  %v1530 = vsel %vm276, %v1526, %v1528
  %v1551 = vrot.slane %v45, 4
  %v1552 = vrot.slane %v55, 3
  %v1553 = vsel %vm148, %v1552, %v1551
  %v1554 = vrot.slane %v65, 2
  %v1555 = vsel %vm151, %v1554, %v1553
  %v1556 = vrot.slane %v75, 1
  %v1557 = vsel %vm154, %v1556, %v1555
  %v1558 = vrot.slane %v46, 4
  %v1559 = vrot.slane %v56, 3
  %v1560 = vsel %vm148, %v1559, %v1558
  %v1561 = vrot.slane %v66, 2
  %v1562 = vsel %vm151, %v1561, %v1560
  %v1563 = vrot.slane %v76, 1
  %v1564 = vsel %vm154, %v1563, %v1562
  %v1565 = vrot.slane %v95, 7
  %v1566 = vsel %vm136, %v1565, %v85
  %v1567 = vrot.slane %v105, 6
  %v1568 = vsel %vm139, %v1567, %v1566
  %v1569 = vrot.slane %v115, 5
  %v1570 = vsel %vm142, %v1569, %v1568
  %v1571 = vrot.slane %v96, 7
  %v1572 = vsel %vm136, %v1571, %v86
  %v1573 = vrot.slane %v106, 6
  %v1574 = vsel %vm139, %v1573, %v1572
  %v1575 = vrot.slane %v116, 5
  %v1576 = vsel %vm142, %v1575, %v1574
  %1577 = vrot.lane.b32.xlu0 %v1557, 64
  %v1578 = vpop.permute.xlu0 %1577
  %1579 = vrot.lane.b32.xlu0 %v1564, 64
  %v1580 = vpop.permute.xlu0 %1579
  %1581 = vrot.lane.b32.xlu0 %v1570, 64
  %v1582 = vpop.permute.xlu0 %1581
  %1583 = vrot.lane.b32.xlu0 %v1576, 64
  %v1584 = vpop.permute.xlu0 %1583
  %v1585 = vsel %vm312, %v1578, %v1580
  %v1586 = vsel %vm312, %v1582, %v1584
  %v1591 = vrot.slane %v45, 5
  %v1592 = vrot.slane %v55, 4
  %v1593 = vsel %vm148, %v1592, %v1591
  %v1594 = vrot.slane %v65, 3
  %v1595 = vsel %vm151, %v1594, %v1593
  %v1596 = vrot.slane %v75, 2
  %v1597 = vsel %vm154, %v1596, %v1595
  %v1598 = vrot.slane %v46, 5
  %v1599 = vrot.slane %v56, 4
  %v1600 = vsel %vm148, %v1599, %v1598
  %v1601 = vrot.slane %v66, 3
  %v1602 = vsel %vm151, %v1601, %v1600
  %v1603 = vrot.slane %v76, 2
  %v1604 = vsel %vm154, %v1603, %v1602
  %v1605 = vrot.slane %v85, 1
  %v1606 = vsel %vm136, %v95, %v1605
  %v1607 = vrot.slane %v105, 7
  %v1608 = vsel %vm139, %v1607, %v1606
  %v1609 = vrot.slane %v115, 6
  %v1610 = vsel %vm142, %v1609, %v1608
  %v1611 = vrot.slane %v86, 1
  %v1612 = vsel %vm136, %v96, %v1611
  %v1613 = vrot.slane %v106, 7
  %v1614 = vsel %vm139, %v1613, %v1612
  %v1615 = vrot.slane %v116, 6
  %v1616 = vsel %vm142, %v1615, %v1614
  %1617 = vrot.lane.b32.xlu0 %v1597, 80
  %v1618 = vpop.permute.xlu0 %1617
  %1619 = vrot.lane.b32.xlu0 %v1604, 80
  %v1620 = vpop.permute.xlu0 %1619
  %1621 = vrot.lane.b32.xlu0 %v1610, 80
  %v1622 = vpop.permute.xlu0 %1621
  %1623 = vrot.lane.b32.xlu0 %v1616, 80
  %v1624 = vpop.permute.xlu0 %1623
  %v1625 = vsel %vm348, %v1618, %v1620
  %v1626 = vsel %vm348, %v1622, %v1624
  %v1631 = vrot.slane %v45, 6
  %v1632 = vrot.slane %v55, 5
  %v1633 = vsel %vm148, %v1632, %v1631
  %v1634 = vrot.slane %v65, 4
  %v1635 = vsel %vm151, %v1634, %v1633
  %v1636 = vrot.slane %v75, 3
  %v1637 = vsel %vm154, %v1636, %v1635
  %v1638 = vrot.slane %v46, 6
  %v1639 = vrot.slane %v56, 5
  %v1640 = vsel %vm148, %v1639, %v1638
  %v1641 = vrot.slane %v66, 4
  %v1642 = vsel %vm151, %v1641, %v1640
  %v1643 = vrot.slane %v76, 3
  %v1644 = vsel %vm154, %v1643, %v1642
  %v1645 = vrot.slane %v85, 2
  %v1646 = vrot.slane %v95, 1
  %v1647 = vsel %vm136, %v1646, %v1645
  %v1648 = vsel %vm139, %v105, %v1647
  %v1649 = vrot.slane %v115, 7
  %v1650 = vsel %vm142, %v1649, %v1648
  %v1651 = vrot.slane %v86, 2
  %v1652 = vrot.slane %v96, 1
  %v1653 = vsel %vm136, %v1652, %v1651
  %v1654 = vsel %vm139, %v106, %v1653
  %v1655 = vrot.slane %v116, 7
  %v1656 = vsel %vm142, %v1655, %v1654
  %1657 = vrot.lane.b32.xlu0 %v1637, 96
  %v1658 = vpop.permute.xlu0 %1657
  %1659 = vrot.lane.b32.xlu0 %v1644, 96
  %v1660 = vpop.permute.xlu0 %1659
  %1661 = vrot.lane.b32.xlu0 %v1650, 96
  %v1662 = vpop.permute.xlu0 %1661
  %1663 = vrot.lane.b32.xlu0 %v1656, 96
  %v1664 = vpop.permute.xlu0 %1663
  %v1665 = vsel %vm384, %v1658, %v1660
  %v1666 = vsel %vm384, %v1662, %v1664
  %v1671 = vrot.slane %v45, 7
  %v1672 = vrot.slane %v55, 6
  %v1673 = vsel %vm148, %v1672, %v1671
  %v1674 = vrot.slane %v65, 5
  %v1675 = vsel %vm151, %v1674, %v1673
  %v1676 = vrot.slane %v75, 4
  %v1677 = vsel %vm154, %v1676, %v1675
  %v1678 = vrot.slane %v46, 7
  %v1679 = vrot.slane %v56, 6
  %v1680 = vsel %vm148, %v1679, %v1678
  %v1681 = vrot.slane %v66, 5
  %v1682 = vsel %vm151, %v1681, %v1680
  %v1683 = vrot.slane %v76, 4
  %v1684 = vsel %vm154, %v1683, %v1682
  %v1685 = vrot.slane %v85, 3
  %v1686 = vrot.slane %v95, 2
  %v1687 = vsel %vm136, %v1686, %v1685
  %v1688 = vrot.slane %v105, 1
  %v1689 = vsel %vm139, %v1688, %v1687
  %v1690 = vsel %vm142, %v115, %v1689
  %v1691 = vrot.slane %v86, 3
  %v1692 = vrot.slane %v96, 2
  %v1693 = vsel %vm136, %v1692, %v1691
  %v1694 = vrot.slane %v106, 1
  %v1695 = vsel %vm139, %v1694, %v1693
  %v1696 = vsel %vm142, %v116, %v1695
  %1697 = vrot.lane.b32.xlu0 %v1677, 112
  %v1698 = vpop.permute.xlu0 %1697
  %1699 = vrot.lane.b32.xlu0 %v1684, 112
  %v1700 = vpop.permute.xlu0 %1699
  %1701 = vrot.lane.b32.xlu0 %v1690, 112
  %v1702 = vpop.permute.xlu0 %1701
  %1703 = vrot.lane.b32.xlu0 %v1696, 112
  %v1704 = vpop.permute.xlu0 %1703
  %v1705 = vsel %vm420, %v1698, %v1700
  %v1706 = vsel %vm420, %v1702, %v1704
  %v1709 = vsel %vm204, %v1448, %v1470
  %v1710 = vsel %vm204, %v1454, %v1474
  %v1711 = vsel %vm240, %v1477, %v1496
  %v1712 = vsel %vm240, %v1478, %v1500
  %v1713 = vsel %vm276, %v1503, %v1522
  %v1714 = vsel %vm276, %v1504, %v1526
  %v1715 = vsel %vm312, %v1529, %v1578
  %v1716 = vsel %vm312, %v1530, %v1582
  %v1717 = vsel %vm348, %v1585, %v1618
  %v1718 = vsel %vm348, %v1586, %v1622
  %v1719 = vsel %vm384, %v1625, %v1658
  %v1720 = vsel %vm384, %v1626, %v1662
  %v1721 = vsel %vm420, %v1665, %v1698
  %v1722 = vsel %vm420, %v1666, %v1702
  %v1723 = vrot.slane %v55, 7
  %v1724 = vsel %vm136, %v1723, %v45
  %v1725 = vrot.slane %v65, 6
  %v1726 = vsel %vm139, %v1725, %v1724
  %v1727 = vrot.slane %v75, 5
  %v1728 = vsel %vm142, %v1727, %v1726
  %v1729 = vrot.slane %v85, 4
  %v1730 = vsel %vm145, %v1729, %v1728
  %v1731 = vrot.slane %v95, 3
  %v1732 = vsel %vm148, %v1731, %v1730
  %v1733 = vrot.slane %v105, 2
  %v1734 = vsel %vm151, %v1733, %v1732
  %v1735 = vrot.slane %v115, 1
  %v1736 = vsel %vm154, %v1735, %v1734
  %v1737 = vrot.slane %v56, 7
  %v1738 = vsel %vm136, %v1737, %v46
  %v1739 = vrot.slane %v66, 6
  %v1740 = vsel %vm139, %v1739, %v1738
  %v1741 = vrot.slane %v76, 5
  %v1742 = vsel %vm142, %v1741, %v1740
  %v1743 = vrot.slane %v86, 4
  %v1744 = vsel %vm145, %v1743, %v1742
  %v1745 = vrot.slane %v96, 3
  %v1746 = vsel %vm148, %v1745, %v1744
  %v1747 = vrot.slane %v106, 2
  %v1748 = vsel %vm151, %v1747, %v1746
  %v1749 = vrot.slane %v116, 1
  %v1750 = vsel %vm154, %v1749, %v1748
  %v1753 = vrot.slane %v45, 1
  %v1754 = vsel %vm136, %v55, %v1753
  %v1755 = vrot.slane %v65, 7
  %v1756 = vsel %vm139, %v1755, %v1754
  %v1757 = vrot.slane %v75, 6
  %v1758 = vsel %vm142, %v1757, %v1756
  %v1759 = vrot.slane %v85, 5
  %v1760 = vsel %vm145, %v1759, %v1758
  %v1761 = vrot.slane %v95, 4
  %v1762 = vsel %vm148, %v1761, %v1760
  %v1763 = vrot.slane %v105, 3
  %v1764 = vsel %vm151, %v1763, %v1762
  %v1765 = vrot.slane %v115, 2
  %v1766 = vsel %vm154, %v1765, %v1764
  %v1767 = vrot.slane %v46, 1
  %v1768 = vsel %vm136, %v56, %v1767
  %v1769 = vrot.slane %v66, 7
  %v1770 = vsel %vm139, %v1769, %v1768
  %v1771 = vrot.slane %v76, 6
  %v1772 = vsel %vm142, %v1771, %v1770
  %v1773 = vrot.slane %v86, 5
  %v1774 = vsel %vm145, %v1773, %v1772
  %v1775 = vrot.slane %v96, 4
  %v1776 = vsel %vm148, %v1775, %v1774
  %v1777 = vrot.slane %v106, 3
  %v1778 = vsel %vm151, %v1777, %v1776
  %v1779 = vrot.slane %v116, 2
  %v1780 = vsel %vm154, %v1779, %v1778
  %1781 = vrot.lane.b32.xlu0 %v1766, 16
  %v1782 = vpop.permute.xlu0 %1781
  %1783 = vrot.lane.b32.xlu0 %v1780, 16
  %v1784 = vpop.permute.xlu0 %1783
  %v1785 = vsel %vm204, %v1782, %v1784
  %v1788 = vrot.slane %v45, 2
  %v1789 = vrot.slane %v55, 1
  %v1790 = vsel %vm136, %v1789, %v1788
  %v1791 = vsel %vm139, %v65, %v1790
  %v1792 = vrot.slane %v75, 7
  %v1793 = vsel %vm142, %v1792, %v1791
  %v1794 = vrot.slane %v85, 6
  %v1795 = vsel %vm145, %v1794, %v1793
  %v1796 = vrot.slane %v95, 5
  %v1797 = vsel %vm148, %v1796, %v1795
  %v1798 = vrot.slane %v105, 4
  %v1799 = vsel %vm151, %v1798, %v1797
  %v1800 = vrot.slane %v115, 3
  %v1801 = vsel %vm154, %v1800, %v1799
  %v1802 = vrot.slane %v46, 2
  %v1803 = vrot.slane %v56, 1
  %v1804 = vsel %vm136, %v1803, %v1802
  %v1805 = vsel %vm139, %v66, %v1804
  %v1806 = vrot.slane %v76, 7
  %v1807 = vsel %vm142, %v1806, %v1805
  %v1808 = vrot.slane %v86, 6
  %v1809 = vsel %vm145, %v1808, %v1807
  %v1810 = vrot.slane %v96, 5
  %v1811 = vsel %vm148, %v1810, %v1809
  %v1812 = vrot.slane %v106, 4
  %v1813 = vsel %vm151, %v1812, %v1811
  %v1814 = vrot.slane %v116, 3
  %v1815 = vsel %vm154, %v1814, %v1813
  %1816 = vrot.lane.b32.xlu0 %v1801, 32
  %v1817 = vpop.permute.xlu0 %1816
  %1818 = vrot.lane.b32.xlu0 %v1815, 32
  %v1819 = vpop.permute.xlu0 %1818
  %v1820 = vsel %vm240, %v1817, %v1819
  %v1823 = vrot.slane %v45, 3
  %v1824 = vrot.slane %v55, 2
  %v1825 = vsel %vm136, %v1824, %v1823
  %v1826 = vrot.slane %v65, 1
  %v1827 = vsel %vm139, %v1826, %v1825
  %v1828 = vsel %vm142, %v75, %v1827
  %v1829 = vrot.slane %v85, 7
  %v1830 = vsel %vm145, %v1829, %v1828
  %v1831 = vrot.slane %v95, 6
  %v1832 = vsel %vm148, %v1831, %v1830
  %v1833 = vrot.slane %v105, 5
  %v1834 = vsel %vm151, %v1833, %v1832
  %v1835 = vrot.slane %v115, 4
  %v1836 = vsel %vm154, %v1835, %v1834
  %v1837 = vrot.slane %v46, 3
  %v1838 = vrot.slane %v56, 2
  %v1839 = vsel %vm136, %v1838, %v1837
  %v1840 = vrot.slane %v66, 1
  %v1841 = vsel %vm139, %v1840, %v1839
  %v1842 = vsel %vm142, %v76, %v1841
  %v1843 = vrot.slane %v86, 7
  %v1844 = vsel %vm145, %v1843, %v1842
  %v1845 = vrot.slane %v96, 6
  %v1846 = vsel %vm148, %v1845, %v1844
  %v1847 = vrot.slane %v106, 5
  %v1848 = vsel %vm151, %v1847, %v1846
  %v1849 = vrot.slane %v116, 4
  %v1850 = vsel %vm154, %v1849, %v1848
  %1851 = vrot.lane.b32.xlu0 %v1836, 48
  %v1852 = vpop.permute.xlu0 %1851
  %1853 = vrot.lane.b32.xlu0 %v1850, 48
  %v1854 = vpop.permute.xlu0 %1853
  %v1855 = vsel %vm276, %v1852, %v1854
  %v1858 = vsel %vm136, %v1552, %v1551
  %v1859 = vsel %vm139, %v1554, %v1858
  %v1860 = vsel %vm142, %v1556, %v1859
  %v1861 = vsel %vm145, %v85, %v1860
  %v1862 = vsel %vm148, %v1565, %v1861
  %v1863 = vsel %vm151, %v1567, %v1862
  %v1864 = vsel %vm154, %v1569, %v1863
  %v1865 = vsel %vm136, %v1559, %v1558
  %v1866 = vsel %vm139, %v1561, %v1865
  %v1867 = vsel %vm142, %v1563, %v1866
  %v1868 = vsel %vm145, %v86, %v1867
  %v1869 = vsel %vm148, %v1571, %v1868
  %v1870 = vsel %vm151, %v1573, %v1869
  %v1871 = vsel %vm154, %v1575, %v1870
  %1872 = vrot.lane.b32.xlu0 %v1864, 64
  %v1873 = vpop.permute.xlu0 %1872
  %1874 = vrot.lane.b32.xlu0 %v1871, 64
  %v1875 = vpop.permute.xlu0 %1874
  %v1876 = vsel %vm312, %v1873, %v1875
  %v1879 = vsel %vm136, %v1592, %v1591
  %v1880 = vsel %vm139, %v1594, %v1879
  %v1881 = vsel %vm142, %v1596, %v1880
  %v1882 = vsel %vm145, %v1605, %v1881
  %v1883 = vsel %vm148, %v95, %v1882
  %v1884 = vsel %vm151, %v1607, %v1883
  %v1885 = vsel %vm154, %v1609, %v1884
  %v1886 = vsel %vm136, %v1599, %v1598
  %v1887 = vsel %vm139, %v1601, %v1886
  %v1888 = vsel %vm142, %v1603, %v1887
  %v1889 = vsel %vm145, %v1611, %v1888
  %v1890 = vsel %vm148, %v96, %v1889
  %v1891 = vsel %vm151, %v1613, %v1890
  %v1892 = vsel %vm154, %v1615, %v1891
  %1893 = vrot.lane.b32.xlu0 %v1885, 80
  %v1894 = vpop.permute.xlu0 %1893
  %1895 = vrot.lane.b32.xlu0 %v1892, 80
  %v1896 = vpop.permute.xlu0 %1895
  %v1897 = vsel %vm348, %v1894, %v1896
  %v1900 = vsel %vm136, %v1632, %v1631
  %v1901 = vsel %vm139, %v1634, %v1900
  %v1902 = vsel %vm142, %v1636, %v1901
  %v1903 = vsel %vm145, %v1645, %v1902
  %v1904 = vsel %vm148, %v1646, %v1903
  %v1905 = vsel %vm151, %v105, %v1904
  %v1906 = vsel %vm154, %v1649, %v1905
  %v1907 = vsel %vm136, %v1639, %v1638
  %v1908 = vsel %vm139, %v1641, %v1907
  %v1909 = vsel %vm142, %v1643, %v1908
  %v1910 = vsel %vm145, %v1651, %v1909
  %v1911 = vsel %vm148, %v1652, %v1910
  %v1912 = vsel %vm151, %v106, %v1911
  %v1913 = vsel %vm154, %v1655, %v1912
  %1914 = vrot.lane.b32.xlu0 %v1906, 96
  %v1915 = vpop.permute.xlu0 %1914
  %1916 = vrot.lane.b32.xlu0 %v1913, 96
  %v1917 = vpop.permute.xlu0 %1916
  %v1918 = vsel %vm384, %v1915, %v1917
  %v1921 = vsel %vm136, %v1672, %v1671
  %v1922 = vsel %vm139, %v1674, %v1921
  %v1923 = vsel %vm142, %v1676, %v1922
  %v1924 = vsel %vm145, %v1685, %v1923
  %v1925 = vsel %vm148, %v1686, %v1924
  %v1926 = vsel %vm151, %v1688, %v1925
  %v1927 = vsel %vm154, %v115, %v1926
  %v1928 = vsel %vm136, %v1679, %v1678
  %v1929 = vsel %vm139, %v1681, %v1928
  %v1930 = vsel %vm142, %v1683, %v1929
  %v1931 = vsel %vm145, %v1691, %v1930
  %v1932 = vsel %vm148, %v1692, %v1931
  %v1933 = vsel %vm151, %v1694, %v1932
  %v1934 = vsel %vm154, %v116, %v1933
  %1935 = vrot.lane.b32.xlu0 %v1927, 112
  %v1936 = vpop.permute.xlu0 %1935
  %1937 = vrot.lane.b32.xlu0 %v1934, 112
  %v1938 = vpop.permute.xlu0 %1937
  %v1939 = vsel %vm420, %v1936, %v1938
  %v1942 = vsel %vm204, %v1750, %v1782
  %v1943 = vsel %vm240, %v1785, %v1817
  %v1944 = vsel %vm276, %v1820, %v1852
  %v1945 = vsel %vm312, %v1855, %v1873
  %v1946 = vsel %vm348, %v1876, %v1894
  %v1947 = vsel %vm384, %v1897, %v1915
  %v1948 = vsel %vm420, %v1918, %v1936
  %v1949 = vsel %vm148, %v1723, %v45
  %v1950 = vsel %vm151, %v1725, %v1949
  %v1951 = vsel %vm154, %v1727, %v1950
  %v1952 = vsel %vm148, %v1737, %v46
  %v1953 = vsel %vm151, %v1739, %v1952
  %v1954 = vsel %vm154, %v1741, %v1953
  %v1955 = vsel %vm136, %v1731, %v1729
  %v1956 = vsel %vm139, %v1733, %v1955
  %v1957 = vsel %vm142, %v1735, %v1956
  %v1958 = vsel %vm136, %v1745, %v1743
  %v1959 = vsel %vm139, %v1747, %v1958
  %v1960 = vsel %vm142, %v1749, %v1959
  %v1963 = vsel %vm148, %v55, %v1753
  %v1964 = vsel %vm151, %v1755, %v1963
  %v1965 = vsel %vm154, %v1757, %v1964
  %v1966 = vsel %vm148, %v56, %v1767
  %v1967 = vsel %vm151, %v1769, %v1966
  %v1968 = vsel %vm154, %v1771, %v1967
  %v1969 = vsel %vm136, %v1761, %v1759
  %v1970 = vsel %vm139, %v1763, %v1969
  %v1971 = vsel %vm142, %v1765, %v1970
  %v1972 = vsel %vm136, %v1775, %v1773
  %v1973 = vsel %vm139, %v1777, %v1972
  %v1974 = vsel %vm142, %v1779, %v1973
  %1975 = vrot.lane.b32.xlu0 %v1965, 16
  %v1976 = vpop.permute.xlu0 %1975
  %1977 = vrot.lane.b32.xlu0 %v1968, 16
  %v1978 = vpop.permute.xlu0 %1977
  %1979 = vrot.lane.b32.xlu0 %v1971, 16
  %v1980 = vpop.permute.xlu0 %1979
  %1981 = vrot.lane.b32.xlu0 %v1974, 16
  %v1982 = vpop.permute.xlu0 %1981
  %v1983 = vsel %vm204, %v1976, %v1978
  %v1984 = vsel %vm204, %v1980, %v1982
  %v1989 = vsel %vm148, %v1789, %v1788
  %v1990 = vsel %vm151, %v65, %v1989
  %v1991 = vsel %vm154, %v1792, %v1990
  %v1992 = vsel %vm148, %v1803, %v1802
  %v1993 = vsel %vm151, %v66, %v1992
  %v1994 = vsel %vm154, %v1806, %v1993
  %v1995 = vsel %vm136, %v1796, %v1794
  %v1996 = vsel %vm139, %v1798, %v1995
  %v1997 = vsel %vm142, %v1800, %v1996
  %v1998 = vsel %vm136, %v1810, %v1808
  %v1999 = vsel %vm139, %v1812, %v1998
  %v2000 = vsel %vm142, %v1814, %v1999
  %2001 = vrot.lane.b32.xlu0 %v1991, 32
  %v2002 = vpop.permute.xlu0 %2001
  %2003 = vrot.lane.b32.xlu0 %v1994, 32
  %v2004 = vpop.permute.xlu0 %2003
  %2005 = vrot.lane.b32.xlu0 %v1997, 32
  %v2006 = vpop.permute.xlu0 %2005
  %2007 = vrot.lane.b32.xlu0 %v2000, 32
  %v2008 = vpop.permute.xlu0 %2007
  %v2009 = vsel %vm240, %v2002, %v2004
  %v2010 = vsel %vm240, %v2006, %v2008
  %v2015 = vsel %vm148, %v1824, %v1823
  %v2016 = vsel %vm151, %v1826, %v2015
  %v2017 = vsel %vm154, %v75, %v2016
  %v2018 = vsel %vm148, %v1838, %v1837
  %v2019 = vsel %vm151, %v1840, %v2018
  %v2020 = vsel %vm154, %v76, %v2019
  %v2021 = vsel %vm136, %v1831, %v1829
  %v2022 = vsel %vm139, %v1833, %v2021
  %v2023 = vsel %vm142, %v1835, %v2022
  %v2024 = vsel %vm136, %v1845, %v1843
  %v2025 = vsel %vm139, %v1847, %v2024
  %v2026 = vsel %vm142, %v1849, %v2025
  %2027 = vrot.lane.b32.xlu0 %v2017, 48
  %v2028 = vpop.permute.xlu0 %2027
  %2029 = vrot.lane.b32.xlu0 %v2020, 48
  %v2030 = vpop.permute.xlu0 %2029
  %2031 = vrot.lane.b32.xlu0 %v2023, 48
  %v2032 = vpop.permute.xlu0 %2031
  %2033 = vrot.lane.b32.xlu0 %v2026, 48
  %v2034 = vpop.permute.xlu0 %2033
  %v2035 = vsel %vm276, %v2028, %v2030
  %v2036 = vsel %vm276, %v2032, %v2034
  %v2057 = vrot.slane %v47, 4
  %v2058 = vrot.slane %v57, 3
  %v2059 = vsel %vm148, %v2058, %v2057
  %v2060 = vrot.slane %v67, 2
  %v2061 = vsel %vm151, %v2060, %v2059
  %v2062 = vrot.slane %v77, 1
  %v2063 = vsel %vm154, %v2062, %v2061
  %v2064 = vrot.slane %v48, 4
  %v2065 = vrot.slane %v58, 3
  %v2066 = vsel %vm148, %v2065, %v2064
  %v2067 = vrot.slane %v68, 2
  %v2068 = vsel %vm151, %v2067, %v2066
  %v2069 = vrot.slane %v78, 1
  %v2070 = vsel %vm154, %v2069, %v2068
  %v2071 = vrot.slane %v97, 7
  %v2072 = vsel %vm136, %v2071, %v87
  %v2073 = vrot.slane %v107, 6
  %v2074 = vsel %vm139, %v2073, %v2072
  %v2075 = vrot.slane %v117, 5
  %v2076 = vsel %vm142, %v2075, %v2074
  %v2077 = vrot.slane %v98, 7
  %v2078 = vsel %vm136, %v2077, %v88
  %v2079 = vrot.slane %v108, 6
  %v2080 = vsel %vm139, %v2079, %v2078
  %v2081 = vrot.slane %v118, 5
  %v2082 = vsel %vm142, %v2081, %v2080
  %2083 = vrot.lane.b32.xlu0 %v2063, 64
  %v2084 = vpop.permute.xlu0 %2083
  %2085 = vrot.lane.b32.xlu0 %v2070, 64
  %v2086 = vpop.permute.xlu0 %2085
  %2087 = vrot.lane.b32.xlu0 %v2076, 64
  %v2088 = vpop.permute.xlu0 %2087
  %2089 = vrot.lane.b32.xlu0 %v2082, 64
  %v2090 = vpop.permute.xlu0 %2089
  %v2091 = vsel %vm312, %v2084, %v2086
  %v2092 = vsel %vm312, %v2088, %v2090
  %v2097 = vrot.slane %v47, 5
  %v2098 = vrot.slane %v57, 4
  %v2099 = vsel %vm148, %v2098, %v2097
  %v2100 = vrot.slane %v67, 3
  %v2101 = vsel %vm151, %v2100, %v2099
  %v2102 = vrot.slane %v77, 2
  %v2103 = vsel %vm154, %v2102, %v2101
  %v2104 = vrot.slane %v48, 5
  %v2105 = vrot.slane %v58, 4
  %v2106 = vsel %vm148, %v2105, %v2104
  %v2107 = vrot.slane %v68, 3
  %v2108 = vsel %vm151, %v2107, %v2106
  %v2109 = vrot.slane %v78, 2
  %v2110 = vsel %vm154, %v2109, %v2108
  %v2111 = vrot.slane %v87, 1
  %v2112 = vsel %vm136, %v97, %v2111
  %v2113 = vrot.slane %v107, 7
  %v2114 = vsel %vm139, %v2113, %v2112
  %v2115 = vrot.slane %v117, 6
  %v2116 = vsel %vm142, %v2115, %v2114
  %v2117 = vrot.slane %v88, 1
  %v2118 = vsel %vm136, %v98, %v2117
  %v2119 = vrot.slane %v108, 7
  %v2120 = vsel %vm139, %v2119, %v2118
  %v2121 = vrot.slane %v118, 6
  %v2122 = vsel %vm142, %v2121, %v2120
  %2123 = vrot.lane.b32.xlu0 %v2103, 80
  %v2124 = vpop.permute.xlu0 %2123
  %2125 = vrot.lane.b32.xlu0 %v2110, 80
  %v2126 = vpop.permute.xlu0 %2125
  %2127 = vrot.lane.b32.xlu0 %v2116, 80
  %v2128 = vpop.permute.xlu0 %2127
  %2129 = vrot.lane.b32.xlu0 %v2122, 80
  %v2130 = vpop.permute.xlu0 %2129
  %v2131 = vsel %vm348, %v2124, %v2126
  %v2132 = vsel %vm348, %v2128, %v2130
  %v2137 = vrot.slane %v47, 6
  %v2138 = vrot.slane %v57, 5
  %v2139 = vsel %vm148, %v2138, %v2137
  %v2140 = vrot.slane %v67, 4
  %v2141 = vsel %vm151, %v2140, %v2139
  %v2142 = vrot.slane %v77, 3
  %v2143 = vsel %vm154, %v2142, %v2141
  %v2144 = vrot.slane %v48, 6
  %v2145 = vrot.slane %v58, 5
  %v2146 = vsel %vm148, %v2145, %v2144
  %v2147 = vrot.slane %v68, 4
  %v2148 = vsel %vm151, %v2147, %v2146
  %v2149 = vrot.slane %v78, 3
  %v2150 = vsel %vm154, %v2149, %v2148
  %v2151 = vrot.slane %v87, 2
  %v2152 = vrot.slane %v97, 1
  %v2153 = vsel %vm136, %v2152, %v2151
  %v2154 = vsel %vm139, %v107, %v2153
  %v2155 = vrot.slane %v117, 7
  %v2156 = vsel %vm142, %v2155, %v2154
  %v2157 = vrot.slane %v88, 2
  %v2158 = vrot.slane %v98, 1
  %v2159 = vsel %vm136, %v2158, %v2157
  %v2160 = vsel %vm139, %v108, %v2159
  %v2161 = vrot.slane %v118, 7
  %v2162 = vsel %vm142, %v2161, %v2160
  %2163 = vrot.lane.b32.xlu0 %v2143, 96
  %v2164 = vpop.permute.xlu0 %2163
  %2165 = vrot.lane.b32.xlu0 %v2150, 96
  %v2166 = vpop.permute.xlu0 %2165
  %2167 = vrot.lane.b32.xlu0 %v2156, 96
  %v2168 = vpop.permute.xlu0 %2167
  %2169 = vrot.lane.b32.xlu0 %v2162, 96
  %v2170 = vpop.permute.xlu0 %2169
  %v2171 = vsel %vm384, %v2164, %v2166
  %v2172 = vsel %vm384, %v2168, %v2170
  %v2177 = vrot.slane %v47, 7
  %v2178 = vrot.slane %v57, 6
  %v2179 = vsel %vm148, %v2178, %v2177
  %v2180 = vrot.slane %v67, 5
  %v2181 = vsel %vm151, %v2180, %v2179
  %v2182 = vrot.slane %v77, 4
  %v2183 = vsel %vm154, %v2182, %v2181
  %v2184 = vrot.slane %v48, 7
  %v2185 = vrot.slane %v58, 6
  %v2186 = vsel %vm148, %v2185, %v2184
  %v2187 = vrot.slane %v68, 5
  %v2188 = vsel %vm151, %v2187, %v2186
  %v2189 = vrot.slane %v78, 4
  %v2190 = vsel %vm154, %v2189, %v2188
  %v2191 = vrot.slane %v87, 3
  %v2192 = vrot.slane %v97, 2
  %v2193 = vsel %vm136, %v2192, %v2191
  %v2194 = vrot.slane %v107, 1
  %v2195 = vsel %vm139, %v2194, %v2193
  %v2196 = vsel %vm142, %v117, %v2195
  %v2197 = vrot.slane %v88, 3
  %v2198 = vrot.slane %v98, 2
  %v2199 = vsel %vm136, %v2198, %v2197
  %v2200 = vrot.slane %v108, 1
  %v2201 = vsel %vm139, %v2200, %v2199
  %v2202 = vsel %vm142, %v118, %v2201
  %2203 = vrot.lane.b32.xlu0 %v2183, 112
  %v2204 = vpop.permute.xlu0 %2203
  %2205 = vrot.lane.b32.xlu0 %v2190, 112
  %v2206 = vpop.permute.xlu0 %2205
  %2207 = vrot.lane.b32.xlu0 %v2196, 112
  %v2208 = vpop.permute.xlu0 %2207
  %2209 = vrot.lane.b32.xlu0 %v2202, 112
  %v2210 = vpop.permute.xlu0 %2209
  %v2211 = vsel %vm420, %v2204, %v2206
  %v2212 = vsel %vm420, %v2208, %v2210
  %v2215 = vsel %vm204, %v1954, %v1976
  %v2216 = vsel %vm204, %v1960, %v1980
  %v2217 = vsel %vm240, %v1983, %v2002
  %v2218 = vsel %vm240, %v1984, %v2006
  %v2219 = vsel %vm276, %v2009, %v2028
  %v2220 = vsel %vm276, %v2010, %v2032
  %v2221 = vsel %vm312, %v2035, %v2084
  %v2222 = vsel %vm312, %v2036, %v2088
  %v2223 = vsel %vm348, %v2091, %v2124
  %v2224 = vsel %vm348, %v2092, %v2128
  %v2225 = vsel %vm384, %v2131, %v2164
  %v2226 = vsel %vm384, %v2132, %v2168
  %v2227 = vsel %vm420, %v2171, %v2204
  %v2228 = vsel %vm420, %v2172, %v2208
  %vm2243 = vcmask 1043456
  %v2244 = vrot.slane %v433, 4
  %v2245 = vrot.slane %v439, 4
  %v2246 = vsel %vm2243, %v2244, %v2245
  %v2247 = vrot.slane %v697, 4
  %v2248 = vrot.slane %v698, 4
  %v2249 = vsel %vm2243, %v2247, %v2248
  %v2250 = vrot.slane %v699, 4
  %v2251 = vrot.slane %v700, 4
  %v2252 = vsel %vm2243, %v2250, %v2251
  %v2253 = vrot.slane %v701, 4
  %v2254 = vrot.slane %v702, 4
  %v2255 = vsel %vm2243, %v2253, %v2254
  %v2256 = vrot.slane %v703, 4
  %v2257 = vrot.slane %v704, 4
  %v2258 = vsel %vm2243, %v2256, %v2257
  %v2259 = vrot.slane %v705, 4
  %v2260 = vrot.slane %v706, 4
  %v2261 = vsel %vm2243, %v2259, %v2260
  %v2262 = vrot.slane %v707, 4
  %v2263 = vrot.slane %v708, 4
  %v2264 = vsel %vm2243, %v2262, %v2263
  %v2265 = vrot.slane %v709, 4
  %v2266 = vrot.slane %v710, 4
  %v2267 = vsel %vm2243, %v2265, %v2266
  %v2268 = vrot.slane %v693, 4
  %v2269 = vrot.slane %v694, 4
  %v2270 = vsel %vm2243, %v2268, %v2269
  %v2294 = vrot.slane %v939, 4
  %v2295 = vrot.slane %v945, 4
  %v2296 = vsel %vm2243, %v2294, %v2295
  %v2297 = vrot.slane %v1203, 4
  %v2298 = vrot.slane %v1204, 4
  %v2299 = vsel %vm2243, %v2297, %v2298
  %v2300 = vrot.slane %v1205, 4
  %v2301 = vrot.slane %v1206, 4
  %v2302 = vsel %vm2243, %v2300, %v2301
  %v2303 = vrot.slane %v1207, 4
  %v2304 = vrot.slane %v1208, 4
  %v2305 = vsel %vm2243, %v2303, %v2304
  %v2306 = vrot.slane %v1209, 4
  %v2307 = vrot.slane %v1210, 4
  %v2308 = vsel %vm2243, %v2306, %v2307
  %v2309 = vrot.slane %v1211, 4
  %v2310 = vrot.slane %v1212, 4
  %v2311 = vsel %vm2243, %v2309, %v2310
  %v2312 = vrot.slane %v1213, 4
  %v2313 = vrot.slane %v1214, 4
  %v2314 = vsel %vm2243, %v2312, %v2313
  %v2315 = vrot.slane %v1215, 4
  %v2316 = vrot.slane %v1216, 4
  %v2317 = vsel %vm2243, %v2315, %v2316
  %v2318 = vrot.slane %v1199, 4
  %v2319 = vrot.slane %v1200, 4
  %v2320 = vsel %vm2243, %v2318, %v2319
  %v2344 = vrot.slane %v1445, 4
  %v2345 = vrot.slane %v1451, 4
  %v2346 = vsel %vm2243, %v2344, %v2345
  %v2347 = vrot.slane %v1709, 4
  %v2348 = vrot.slane %v1710, 4
  %v2349 = vsel %vm2243, %v2347, %v2348
  %v2350 = vrot.slane %v1711, 4
  %v2351 = vrot.slane %v1712, 4
  %v2352 = vsel %vm2243, %v2350, %v2351
  %v2353 = vrot.slane %v1713, 4
  %v2354 = vrot.slane %v1714, 4
  %v2355 = vsel %vm2243, %v2353, %v2354
  %v2356 = vrot.slane %v1715, 4
  %v2357 = vrot.slane %v1716, 4
  %v2358 = vsel %vm2243, %v2356, %v2357
  %v2359 = vrot.slane %v1717, 4
  %v2360 = vrot.slane %v1718, 4
  %v2361 = vsel %vm2243, %v2359, %v2360
  %v2362 = vrot.slane %v1719, 4
  %v2363 = vrot.slane %v1720, 4
  %v2364 = vsel %vm2243, %v2362, %v2363
  %v2365 = vrot.slane %v1721, 4
  %v2366 = vrot.slane %v1722, 4
  %v2367 = vsel %vm2243, %v2365, %v2366
  %v2368 = vrot.slane %v1705, 4
  %v2369 = vrot.slane %v1706, 4
  %v2370 = vsel %vm2243, %v2368, %v2369
  %v2394 = vrot.slane %v1951, 4
  %v2395 = vrot.slane %v1957, 4
  %v2396 = vsel %vm2243, %v2394, %v2395
  %v2397 = vrot.slane %v2215, 4
  %v2398 = vrot.slane %v2216, 4
  %v2399 = vsel %vm2243, %v2397, %v2398
  %v2400 = vrot.slane %v2217, 4
  %v2401 = vrot.slane %v2218, 4
  %v2402 = vsel %vm2243, %v2400, %v2401
  %v2403 = vrot.slane %v2219, 4
  %v2404 = vrot.slane %v2220, 4
  %v2405 = vsel %vm2243, %v2403, %v2404
  %v2406 = vrot.slane %v2221, 4
  %v2407 = vrot.slane %v2222, 4
  %v2408 = vsel %vm2243, %v2406, %v2407
  %v2409 = vrot.slane %v2223, 4
  %v2410 = vrot.slane %v2224, 4
  %v2411 = vsel %vm2243, %v2409, %v2410
  %v2412 = vrot.slane %v2225, 4
  %v2413 = vrot.slane %v2226, 4
  %v2414 = vsel %vm2243, %v2412, %v2413
  %v2415 = vrot.slane %v2227, 4
  %v2416 = vrot.slane %v2228, 4
  %v2417 = vsel %vm2243, %v2415, %v2416
  %v2418 = vrot.slane %v2211, 4
  %v2419 = vrot.slane %v2212, 4
  %v2420 = vsel %vm2243, %v2418, %v2419
  %v2430 = vpack.c.bf16 %v2246, %v155
  %v2431 = vpack.c.bf16 %v2249, %v424
  %v2432 = vpack.c.bf16 %v2252, %v425
  %v2433 = vpack.c.bf16 %v2255, %v426
  %v2434 = vpack.c.bf16 %v2258, %v427
  %v2435 = vpack.c.bf16 %v2261, %v428
  %v2436 = vpack.c.bf16 %v2264, %v429
  %v2437 = vpack.c.bf16 %v2267, %v430
  %v2438 = vpack.c.bf16 %v2270, %v421
  %v2439 = vpack.c.bf16 %v2296, %v724
  %v2440 = vpack.c.bf16 %v2299, %v930
  %v2441 = vpack.c.bf16 %v2302, %v931
  %v2442 = vpack.c.bf16 %v2305, %v932
  %v2443 = vpack.c.bf16 %v2308, %v933
  %v2444 = vpack.c.bf16 %v2311, %v934
  %v2445 = vpack.c.bf16 %v2314, %v935
  %v2446 = vpack.c.bf16 %v2317, %v936
  %v2447 = vpack.c.bf16 %v2320, %v927
  %v2448 = vpack.c.bf16 %v2346, %v1230
  %v2449 = vpack.c.bf16 %v2349, %v1436
  %v2450 = vpack.c.bf16 %v2352, %v1437
  %v2451 = vpack.c.bf16 %v2355, %v1438
  %v2452 = vpack.c.bf16 %v2358, %v1439
  %v2453 = vpack.c.bf16 %v2361, %v1440
  %v2454 = vpack.c.bf16 %v2364, %v1441
  %v2455 = vpack.c.bf16 %v2367, %v1442
  %v2456 = vpack.c.bf16 %v2370, %v1433
  %v2457 = vpack.c.bf16 %v2396, %v1736
  %v2458 = vpack.c.bf16 %v2399, %v1942
  %v2459 = vpack.c.bf16 %v2402, %v1943
  %v2460 = vpack.c.bf16 %v2405, %v1944
  %v2461 = vpack.c.bf16 %v2408, %v1945
  %v2462 = vpack.c.bf16 %v2411, %v1946
  %v2463 = vpack.c.bf16 %v2414, %v1947
  %v2464 = vpack.c.bf16 %v2417, %v1948
  %v2465 = vpack.c.bf16 %v2420, %v1939
  %v2466 = vld [vmem:[%s1] sm:$0xff]
  %v2467 = vld [vmem:[%s1 + $0x8] sm:$0xff]
  %v2468 = vld [vmem:[%s1 + $0x10] sm:$0xff]
  %v2469 = vld [vmem:[%s1 + $0x18] sm:$0xff]
  %v2470 = vld [vmem:[%s1 + $0x20] sm:$0xff]
  %v2471 = vld [vmem:[%s1 + $0x28] sm:$0xff]
  %v2472 = vld [vmem:[%s1 + $0x30] sm:$0xff]
  %v2473 = vld [vmem:[%s1 + $0x38] sm:$0xff]
  %v2474 = vld [vmem:[%s1 + $0x40] sm:$0xff]
  %v2475 = vld [vmem:[%s1 + $0x48] sm:$0xff]
  %v2476 = vld [vmem:[%s1 + $0x50] sm:$0xff]
  %v2477 = vld [vmem:[%s1 + $0x58] sm:$0xff]
  %v2478 = vld [vmem:[%s1 + $0x60] sm:$0xff]
  %v2479 = vld [vmem:[%s1 + $0x68] sm:$0xff]
  %v2480 = vld [vmem:[%s1 + $0x70] sm:$0xff]
  %v2481 = vld [vmem:[%s1 + $0x78] sm:$0xff]
  %v2482 = vld [vmem:[%s1 + $0x80] sm:$0xff]
  %v2483 = vld [vmem:[%s1 + $0x88] sm:$0xff]
  %v2484 = vld [vmem:[%s1 + $0x90] sm:$0xff]
  %v2485 = vld [vmem:[%s1 + $0x98] sm:$0xff]
  %v2486 = vld [vmem:[%s1 + $0xa0] sm:$0xff]
  %v2487 = vld [vmem:[%s1 + $0xa8] sm:$0xff]
  %v2488 = vld [vmem:[%s1 + $0xb0] sm:$0xff]
  %v2489 = vld [vmem:[%s1 + $0xb8] sm:$0xff]
  %v2490 = vld [vmem:[%s1 + $0xc0] sm:$0xff]
  %v2491 = vld [vmem:[%s1 + $0xc8] sm:$0xff]
  %v2492 = vld [vmem:[%s1 + $0xd0] sm:$0xff]
  %v2493 = vld [vmem:[%s1 + $0xd8] sm:$0xff]
  %v2494 = vld [vmem:[%s1 + $0xe0] sm:$0xff]
  %v2495 = vld [vmem:[%s1 + $0xe8] sm:$0xff]
  %v2496 = vld [vmem:[%s1 + $0xf0] sm:$0xff]
  %v2497 = vld [vmem:[%s1 + $0xf8] sm:$0xff]
  %v2498 = vld [vmem:[%s1 + $0x100] sm:$0xff]
  %v2499 = vld [vmem:[%s1 + $0x108] sm:$0xff]
  %v2500 = vld [vmem:[%s1 + $0x110] sm:$0xff]
  %v2501 = vld [vmem:[%s1 + $0x118] sm:$0xff]
  %v2502 = vld [vmem:[%s1 + $0x120] sm:$0xff]
  %v2503 = vld [vmem:[%s1 + $0x128] sm:$0xff]
  %v2504 = vld [vmem:[%s1 + $0x130] sm:$0xff]
  %v2505 = vld [vmem:[%s1 + $0x138] sm:$0xff]
  %v2506 = vld [vmem:[%s1 + $0x140] sm:$0xff]
  %v2507 = vld [vmem:[%s1 + $0x148] sm:$0xff]
  %v2508 = vld [vmem:[%s1 + $0x150] sm:$0xff]
  %v2509 = vld [vmem:[%s1 + $0x158] sm:$0xff]
  %v2510 = vld [vmem:[%s1 + $0x160] sm:$0xff]
  %v2511 = vld [vmem:[%s1 + $0x168] sm:$0xff]
  %v2512 = vld [vmem:[%s1 + $0x170] sm:$0xff]
  %v2513 = vld [vmem:[%s1 + $0x178] sm:$0xff]
  %v2514 = vld [vmem:[%s1 + $0x180] sm:$0xff]
  %v2515 = vld [vmem:[%s1 + $0x188] sm:$0xff]
  %v2516 = vld [vmem:[%s1 + $0x190] sm:$0xff]
  %v2517 = vld [vmem:[%s1 + $0x198] sm:$0xff]
  %v2518 = vld [vmem:[%s1 + $0x1a0] sm:$0xff]
  %v2519 = vld [vmem:[%s1 + $0x1a8] sm:$0xff]
  %v2520 = vld [vmem:[%s1 + $0x1b0] sm:$0xff]
  %v2521 = vld [vmem:[%s1 + $0x1b8] sm:$0xff]
  %v2522 = vld [vmem:[%s1 + $0x1c0] sm:$0xff]
  %v2523 = vld [vmem:[%s1 + $0x1c8] sm:$0xff]
  %v2524 = vld [vmem:[%s1 + $0x1d0] sm:$0xff]
  %v2525 = vld [vmem:[%s1 + $0x1d8] sm:$0xff]
  %v2526 = vld [vmem:[%s1 + $0x1e0] sm:$0xff]
  %v2527 = vld [vmem:[%s1 + $0x1e8] sm:$0xff]
  %v2528 = vld [vmem:[%s1 + $0x1f0] sm:$0xff]
  %v2529 = vld [vmem:[%s1 + $0x1f8] sm:$0xff]
  %v2530 = vld [vmem:[%s1 + $0x200] sm:$0xff]
  %v2531 = vld [vmem:[%s1 + $0x208] sm:$0xff]
  %v2532 = vld [vmem:[%s1 + $0x210] sm:$0xff]
  %v2533 = vld [vmem:[%s1 + $0x218] sm:$0xff]
  %v2534 = vld [vmem:[%s1 + $0x220] sm:$0xff]
  %v2535 = vld [vmem:[%s1 + $0x228] sm:$0xff]
  %v2536 = vld [vmem:[%s1 + $0x230] sm:$0xff]
  %v2537 = vld [vmem:[%s1 + $0x238] sm:$0xff]
  %v2538 = vld [vmem:[%s1 + $0x240] sm:$0xff]
  %v2539 = vld [vmem:[%s1 + $0x248] sm:$0xff]
  %v2540 = vld [vmem:[%s1 + $0x250] sm:$0xff]
  %v2541 = vld [vmem:[%s1 + $0x258] sm:$0xff]
  %v2542 = vld [vmem:[%s1 + $0x260] sm:$0xff]
  %v2543 = vld [vmem:[%s1 + $0x268] sm:$0xff]
  %v2544 = vld [vmem:[%s1 + $0x270] sm:$0xff]
  %v2545 = vld [vmem:[%s1 + $0x278] sm:$0xff]
  %v2546 = vld [vmem:[%s1 + $0x280] sm:$0xff]
  %v2547 = vld [vmem:[%s1 + $0x288] sm:$0xff]
  %v2548 = vld [vmem:[%s1 + $0x290] sm:$0xff]
  %v2549 = vld [vmem:[%s1 + $0x298] sm:$0xff]
  %v2550 = vld [vmem:[%s1 + $0x2a0] sm:$0xff]
  %v2551 = vld [vmem:[%s1 + $0x2a8] sm:$0xff]
  %v2552 = vld [vmem:[%s1 + $0x2b0] sm:$0xff]
  %v2553 = vld [vmem:[%s1 + $0x2b8] sm:$0xff]
  %v2554 = vld [vmem:[%s1 + $0x2c0] sm:$0xff]
  %v2555 = vld [vmem:[%s1 + $0x2c8] sm:$0xff]
  %v2556 = vld [vmem:[%s1 + $0x2d0] sm:$0xff]
  %v2557 = vld [vmem:[%s1 + $0x2d8] sm:$0xff]
  %v2558 = vld [vmem:[%s1 + $0x2e0] sm:$0xff]
  %v2559 = vld [vmem:[%s1 + $0x2e8] sm:$0xff]
  %v2560 = vld [vmem:[%s1 + $0x2f0] sm:$0xff]
  %v2561 = vld [vmem:[%s1 + $0x2f8] sm:$0xff]
  %v2562 = vld [vmem:[%s1 + $0x300] sm:$0xff]
  %v2563 = vld [vmem:[%s1 + $0x308] sm:$0xff]
  %v2564 = vld [vmem:[%s1 + $0x310] sm:$0xff]
  %v2565 = vld [vmem:[%s1 + $0x318] sm:$0xff]
  %v2566 = vld [vmem:[%s1 + $0x320] sm:$0xff]
  %v2567 = vld [vmem:[%s1 + $0x328] sm:$0xff]
  %v2568 = vld [vmem:[%s1 + $0x330] sm:$0xff]
  %v2569 = vld [vmem:[%s1 + $0x338] sm:$0xff]
  %v2570 = vld [vmem:[%s1 + $0x340] sm:$0xff]
  %v2571 = vld [vmem:[%s1 + $0x348] sm:$0xff]
  %v2572 = vld [vmem:[%s1 + $0x350] sm:$0xff]
  %v2573 = vld [vmem:[%s1 + $0x358] sm:$0xff]
  %v2574 = vld [vmem:[%s1 + $0x360] sm:$0xff]
  %v2575 = vld [vmem:[%s1 + $0x368] sm:$0xff]
  %v2576 = vld [vmem:[%s1 + $0x370] sm:$0xff]
  %v2577 = vld [vmem:[%s1 + $0x378] sm:$0xff]
  %v2578 = vld [vmem:[%s1 + $0x380] sm:$0xff]
  %v2579 = vld [vmem:[%s1 + $0x388] sm:$0xff]
  %v2580 = vld [vmem:[%s1 + $0x390] sm:$0xff]
  %v2581 = vld [vmem:[%s1 + $0x398] sm:$0xff]
  %v2582 = vld [vmem:[%s1 + $0x3a0] sm:$0xff]
  %v2583 = vld [vmem:[%s1 + $0x3a8] sm:$0xff]
  %v2584 = vld [vmem:[%s1 + $0x3b0] sm:$0xff]
  %v2585 = vld [vmem:[%s1 + $0x3b8] sm:$0xff]
  %v2586 = vld [vmem:[%s1 + $0x3c0] sm:$0xff]
  %v2587 = vld [vmem:[%s1 + $0x3c8] sm:$0xff]
  %v2588 = vld [vmem:[%s1 + $0x3d0] sm:$0xff]
  %v2589 = vld [vmem:[%s1 + $0x3d8] sm:$0xff]
  %v2590 = vld [vmem:[%s1 + $0x3e0] sm:$0xff]
  %v2591 = vld [vmem:[%s1 + $0x3e8] sm:$0xff]
  %v2592 = vld [vmem:[%s1 + $0x3f0] sm:$0xff]
  %v2593 = vld [vmem:[%s1 + $0x3f8] sm:$0xff]
  %v2594 = vld [vmem:[%s1 + $0x400] sm:$0xff]
  %v2595 = vld [vmem:[%s1 + $0x408] sm:$0xff]
  %v2596 = vld [vmem:[%s1 + $0x410] sm:$0xff]
  %v2597 = vld [vmem:[%s1 + $0x418] sm:$0xff]
  %v2598 = vld [vmem:[%s1 + $0x420] sm:$0xff]
  %v2599 = vld [vmem:[%s1 + $0x428] sm:$0xff]
  %v2600 = vld [vmem:[%s1 + $0x430] sm:$0xff]
  %v2601 = vld [vmem:[%s1 + $0x438] sm:$0xff]
  %v2602 = vld [vmem:[%s1 + $0x440] sm:$0xff]
  %v2603 = vld [vmem:[%s1 + $0x448] sm:$0xff]
  %v2604 = vld [vmem:[%s1 + $0x450] sm:$0xff]
  %v2605 = vld [vmem:[%s1 + $0x458] sm:$0xff]
  %v2606 = vld [vmem:[%s1 + $0x460] sm:$0xff]
  %v2607 = vld [vmem:[%s1 + $0x468] sm:$0xff]
  %v2608 = vld [vmem:[%s1 + $0x470] sm:$0xff]
  %v2609 = vld [vmem:[%s1 + $0x478] sm:$0xff]
  %v2610 = vld [vmem:[%s2] sm:$0x3]
  %v2612 = vlaneseq
  %v2613 = vshrl.u32 %v2612, 7
  %v2614 = vsub.s32 0, %v2613
  %v2615 = vrot.slane %v2610, %v2614
  %v2616 = vlaneseq
  %v2617 = vshrl.u32 %v2616, 7
  %v2618 = vsub.s32 1, %v2617
  %v2619 = vrot.slane %v2610, %v2618
  %v2766 = vunpack.c.l.b16 %v2466
  %v2767 = vunpack.c.h.b16 %v2466
  %v2768 = vunpack.c.l.b16 %v2467
  %v2769 = vunpack.c.h.b16 %v2467
  %v2770 = vunpack.c.l.b16 %v2468
  %v2771 = vunpack.c.h.b16 %v2468
  %v2772 = vunpack.c.l.b16 %v2469
  %v2773 = vunpack.c.h.b16 %v2469
  %v2774 = vunpack.c.l.b16 %v2470
  %v2775 = vunpack.c.h.b16 %v2470
  %v2776 = vunpack.c.l.b16 %v2471
  %v2777 = vunpack.c.h.b16 %v2471
  %v2778 = vunpack.c.l.b16 %v2472
  %v2779 = vunpack.c.h.b16 %v2472
  %v2780 = vunpack.c.l.b16 %v2473
  %v2781 = vunpack.c.h.b16 %v2473
  %v2782 = vunpack.c.l.b16 %v2474
  %v2783 = vunpack.c.h.b16 %v2474
  %v2784 = vunpack.c.l.b16 %v2475
  %v2785 = vunpack.c.h.b16 %v2475
  %v2786 = vunpack.c.l.b16 %v2476
  %v2787 = vunpack.c.h.b16 %v2476
  %v2788 = vunpack.c.l.b16 %v2477
  %v2789 = vunpack.c.h.b16 %v2477
  %v2790 = vunpack.c.l.b16 %v2478
  %v2791 = vunpack.c.h.b16 %v2478
  %v2792 = vunpack.c.l.b16 %v2479
  %v2793 = vunpack.c.h.b16 %v2479
  %v2794 = vunpack.c.l.b16 %v2480
  %v2795 = vunpack.c.h.b16 %v2480
  %v2796 = vunpack.c.l.b16 %v2481
  %v2797 = vunpack.c.h.b16 %v2481
  %v2798 = vunpack.c.l.b16 %v2482
  %v2799 = vunpack.c.h.b16 %v2482
  %v2800 = vunpack.c.l.b16 %v2483
  %v2801 = vunpack.c.h.b16 %v2483
  %v2802 = vunpack.c.l.b16 %v2484
  %v2803 = vunpack.c.h.b16 %v2484
  %v2804 = vunpack.c.l.b16 %v2485
  %v2805 = vunpack.c.h.b16 %v2485
  %v2806 = vunpack.c.l.b16 %v2486
  %v2807 = vunpack.c.h.b16 %v2486
  %v2808 = vunpack.c.l.b16 %v2487
  %v2809 = vunpack.c.h.b16 %v2487
  %v2810 = vunpack.c.l.b16 %v2488
  %v2811 = vunpack.c.h.b16 %v2488
  %v2812 = vunpack.c.l.b16 %v2489
  %v2813 = vunpack.c.h.b16 %v2489
  %v2814 = vunpack.c.l.b16 %v2490
  %v2815 = vunpack.c.h.b16 %v2490
  %v2816 = vunpack.c.l.b16 %v2491
  %v2817 = vunpack.c.h.b16 %v2491
  %v2818 = vunpack.c.l.b16 %v2492
  %v2819 = vunpack.c.h.b16 %v2492
  %v2820 = vunpack.c.l.b16 %v2493
  %v2821 = vunpack.c.h.b16 %v2493
  %v2822 = vunpack.c.l.b16 %v2494
  %v2823 = vunpack.c.h.b16 %v2494
  %v2824 = vunpack.c.l.b16 %v2495
  %v2825 = vunpack.c.h.b16 %v2495
  %v2826 = vunpack.c.l.b16 %v2496
  %v2827 = vunpack.c.h.b16 %v2496
  %v2828 = vunpack.c.l.b16 %v2497
  %v2829 = vunpack.c.h.b16 %v2497
  %v2830 = vunpack.c.l.b16 %v2498
  %v2831 = vunpack.c.h.b16 %v2498
  %v2832 = vunpack.c.l.b16 %v2499
  %v2833 = vunpack.c.h.b16 %v2499
  %v2834 = vunpack.c.l.b16 %v2500
  %v2835 = vunpack.c.h.b16 %v2500
  %v2836 = vunpack.c.l.b16 %v2501
  %v2837 = vunpack.c.h.b16 %v2501
  %v2838 = vunpack.c.l.b16 %v2502
  %v2839 = vunpack.c.h.b16 %v2502
  %v2840 = vunpack.c.l.b16 %v2503
  %v2841 = vunpack.c.h.b16 %v2503
  %v2842 = vunpack.c.l.b16 %v2504
  %v2843 = vunpack.c.h.b16 %v2504
  %v2844 = vunpack.c.l.b16 %v2505
  %v2845 = vunpack.c.h.b16 %v2505
  %v2846 = vunpack.c.l.b16 %v2506
  %v2847 = vunpack.c.h.b16 %v2506
  %v2848 = vunpack.c.l.b16 %v2507
  %v2849 = vunpack.c.h.b16 %v2507
  %v2850 = vunpack.c.l.b16 %v2508
  %v2851 = vunpack.c.h.b16 %v2508
  %v2852 = vunpack.c.l.b16 %v2509
  %v2853 = vunpack.c.h.b16 %v2509
  %v2854 = vunpack.c.l.b16 %v2510
  %v2855 = vunpack.c.h.b16 %v2510
  %v2856 = vunpack.c.l.b16 %v2511
  %v2857 = vunpack.c.h.b16 %v2511
  %v2858 = vunpack.c.l.b16 %v2512
  %v2859 = vunpack.c.h.b16 %v2512
  %v2860 = vunpack.c.l.b16 %v2513
  %v2861 = vunpack.c.h.b16 %v2513
  %v2862 = vunpack.c.l.b16 %v2514
  %v2863 = vunpack.c.h.b16 %v2514
  %v2864 = vunpack.c.l.b16 %v2515
  %v2865 = vunpack.c.h.b16 %v2515
  %v2866 = vunpack.c.l.b16 %v2516
  %v2867 = vunpack.c.h.b16 %v2516
  %v2868 = vunpack.c.l.b16 %v2517
  %v2869 = vunpack.c.h.b16 %v2517
  %v2870 = vunpack.c.l.b16 %v2518
  %v2871 = vunpack.c.h.b16 %v2518
  %v2872 = vunpack.c.l.b16 %v2519
  %v2873 = vunpack.c.h.b16 %v2519
  %v2874 = vunpack.c.l.b16 %v2520
  %v2875 = vunpack.c.h.b16 %v2520
  %v2876 = vunpack.c.l.b16 %v2521
  %v2877 = vunpack.c.h.b16 %v2521
  %v2878 = vunpack.c.l.b16 %v2522
  %v2879 = vunpack.c.h.b16 %v2522
  %v2880 = vunpack.c.l.b16 %v2523
  %v2881 = vunpack.c.h.b16 %v2523
  %v2882 = vunpack.c.l.b16 %v2524
  %v2883 = vunpack.c.h.b16 %v2524
  %v2884 = vunpack.c.l.b16 %v2525
  %v2885 = vunpack.c.h.b16 %v2525
  %v2886 = vunpack.c.l.b16 %v2526
  %v2887 = vunpack.c.h.b16 %v2526
  %v2888 = vunpack.c.l.b16 %v2527
  %v2889 = vunpack.c.h.b16 %v2527
  %v2890 = vunpack.c.l.b16 %v2528
  %v2891 = vunpack.c.h.b16 %v2528
  %v2892 = vunpack.c.l.b16 %v2529
  %v2893 = vunpack.c.h.b16 %v2529
  %v2894 = vunpack.c.l.b16 %v2530
  %v2895 = vunpack.c.h.b16 %v2530
  %v2896 = vunpack.c.l.b16 %v2531
  %v2897 = vunpack.c.h.b16 %v2531
  %v2898 = vunpack.c.l.b16 %v2532
  %v2899 = vunpack.c.h.b16 %v2532
  %v2900 = vunpack.c.l.b16 %v2533
  %v2901 = vunpack.c.h.b16 %v2533
  %v2902 = vunpack.c.l.b16 %v2534
  %v2903 = vunpack.c.h.b16 %v2534
  %v2904 = vunpack.c.l.b16 %v2535
  %v2905 = vunpack.c.h.b16 %v2535
  %v2906 = vunpack.c.l.b16 %v2536
  %v2907 = vunpack.c.h.b16 %v2536
  %v2908 = vunpack.c.l.b16 %v2537
  %v2909 = vunpack.c.h.b16 %v2537
  %v2910 = vunpack.c.l.b16 %v2538
  %v2911 = vunpack.c.h.b16 %v2538
  %v2912 = vunpack.c.l.b16 %v2539
  %v2913 = vunpack.c.h.b16 %v2539
  %v2914 = vunpack.c.l.b16 %v2540
  %v2915 = vunpack.c.h.b16 %v2540
  %v2916 = vunpack.c.l.b16 %v2541
  %v2917 = vunpack.c.h.b16 %v2541
  %v2918 = vunpack.c.l.b16 %v2542
  %v2919 = vunpack.c.h.b16 %v2542
  %v2920 = vunpack.c.l.b16 %v2543
  %v2921 = vunpack.c.h.b16 %v2543
  %v2922 = vunpack.c.l.b16 %v2544
  %v2923 = vunpack.c.h.b16 %v2544
  %v2924 = vunpack.c.l.b16 %v2545
  %v2925 = vunpack.c.h.b16 %v2545
  %v2926 = vunpack.c.l.b16 %v2546
  %v2927 = vunpack.c.h.b16 %v2546
  %v2928 = vunpack.c.l.b16 %v2547
  %v2929 = vunpack.c.h.b16 %v2547
  %v2930 = vunpack.c.l.b16 %v2548
  %v2931 = vunpack.c.h.b16 %v2548
  %v2932 = vunpack.c.l.b16 %v2549
  %v2933 = vunpack.c.h.b16 %v2549
  %v2934 = vunpack.c.l.b16 %v2550
  %v2935 = vunpack.c.h.b16 %v2550
  %v2936 = vunpack.c.l.b16 %v2551
  %v2937 = vunpack.c.h.b16 %v2551
  %v2938 = vunpack.c.l.b16 %v2552
  %v2939 = vunpack.c.h.b16 %v2552
  %v2940 = vunpack.c.l.b16 %v2553
  %v2941 = vunpack.c.h.b16 %v2553
  %v2942 = vunpack.c.l.b16 %v2554
  %v2943 = vunpack.c.h.b16 %v2554
  %v2944 = vunpack.c.l.b16 %v2555
  %v2945 = vunpack.c.h.b16 %v2555
  %v2946 = vunpack.c.l.b16 %v2556
  %v2947 = vunpack.c.h.b16 %v2556
  %v2948 = vunpack.c.l.b16 %v2557
  %v2949 = vunpack.c.h.b16 %v2557
  %v2950 = vunpack.c.l.b16 %v2558
  %v2951 = vunpack.c.h.b16 %v2558
  %v2952 = vunpack.c.l.b16 %v2559
  %v2953 = vunpack.c.h.b16 %v2559
  %v2954 = vunpack.c.l.b16 %v2560
  %v2955 = vunpack.c.h.b16 %v2560
  %v2956 = vunpack.c.l.b16 %v2561
  %v2957 = vunpack.c.h.b16 %v2561
  %v2958 = vunpack.c.l.b16 %v2562
  %v2959 = vunpack.c.h.b16 %v2562
  %v2960 = vunpack.c.l.b16 %v2563
  %v2961 = vunpack.c.h.b16 %v2563
  %v2962 = vunpack.c.l.b16 %v2564
  %v2963 = vunpack.c.h.b16 %v2564
  %v2964 = vunpack.c.l.b16 %v2565
  %v2965 = vunpack.c.h.b16 %v2565
  %v2966 = vunpack.c.l.b16 %v2566
  %v2967 = vunpack.c.h.b16 %v2566
  %v2968 = vunpack.c.l.b16 %v2567
  %v2969 = vunpack.c.h.b16 %v2567
  %v2970 = vunpack.c.l.b16 %v2568
  %v2971 = vunpack.c.h.b16 %v2568
  %v2972 = vunpack.c.l.b16 %v2569
  %v2973 = vunpack.c.h.b16 %v2569
  %v2974 = vunpack.c.l.b16 %v2570
  %v2975 = vunpack.c.h.b16 %v2570
  %v2976 = vunpack.c.l.b16 %v2571
  %v2977 = vunpack.c.h.b16 %v2571
  %v2978 = vunpack.c.l.b16 %v2572
  %v2979 = vunpack.c.h.b16 %v2572
  %v2980 = vunpack.c.l.b16 %v2573
  %v2981 = vunpack.c.h.b16 %v2573
  %v2982 = vunpack.c.l.b16 %v2574
  %v2983 = vunpack.c.h.b16 %v2574
  %v2984 = vunpack.c.l.b16 %v2575
  %v2985 = vunpack.c.h.b16 %v2575
  %v2986 = vunpack.c.l.b16 %v2576
  %v2987 = vunpack.c.h.b16 %v2576
  %v2988 = vunpack.c.l.b16 %v2577
  %v2989 = vunpack.c.h.b16 %v2577
  %v2990 = vunpack.c.l.b16 %v2578
  %v2991 = vunpack.c.h.b16 %v2578
  %v2992 = vunpack.c.l.b16 %v2579
  %v2993 = vunpack.c.h.b16 %v2579
  %v2994 = vunpack.c.l.b16 %v2580
  %v2995 = vunpack.c.h.b16 %v2580
  %v2996 = vunpack.c.l.b16 %v2581
  %v2997 = vunpack.c.h.b16 %v2581
  %v2998 = vunpack.c.l.b16 %v2582
  %v2999 = vunpack.c.h.b16 %v2582
  %v3000 = vunpack.c.l.b16 %v2583
  %v3001 = vunpack.c.h.b16 %v2583
  %v3002 = vunpack.c.l.b16 %v2584
  %v3003 = vunpack.c.h.b16 %v2584
  %v3004 = vunpack.c.l.b16 %v2585
  %v3005 = vunpack.c.h.b16 %v2585
  %v3006 = vunpack.c.l.b16 %v2586
  %v3007 = vunpack.c.h.b16 %v2586
  %v3008 = vunpack.c.l.b16 %v2587
  %v3009 = vunpack.c.h.b16 %v2587
  %v3010 = vunpack.c.l.b16 %v2588
  %v3011 = vunpack.c.h.b16 %v2588
  %v3012 = vunpack.c.l.b16 %v2589
  %v3013 = vunpack.c.h.b16 %v2589
  %v3014 = vunpack.c.l.b16 %v2590
  %v3015 = vunpack.c.h.b16 %v2590
  %v3016 = vunpack.c.l.b16 %v2591
  %v3017 = vunpack.c.h.b16 %v2591
  %v3018 = vunpack.c.l.b16 %v2592
  %v3019 = vunpack.c.h.b16 %v2592
  %v3020 = vunpack.c.l.b16 %v2593
  %v3021 = vunpack.c.h.b16 %v2593
  %v3022 = vunpack.c.l.b16 %v2594
  %v3023 = vunpack.c.h.b16 %v2594
  %v3024 = vunpack.c.l.b16 %v2595
  %v3025 = vunpack.c.h.b16 %v2595
  %v3026 = vunpack.c.l.b16 %v2596
  %v3027 = vunpack.c.h.b16 %v2596
  %v3028 = vunpack.c.l.b16 %v2597
  %v3029 = vunpack.c.h.b16 %v2597
  %v3030 = vunpack.c.l.b16 %v2598
  %v3031 = vunpack.c.h.b16 %v2598
  %v3032 = vunpack.c.l.b16 %v2599
  %v3033 = vunpack.c.h.b16 %v2599
  %v3034 = vunpack.c.l.b16 %v2600
  %v3035 = vunpack.c.h.b16 %v2600
  %v3036 = vunpack.c.l.b16 %v2601
  %v3037 = vunpack.c.h.b16 %v2601
  %v3038 = vunpack.c.l.b16 %v2602
  %v3039 = vunpack.c.h.b16 %v2602
  %v3040 = vunpack.c.l.b16 %v2603
  %v3041 = vunpack.c.h.b16 %v2603
  %v3042 = vunpack.c.l.b16 %v2604
  %v3043 = vunpack.c.h.b16 %v2604
  %v3044 = vunpack.c.l.b16 %v2605
  %v3045 = vunpack.c.h.b16 %v2605
  %v3046 = vunpack.c.l.b16 %v2606
  %v3047 = vunpack.c.h.b16 %v2606
  %v3048 = vunpack.c.l.b16 %v2607
  %v3049 = vunpack.c.h.b16 %v2607
  %v3050 = vunpack.c.l.b16 %v2608
  %v3051 = vunpack.c.h.b16 %v2608
  %v3052 = vunpack.c.l.b16 %v2609
  %v3053 = vunpack.c.h.b16 %v2609
  %v3054 = vpack.c.b16 %v2768, %v2766
  %v3055 = vpack.c.b16 %v2769, %v2767
  %v3056 = vpack.c.b16 %v2772, %v2770
  %v3057 = vpack.c.b16 %v2773, %v2771
  %v3058 = vpack.c.b16 %v2776, %v2774
  %v3059 = vpack.c.b16 %v2777, %v2775
  %v3060 = vpack.c.b16 %v2780, %v2778
  %v3061 = vpack.c.b16 %v2781, %v2779
  %v3062 = vpack.c.b16 %v2784, %v2782
  %v3063 = vpack.c.b16 %v2785, %v2783
  %v3064 = vpack.c.b16 %v2788, %v2786
  %v3065 = vpack.c.b16 %v2789, %v2787
  %v3066 = vpack.c.b16 %v2792, %v2790
  %v3067 = vpack.c.b16 %v2793, %v2791
  %v3068 = vpack.c.b16 %v2796, %v2794
  %v3069 = vpack.c.b16 %v2797, %v2795
  %v3070 = vpack.c.b16 %v2800, %v2798
  %v3071 = vpack.c.b16 %v2801, %v2799
  %v3072 = vpack.c.b16 %v2804, %v2802
  %v3073 = vpack.c.b16 %v2805, %v2803
  %v3074 = vpack.c.b16 %v2808, %v2806
  %v3075 = vpack.c.b16 %v2809, %v2807
  %v3076 = vpack.c.b16 %v2812, %v2810
  %v3077 = vpack.c.b16 %v2813, %v2811
  %v3078 = vpack.c.b16 %v2816, %v2814
  %v3079 = vpack.c.b16 %v2817, %v2815
  %v3080 = vpack.c.b16 %v2820, %v2818
  %v3081 = vpack.c.b16 %v2821, %v2819
  %v3082 = vpack.c.b16 %v2824, %v2822
  %v3083 = vpack.c.b16 %v2825, %v2823
  %v3084 = vpack.c.b16 %v2828, %v2826
  %v3085 = vpack.c.b16 %v2829, %v2827
  %v3086 = vpack.c.b16 %v2832, %v2830
  %v3087 = vpack.c.b16 %v2833, %v2831
  %v3088 = vpack.c.b16 %v2836, %v2834
  %v3089 = vpack.c.b16 %v2837, %v2835
  %v3090 = vpack.c.b16 %v2840, %v2838
  %v3091 = vpack.c.b16 %v2841, %v2839
  %v3092 = vpack.c.b16 %v2844, %v2842
  %v3093 = vpack.c.b16 %v2845, %v2843
  %v3094 = vpack.c.b16 %v2848, %v2846
  %v3095 = vpack.c.b16 %v2849, %v2847
  %v3096 = vpack.c.b16 %v2852, %v2850
  %v3097 = vpack.c.b16 %v2853, %v2851
  %v3098 = vpack.c.b16 %v2856, %v2854
  %v3099 = vpack.c.b16 %v2857, %v2855
  %v3100 = vpack.c.b16 %v2860, %v2858
  %v3101 = vpack.c.b16 %v2861, %v2859
  %v3102 = vpack.c.b16 %v2864, %v2862
  %v3103 = vpack.c.b16 %v2865, %v2863
  %v3104 = vpack.c.b16 %v2868, %v2866
  %v3105 = vpack.c.b16 %v2869, %v2867
  %v3106 = vpack.c.b16 %v2872, %v2870
  %v3107 = vpack.c.b16 %v2873, %v2871
  %v3108 = vpack.c.b16 %v2876, %v2874
  %v3109 = vpack.c.b16 %v2877, %v2875
  %v3110 = vpack.c.b16 %v2880, %v2878
  %v3111 = vpack.c.b16 %v2881, %v2879
  %v3112 = vpack.c.b16 %v2884, %v2882
  %v3113 = vpack.c.b16 %v2885, %v2883
  %v3114 = vpack.c.b16 %v2888, %v2886
  %v3115 = vpack.c.b16 %v2889, %v2887
  %v3116 = vpack.c.b16 %v2892, %v2890
  %v3117 = vpack.c.b16 %v2893, %v2891
  %v3118 = vpack.c.b16 %v2896, %v2894
  %v3119 = vpack.c.b16 %v2897, %v2895
  %v3120 = vpack.c.b16 %v2900, %v2898
  %v3121 = vpack.c.b16 %v2901, %v2899
  %v3122 = vpack.c.b16 %v2904, %v2902
  %v3123 = vpack.c.b16 %v2905, %v2903
  %v3124 = vpack.c.b16 %v2908, %v2906
  %v3125 = vpack.c.b16 %v2909, %v2907
  %v3126 = vpack.c.b16 %v2912, %v2910
  %v3127 = vpack.c.b16 %v2913, %v2911
  %v3128 = vpack.c.b16 %v2916, %v2914
  %v3129 = vpack.c.b16 %v2917, %v2915
  %v3130 = vpack.c.b16 %v2920, %v2918
  %v3131 = vpack.c.b16 %v2921, %v2919
  %v3132 = vpack.c.b16 %v2924, %v2922
  %v3133 = vpack.c.b16 %v2925, %v2923
  %v3134 = vpack.c.b16 %v2928, %v2926
  %v3135 = vpack.c.b16 %v2929, %v2927
  %v3136 = vpack.c.b16 %v2932, %v2930
  %v3137 = vpack.c.b16 %v2933, %v2931
  %v3138 = vpack.c.b16 %v2936, %v2934
  %v3139 = vpack.c.b16 %v2937, %v2935
  %v3140 = vpack.c.b16 %v2940, %v2938
  %v3141 = vpack.c.b16 %v2941, %v2939
  %v3142 = vpack.c.b16 %v2944, %v2942
  %v3143 = vpack.c.b16 %v2945, %v2943
  %v3144 = vpack.c.b16 %v2948, %v2946
  %v3145 = vpack.c.b16 %v2949, %v2947
  %v3146 = vpack.c.b16 %v2952, %v2950
  %v3147 = vpack.c.b16 %v2953, %v2951
  %v3148 = vpack.c.b16 %v2956, %v2954
  %v3149 = vpack.c.b16 %v2957, %v2955
  %v3150 = vpack.c.b16 %v2960, %v2958
  %v3151 = vpack.c.b16 %v2961, %v2959
  %v3152 = vpack.c.b16 %v2964, %v2962
  %v3153 = vpack.c.b16 %v2965, %v2963
  %v3154 = vpack.c.b16 %v2968, %v2966
  %v3155 = vpack.c.b16 %v2969, %v2967
  %v3156 = vpack.c.b16 %v2972, %v2970
  %v3157 = vpack.c.b16 %v2973, %v2971
  %v3158 = vpack.c.b16 %v2976, %v2974
  %v3159 = vpack.c.b16 %v2977, %v2975
  %v3160 = vpack.c.b16 %v2980, %v2978
  %v3161 = vpack.c.b16 %v2981, %v2979
  %v3162 = vpack.c.b16 %v2984, %v2982
  %v3163 = vpack.c.b16 %v2985, %v2983
  %v3164 = vpack.c.b16 %v2988, %v2986
  %v3165 = vpack.c.b16 %v2989, %v2987
  %v3166 = vpack.c.b16 %v2992, %v2990
  %v3167 = vpack.c.b16 %v2993, %v2991
  %v3168 = vpack.c.b16 %v2996, %v2994
  %v3169 = vpack.c.b16 %v2997, %v2995
  %v3170 = vpack.c.b16 %v3000, %v2998
  %v3171 = vpack.c.b16 %v3001, %v2999
  %v3172 = vpack.c.b16 %v3004, %v3002
  %v3173 = vpack.c.b16 %v3005, %v3003
  %v3174 = vpack.c.b16 %v3008, %v3006
  %v3175 = vpack.c.b16 %v3009, %v3007
  %v3176 = vpack.c.b16 %v3012, %v3010
  %v3177 = vpack.c.b16 %v3013, %v3011
  %v3178 = vpack.c.b16 %v3016, %v3014
  %v3179 = vpack.c.b16 %v3017, %v3015
  %v3180 = vpack.c.b16 %v3020, %v3018
  %v3181 = vpack.c.b16 %v3021, %v3019
  %v3182 = vpack.c.b16 %v3024, %v3022
  %v3183 = vpack.c.b16 %v3025, %v3023
  %v3184 = vpack.c.b16 %v3028, %v3026
  %v3185 = vpack.c.b16 %v3029, %v3027
  %v3186 = vpack.c.b16 %v3032, %v3030
  %v3187 = vpack.c.b16 %v3033, %v3031
  %v3188 = vpack.c.b16 %v3036, %v3034
  %v3189 = vpack.c.b16 %v3037, %v3035
  %v3190 = vpack.c.b16 %v3040, %v3038
  %v3191 = vpack.c.b16 %v3041, %v3039
  %v3192 = vpack.c.b16 %v3044, %v3042
  %v3193 = vpack.c.b16 %v3045, %v3043
  %v3194 = vpack.c.b16 %v3048, %v3046
  %v3195 = vpack.c.b16 %v3049, %v3047
  %v3196 = vpack.c.b16 %v3052, %v3050
  %v3197 = vpack.c.b16 %v3053, %v3051
  %3342 = vmatprep.subr.bf16.mxu0 %v3069
  %3343 = vmatpush1.bf16.msra.mxu0 %v3068
  %3344 = vmatprep.subr.bf16.mxu0 %v3067
  %3345 = vmatpush1.bf16.msra.mxu0 %v3066
  %3346 = vmatprep.subr.bf16.mxu0 %v3065
  %3347 = vmatpush1.bf16.msra.mxu0 %v3064
  %3348 = vmatprep.subr.bf16.mxu0 %v3063
  %3349 = vmatpush1.bf16.msra.mxu0 %v3062
  %3350 = vmatprep.subr.bf16.mxu0 %v3061
  %3351 = vmatpush1.bf16.msra.mxu0 %v3060
  %3352 = vmatprep.subr.bf16.mxu0 %v3059
  %3353 = vmatpush1.bf16.msra.mxu0 %v3058
  %3354 = vmatprep.subr.bf16.mxu0 %v3057
  %3355 = vmatpush1.bf16.msra.mxu0 %v3056
  %3356 = vmatprep.subr.bf16.mxu0 %v3055
  %3357 = vmatpush1.bf16.msra.mxu0 %v3054
  %3358 = vmatprep.subr.bf16.mxu0 %v3085
  %3359 = vmatpush2.bf16.msra.mxu0 %v3084
  %3360 = vmatprep.subr.bf16.mxu0 %v3083
  %3361 = vmatpush2.bf16.msra.mxu0 %v3082
  %3362 = vmatprep.subr.bf16.mxu0 %v3081
  %3363 = vmatpush2.bf16.msra.mxu0 %v3080
  %3364 = vmatprep.subr.bf16.mxu0 %v3079
  %3365 = vmatpush2.bf16.msra.mxu0 %v3078
  %3366 = vmatprep.subr.bf16.mxu0 %v3077
  %3367 = vmatpush2.bf16.msra.mxu0 %v3076
  %3368 = vmatprep.subr.bf16.mxu0 %v3075
  %3369 = vmatpush2.bf16.msra.mxu0 %v3074
  %3370 = vmatprep.subr.bf16.mxu0 %v3073
  %3371 = vmatpush2.bf16.msra.mxu0 %v3072
  %3372 = vmatprep.subr.bf16.mxu0 %v3071
  %3373 = vmatpush2.bf16.msra.mxu0 %v3070
  %3374 = vmatprep.mubr.bf16.mxu0 %v2431
  %3375 = vmatmul.mubr.bf16.gmra.mxu0 %v2430
  %v3376 = vpop.f32.mrf.mxu0
  %v3377 = vadd.f32 %v2615, %v3376
  %v3378 = vpop.f32.mrf.mxu0
  %v3379 = vadd.f32 %v2619, %v3378
  %v3380 = vpop.f32.mrf.mxu0
  %v3381 = vadd.f32 %v2615, %v3380
  %v3382 = vpop.f32.mrf.mxu0
  %v3383 = vadd.f32 %v2619, %v3382
  %3384 = vmatprep.mubr.bf16.mxu0 %v2440
  %3385 = vmatmul.mubr.bf16.gmra.mxu0 %v2439
  %v3386 = vpop.f32.mrf.mxu0
  %v3387 = vadd.f32 %v2615, %v3386
  %v3388 = vpop.f32.mrf.mxu0
  %v3389 = vadd.f32 %v2619, %v3388
  %v3390 = vpop.f32.mrf.mxu0
  %v3391 = vadd.f32 %v2615, %v3390
  %v3392 = vpop.f32.mrf.mxu0
  %v3393 = vadd.f32 %v2619, %v3392
  %3394 = vmatprep.mubr.bf16.mxu0 %v2449
  %3395 = vmatmul.mubr.bf16.gmra.mxu0 %v2448
  %v3396 = vpop.f32.mrf.mxu0
  %v3397 = vadd.f32 %v2615, %v3396
  %v3398 = vpop.f32.mrf.mxu0
  %v3399 = vadd.f32 %v2619, %v3398
  %v3400 = vpop.f32.mrf.mxu0
  %v3401 = vadd.f32 %v2615, %v3400
  %v3402 = vpop.f32.mrf.mxu0
  %v3403 = vadd.f32 %v2619, %v3402
  %3404 = vmatprep.mubr.bf16.mxu0 %v2458
  %3405 = vmatmul.mubr.bf16.gmra.mxu0 %v2457
  %v3406 = vpop.f32.mrf.mxu0
  %v3407 = vadd.f32 %v2615, %v3406
  %v3408 = vpop.f32.mrf.mxu0
  %v3409 = vadd.f32 %v2619, %v3408
  %v3410 = vpop.f32.mrf.mxu0
  %v3411 = vadd.f32 %v2615, %v3410
  %v3412 = vpop.f32.mrf.mxu0
  %v3413 = vadd.f32 %v2619, %v3412
  %3414 = vdwg.mxu0
  %3415 = vmatprep.subr.bf16.mxu0 %v3101
  %3416 = vmatpush1.bf16.msra.mxu0 %v3100
  %3417 = vmatprep.subr.bf16.mxu0 %v3099
  %3418 = vmatpush1.bf16.msra.mxu0 %v3098
  %3419 = vmatprep.subr.bf16.mxu0 %v3097
  %3420 = vmatpush1.bf16.msra.mxu0 %v3096
  %3421 = vmatprep.subr.bf16.mxu0 %v3095
  %3422 = vmatpush1.bf16.msra.mxu0 %v3094
  %3423 = vmatprep.subr.bf16.mxu0 %v3093
  %3424 = vmatpush1.bf16.msra.mxu0 %v3092
  %3425 = vmatprep.subr.bf16.mxu0 %v3091
  %3426 = vmatpush1.bf16.msra.mxu0 %v3090
  %3427 = vmatprep.subr.bf16.mxu0 %v3089
  %3428 = vmatpush1.bf16.msra.mxu0 %v3088
  %3429 = vmatprep.subr.bf16.mxu0 %v3087
  %3430 = vmatpush1.bf16.msra.mxu0 %v3086
  %3431 = vmatprep.subr.bf16.mxu0 %v3117
  %3432 = vmatpush2.bf16.msra.mxu0 %v3116
  %3433 = vmatprep.subr.bf16.mxu0 %v3115
  %3434 = vmatpush2.bf16.msra.mxu0 %v3114
  %3435 = vmatprep.subr.bf16.mxu0 %v3113
  %3436 = vmatpush2.bf16.msra.mxu0 %v3112
  %3437 = vmatprep.subr.bf16.mxu0 %v3111
  %3438 = vmatpush2.bf16.msra.mxu0 %v3110
  %3439 = vmatprep.subr.bf16.mxu0 %v3109
  %3440 = vmatpush2.bf16.msra.mxu0 %v3108
  %3441 = vmatprep.subr.bf16.mxu0 %v3107
  %3442 = vmatpush2.bf16.msra.mxu0 %v3106
  %3443 = vmatprep.subr.bf16.mxu0 %v3105
  %3444 = vmatpush2.bf16.msra.mxu0 %v3104
  %3445 = vmatprep.subr.bf16.mxu0 %v3103
  %3446 = vmatpush2.bf16.msra.mxu0 %v3102
  %3447 = vmatprep.mubr.bf16.mxu0 %v2433
  %3448 = vmatmul.mubr.bf16.gmra.mxu0 %v2432
  %v3449 = vpop.f32.mrf.mxu0
  %v3450 = vadd.f32 %v3377, %v3449
  %v3451 = vpop.f32.mrf.mxu0
  %v3452 = vadd.f32 %v3379, %v3451
  %v3453 = vpop.f32.mrf.mxu0
  %v3454 = vadd.f32 %v3381, %v3453
  %v3455 = vpop.f32.mrf.mxu0
  %v3456 = vadd.f32 %v3383, %v3455
  %3457 = vmatprep.mubr.bf16.mxu0 %v2442
  %3458 = vmatmul.mubr.bf16.gmra.mxu0 %v2441
  %v3459 = vpop.f32.mrf.mxu0
  %v3460 = vadd.f32 %v3387, %v3459
  %v3461 = vpop.f32.mrf.mxu0
  %v3462 = vadd.f32 %v3389, %v3461
  %v3463 = vpop.f32.mrf.mxu0
  %v3464 = vadd.f32 %v3391, %v3463
  %v3465 = vpop.f32.mrf.mxu0
  %v3466 = vadd.f32 %v3393, %v3465
  %3467 = vmatprep.mubr.bf16.mxu0 %v2451
  %3468 = vmatmul.mubr.bf16.gmra.mxu0 %v2450
  %v3469 = vpop.f32.mrf.mxu0
  %v3470 = vadd.f32 %v3397, %v3469
  %v3471 = vpop.f32.mrf.mxu0
  %v3472 = vadd.f32 %v3399, %v3471
  %v3473 = vpop.f32.mrf.mxu0
  %v3474 = vadd.f32 %v3401, %v3473
  %v3475 = vpop.f32.mrf.mxu0
  %v3476 = vadd.f32 %v3403, %v3475
  %3477 = vmatprep.mubr.bf16.mxu0 %v2460
  %3478 = vmatmul.mubr.bf16.gmra.mxu0 %v2459
  %v3479 = vpop.f32.mrf.mxu0
  %v3480 = vadd.f32 %v3407, %v3479
  %v3481 = vpop.f32.mrf.mxu0
  %v3482 = vadd.f32 %v3409, %v3481
  %v3483 = vpop.f32.mrf.mxu0
  %v3484 = vadd.f32 %v3411, %v3483
  %v3485 = vpop.f32.mrf.mxu0
  %v3486 = vadd.f32 %v3413, %v3485
  %3487 = vdwg.mxu0
  %3488 = vmatprep.subr.bf16.mxu0 %v3133
  %3489 = vmatpush1.bf16.msra.mxu0 %v3132
  %3490 = vmatprep.subr.bf16.mxu0 %v3131
  %3491 = vmatpush1.bf16.msra.mxu0 %v3130
  %3492 = vmatprep.subr.bf16.mxu0 %v3129
  %3493 = vmatpush1.bf16.msra.mxu0 %v3128
  %3494 = vmatprep.subr.bf16.mxu0 %v3127
  %3495 = vmatpush1.bf16.msra.mxu0 %v3126
  %3496 = vmatprep.subr.bf16.mxu0 %v3125
  %3497 = vmatpush1.bf16.msra.mxu0 %v3124
  %3498 = vmatprep.subr.bf16.mxu0 %v3123
  %3499 = vmatpush1.bf16.msra.mxu0 %v3122
  %3500 = vmatprep.subr.bf16.mxu0 %v3121
  %3501 = vmatpush1.bf16.msra.mxu0 %v3120
  %3502 = vmatprep.subr.bf16.mxu0 %v3119
  %3503 = vmatpush1.bf16.msra.mxu0 %v3118
  %3504 = vmatprep.subr.bf16.mxu0 %v3149
  %3505 = vmatpush2.bf16.msra.mxu0 %v3148
  %3506 = vmatprep.subr.bf16.mxu0 %v3147
  %3507 = vmatpush2.bf16.msra.mxu0 %v3146
  %3508 = vmatprep.subr.bf16.mxu0 %v3145
  %3509 = vmatpush2.bf16.msra.mxu0 %v3144
  %3510 = vmatprep.subr.bf16.mxu0 %v3143
  %3511 = vmatpush2.bf16.msra.mxu0 %v3142
  %3512 = vmatprep.subr.bf16.mxu0 %v3141
  %3513 = vmatpush2.bf16.msra.mxu0 %v3140
  %3514 = vmatprep.subr.bf16.mxu0 %v3139
  %3515 = vmatpush2.bf16.msra.mxu0 %v3138
  %3516 = vmatprep.subr.bf16.mxu0 %v3137
  %3517 = vmatpush2.bf16.msra.mxu0 %v3136
  %3518 = vmatprep.subr.bf16.mxu0 %v3135
  %3519 = vmatpush2.bf16.msra.mxu0 %v3134
  %3520 = vmatprep.mubr.bf16.mxu0 %v2435
  %3521 = vmatmul.mubr.bf16.gmra.mxu0 %v2434
  %v3522 = vpop.f32.mrf.mxu0
  %v3523 = vadd.f32 %v3450, %v3522
  %v3524 = vpop.f32.mrf.mxu0
  %v3525 = vadd.f32 %v3452, %v3524
  %v3526 = vpop.f32.mrf.mxu0
  %v3527 = vadd.f32 %v3454, %v3526
  %v3528 = vpop.f32.mrf.mxu0
  %v3529 = vadd.f32 %v3456, %v3528
  %3530 = vmatprep.mubr.bf16.mxu0 %v2444
  %3531 = vmatmul.mubr.bf16.gmra.mxu0 %v2443
  %v3532 = vpop.f32.mrf.mxu0
  %v3533 = vadd.f32 %v3460, %v3532
  %v3534 = vpop.f32.mrf.mxu0
  %v3535 = vadd.f32 %v3462, %v3534
  %v3536 = vpop.f32.mrf.mxu0
  %v3537 = vadd.f32 %v3464, %v3536
  %v3538 = vpop.f32.mrf.mxu0
  %v3539 = vadd.f32 %v3466, %v3538
  %3540 = vmatprep.mubr.bf16.mxu0 %v2453
  %3541 = vmatmul.mubr.bf16.gmra.mxu0 %v2452
  %v3542 = vpop.f32.mrf.mxu0
  %v3543 = vadd.f32 %v3470, %v3542
  %v3544 = vpop.f32.mrf.mxu0
  %v3545 = vadd.f32 %v3472, %v3544
  %v3546 = vpop.f32.mrf.mxu0
  %v3547 = vadd.f32 %v3474, %v3546
  %v3548 = vpop.f32.mrf.mxu0
  %v3549 = vadd.f32 %v3476, %v3548
  %3550 = vmatprep.mubr.bf16.mxu0 %v2462
  %3551 = vmatmul.mubr.bf16.gmra.mxu0 %v2461
  %v3552 = vpop.f32.mrf.mxu0
  %v3553 = vadd.f32 %v3480, %v3552
  %v3554 = vpop.f32.mrf.mxu0
  %v3555 = vadd.f32 %v3482, %v3554
  %v3556 = vpop.f32.mrf.mxu0
  %v3557 = vadd.f32 %v3484, %v3556
  %v3558 = vpop.f32.mrf.mxu0
  %v3559 = vadd.f32 %v3486, %v3558
  %3560 = vdwg.mxu0
  %3561 = vmatprep.subr.bf16.mxu0 %v3165
  %3562 = vmatpush1.bf16.msra.mxu0 %v3164
  %3563 = vmatprep.subr.bf16.mxu0 %v3163
  %3564 = vmatpush1.bf16.msra.mxu0 %v3162
  %3565 = vmatprep.subr.bf16.mxu0 %v3161
  %3566 = vmatpush1.bf16.msra.mxu0 %v3160
  %3567 = vmatprep.subr.bf16.mxu0 %v3159
  %3568 = vmatpush1.bf16.msra.mxu0 %v3158
  %3569 = vmatprep.subr.bf16.mxu0 %v3157
  %3570 = vmatpush1.bf16.msra.mxu0 %v3156
  %3571 = vmatprep.subr.bf16.mxu0 %v3155
  %3572 = vmatpush1.bf16.msra.mxu0 %v3154
  %3573 = vmatprep.subr.bf16.mxu0 %v3153
  %3574 = vmatpush1.bf16.msra.mxu0 %v3152
  %3575 = vmatprep.subr.bf16.mxu0 %v3151
  %3576 = vmatpush1.bf16.msra.mxu0 %v3150
  %3577 = vmatprep.subr.bf16.mxu0 %v3181
  %3578 = vmatpush2.bf16.msra.mxu0 %v3180
  %3579 = vmatprep.subr.bf16.mxu0 %v3179
  %3580 = vmatpush2.bf16.msra.mxu0 %v3178
  %3581 = vmatprep.subr.bf16.mxu0 %v3177
  %3582 = vmatpush2.bf16.msra.mxu0 %v3176
  %3583 = vmatprep.subr.bf16.mxu0 %v3175
  %3584 = vmatpush2.bf16.msra.mxu0 %v3174
  %3585 = vmatprep.subr.bf16.mxu0 %v3173
  %3586 = vmatpush2.bf16.msra.mxu0 %v3172
  %3587 = vmatprep.subr.bf16.mxu0 %v3171
  %3588 = vmatpush2.bf16.msra.mxu0 %v3170
  %3589 = vmatprep.subr.bf16.mxu0 %v3169
  %3590 = vmatpush2.bf16.msra.mxu0 %v3168
  %3591 = vmatprep.subr.bf16.mxu0 %v3167
  %3592 = vmatpush2.bf16.msra.mxu0 %v3166
  %3593 = vmatprep.mubr.bf16.mxu0 %v2437
  %3594 = vmatmul.mubr.bf16.gmra.mxu0 %v2436
  %v3595 = vpop.f32.mrf.mxu0
  %v3596 = vadd.f32 %v3523, %v3595
  %v3597 = vpop.f32.mrf.mxu0
  %v3598 = vadd.f32 %v3525, %v3597
  %v3599 = vpop.f32.mrf.mxu0
  %v3600 = vadd.f32 %v3527, %v3599
  %v3601 = vpop.f32.mrf.mxu0
  %v3602 = vadd.f32 %v3529, %v3601
  %3603 = vmatprep.mubr.bf16.mxu0 %v2446
  %3604 = vmatmul.mubr.bf16.gmra.mxu0 %v2445
  %v3605 = vpop.f32.mrf.mxu0
  %v3606 = vadd.f32 %v3533, %v3605
  %v3607 = vpop.f32.mrf.mxu0
  %v3608 = vadd.f32 %v3535, %v3607
  %v3609 = vpop.f32.mrf.mxu0
  %v3610 = vadd.f32 %v3537, %v3609
  %v3611 = vpop.f32.mrf.mxu0
  %v3612 = vadd.f32 %v3539, %v3611
  %3613 = vmatprep.mubr.bf16.mxu0 %v2455
  %3614 = vmatmul.mubr.bf16.gmra.mxu0 %v2454
  %v3615 = vpop.f32.mrf.mxu0
  %v3616 = vadd.f32 %v3543, %v3615
  %v3617 = vpop.f32.mrf.mxu0
  %v3618 = vadd.f32 %v3545, %v3617
  %v3619 = vpop.f32.mrf.mxu0
  %v3620 = vadd.f32 %v3547, %v3619
  %v3621 = vpop.f32.mrf.mxu0
  %v3622 = vadd.f32 %v3549, %v3621
  %3623 = vmatprep.mubr.bf16.mxu0 %v2464
  %3624 = vmatmul.mubr.bf16.gmra.mxu0 %v2463
  %v3625 = vpop.f32.mrf.mxu0
  %v3626 = vadd.f32 %v3553, %v3625
  %v3627 = vpop.f32.mrf.mxu0
  %v3628 = vadd.f32 %v3555, %v3627
  %v3629 = vpop.f32.mrf.mxu0
  %v3630 = vadd.f32 %v3557, %v3629
  %v3631 = vpop.f32.mrf.mxu0
  %v3632 = vadd.f32 %v3559, %v3631
  %3633 = vdwg.mxu0
  %3634 = vmatprep.subr.bf16.mxu0 %v3197
  %3635 = vmatpush1.bf16.msra.mxu0 %v3196
  %3636 = vmatprep.subr.bf16.mxu0 %v3195
  %3637 = vmatpush1.bf16.msra.mxu0 %v3194
  %3638 = vmatprep.subr.bf16.mxu0 %v3193
  %3639 = vmatpush1.bf16.msra.mxu0 %v3192
  %3640 = vmatprep.subr.bf16.mxu0 %v3191
  %3641 = vmatpush1.bf16.msra.mxu0 %v3190
  %3642 = vmatprep.subr.bf16.mxu0 %v3189
  %3643 = vmatpush1.bf16.msra.mxu0 %v3188
  %3644 = vmatprep.subr.bf16.mxu0 %v3187
  %3645 = vmatpush1.bf16.msra.mxu0 %v3186
  %3646 = vmatprep.subr.bf16.mxu0 %v3185
  %3647 = vmatpush1.bf16.msra.mxu0 %v3184
  %3648 = vmatprep.subr.bf16.mxu0 %v3183
  %3649 = vmatpush1.bf16.msra.mxu0 %v3182
  %3650 = vmatprep.subr.bf16.mxu0 0
  %3651 = vmatpush2.bf16.msra.mxu0 0
  %3652 = vmatprep.subr.bf16.mxu0 0
  %3653 = vmatpush2.bf16.msra.mxu0 0
  %3654 = vmatprep.subr.bf16.mxu0 0
  %3655 = vmatpush2.bf16.msra.mxu0 0
  %3656 = vmatprep.subr.bf16.mxu0 0
  %3657 = vmatpush2.bf16.msra.mxu0 0
  %3658 = vmatprep.subr.bf16.mxu0 0
  %3659 = vmatpush2.bf16.msra.mxu0 0
  %3660 = vmatprep.subr.bf16.mxu0 0
  %3661 = vmatpush2.bf16.msra.mxu0 0
  %3662 = vmatprep.subr.bf16.mxu0 0
  %3663 = vmatpush2.bf16.msra.mxu0 0
  %3664 = vmatprep.subr.bf16.mxu0 0
  %3665 = vmatpush2.bf16.msra.mxu0 0
  %3666 = vmatprep.mubr.bf16.mxu0 0
  %3667 = vmatmul.mubr.bf16.gmra.mxu0 %v2438
  %v3668 = vpop.f32.mrf.mxu0
  %v3669 = vadd.f32 %v3596, %v3668
  %v3670 = vpop.f32.mrf.mxu0
  %v3671 = vadd.f32 %v3598, %v3670
  %v3672 = vpop.f32.mrf.mxu0
  %v3673 = vadd.f32 %v3600, %v3672
  %v3674 = vpop.f32.mrf.mxu0
  %v3675 = vadd.f32 %v3602, %v3674
  %3676 = vmatprep.mubr.bf16.mxu0 0
  %3677 = vmatmul.mubr.bf16.gmra.mxu0 %v2447
  %v3678 = vpop.f32.mrf.mxu0
  %v3679 = vadd.f32 %v3606, %v3678
  %v3680 = vpop.f32.mrf.mxu0
  %v3681 = vadd.f32 %v3608, %v3680
  %v3682 = vpop.f32.mrf.mxu0
  %v3683 = vadd.f32 %v3610, %v3682
  %v3684 = vpop.f32.mrf.mxu0
  %v3685 = vadd.f32 %v3612, %v3684
  %3686 = vmatprep.mubr.bf16.mxu0 0
  %3687 = vmatmul.mubr.bf16.gmra.mxu0 %v2456
  %v3688 = vpop.f32.mrf.mxu0
  %v3689 = vadd.f32 %v3616, %v3688
  %v3690 = vpop.f32.mrf.mxu0
  %v3691 = vadd.f32 %v3618, %v3690
  %v3692 = vpop.f32.mrf.mxu0
  %v3693 = vadd.f32 %v3620, %v3692
  %v3694 = vpop.f32.mrf.mxu0
  %v3695 = vadd.f32 %v3622, %v3694
  %3696 = vmatprep.mubr.bf16.mxu0 0
  %3697 = vmatmul.mubr.bf16.gmra.mxu0 %v2465
  %v3698 = vpop.f32.mrf.mxu0
  %v3699 = vadd.f32 %v3626, %v3698
  %v3700 = vpop.f32.mrf.mxu0
  %v3701 = vadd.f32 %v3628, %v3700
  %v3702 = vpop.f32.mrf.mxu0
  %v3703 = vadd.f32 %v3630, %v3702
  %v3704 = vpop.f32.mrf.mxu0
  %v3705 = vadd.f32 %v3632, %v3704
  %3706 = vdwg.mxu0
  %v3707 = vxor.u32 %v3669, 2147483648
  %v3708 = vxor.u32 %v3671, 2147483648
  %v3709 = vxor.u32 %v3673, 2147483648
  %v3710 = vxor.u32 %v3675, 2147483648
  %v3711 = vxor.u32 %v3679, 2147483648
  %v3712 = vxor.u32 %v3681, 2147483648
  %v3713 = vxor.u32 %v3683, 2147483648
  %v3714 = vxor.u32 %v3685, 2147483648
  %v3715 = vxor.u32 %v3689, 2147483648
  %v3716 = vxor.u32 %v3691, 2147483648
  %v3717 = vxor.u32 %v3693, 2147483648
  %v3718 = vxor.u32 %v3695, 2147483648
  %v3719 = vxor.u32 %v3699, 2147483648
  %v3720 = vxor.u32 %v3701, 2147483648
  %v3721 = vxor.u32 %v3703, 2147483648
  %v3722 = vxor.u32 %v3705, 2147483648
  %v3723 = vmul.f32 %v3707, 1.442695
  %v3724 = vpow.pop %v3723
  %v3725 = vmul.f32 %v3708, 1.442695
  %v3726 = vpow.pop %v3725
  %v3727 = vmul.f32 %v3709, 1.442695
  %v3728 = vpow.pop %v3727
  %v3729 = vmul.f32 %v3710, 1.442695
  %v3730 = vpow.pop %v3729
  %v3731 = vmul.f32 %v3711, 1.442695
  %v3732 = vpow.pop %v3731
  %v3733 = vmul.f32 %v3712, 1.442695
  %v3734 = vpow.pop %v3733
  %v3735 = vmul.f32 %v3713, 1.442695
  %v3736 = vpow.pop %v3735
  %v3737 = vmul.f32 %v3714, 1.442695
  %v3738 = vpow.pop %v3737
  %v3739 = vmul.f32 %v3715, 1.442695
  %v3740 = vpow.pop %v3739
  %v3741 = vmul.f32 %v3716, 1.442695
  %v3742 = vpow.pop %v3741
  %v3743 = vmul.f32 %v3717, 1.442695
  %v3744 = vpow.pop %v3743
  %v3745 = vmul.f32 %v3718, 1.442695
  %v3746 = vpow.pop %v3745
  %v3747 = vmul.f32 %v3719, 1.442695
  %v3748 = vpow.pop %v3747
  %v3749 = vmul.f32 %v3720, 1.442695
  %v3750 = vpow.pop %v3749
  %v3751 = vmul.f32 %v3721, 1.442695
  %v3752 = vpow.pop %v3751
  %v3753 = vmul.f32 %v3722, 1.442695
  %v3754 = vpow.pop %v3753
  %v3755 = vadd.f32 %v3724, 1.0
  %v3756 = vadd.f32 %v3726, 1.0
  %v3757 = vadd.f32 %v3728, 1.0
  %v3758 = vadd.f32 %v3730, 1.0
  %v3759 = vadd.f32 %v3732, 1.0
  %v3760 = vadd.f32 %v3734, 1.0
  %v3761 = vadd.f32 %v3736, 1.0
  %v3762 = vadd.f32 %v3738, 1.0
  %v3763 = vadd.f32 %v3740, 1.0
  %v3764 = vadd.f32 %v3742, 1.0
  %v3765 = vadd.f32 %v3744, 1.0
  %v3766 = vadd.f32 %v3746, 1.0
  %v3767 = vadd.f32 %v3748, 1.0
  %v3768 = vadd.f32 %v3750, 1.0
  %v3769 = vadd.f32 %v3752, 1.0
  %v3770 = vadd.f32 %v3754, 1.0
  %v3771 = vrcp.pop %v3755
  %v3772 = vmul.f32 1.0, %v3771
  %v3773 = vrcp.pop %v3756
  %v3774 = vmul.f32 1.0, %v3773
  %v3775 = vrcp.pop %v3757
  %v3776 = vmul.f32 1.0, %v3775
  %v3777 = vrcp.pop %v3758
  %v3778 = vmul.f32 1.0, %v3777
  %v3779 = vrcp.pop %v3759
  %v3780 = vmul.f32 1.0, %v3779
  %v3781 = vrcp.pop %v3760
  %v3782 = vmul.f32 1.0, %v3781
  %v3783 = vrcp.pop %v3761
  %v3784 = vmul.f32 1.0, %v3783
  %v3785 = vrcp.pop %v3762
  %v3786 = vmul.f32 1.0, %v3785
  %v3787 = vrcp.pop %v3763
  %v3788 = vmul.f32 1.0, %v3787
  %v3789 = vrcp.pop %v3764
  %v3790 = vmul.f32 1.0, %v3789
  %v3791 = vrcp.pop %v3765
  %v3792 = vmul.f32 1.0, %v3791
  %v3793 = vrcp.pop %v3766
  %v3794 = vmul.f32 1.0, %v3793
  %v3795 = vrcp.pop %v3767
  %v3796 = vmul.f32 1.0, %v3795
  %v3797 = vrcp.pop %v3768
  %v3798 = vmul.f32 1.0, %v3797
  %v3799 = vrcp.pop %v3769
  %v3800 = vmul.f32 1.0, %v3799
  %v3801 = vrcp.pop %v3770
  %v3802 = vmul.f32 1.0, %v3801
  %v3803 = vmul.f32 %v3669, %v3772
  %v3804 = vmul.f32 %v3671, %v3774
  %v3805 = vmul.f32 %v3673, %v3776
  %v3806 = vmul.f32 %v3675, %v3778
  %v3807 = vmul.f32 %v3679, %v3780
  %v3808 = vmul.f32 %v3681, %v3782
  %v3809 = vmul.f32 %v3683, %v3784
  %v3810 = vmul.f32 %v3685, %v3786
  %v3811 = vmul.f32 %v3689, %v3788
  %v3812 = vmul.f32 %v3691, %v3790
  %v3813 = vmul.f32 %v3693, %v3792
  %v3814 = vmul.f32 %v3695, %v3794
  %v3815 = vmul.f32 %v3699, %v3796
  %v3816 = vmul.f32 %v3701, %v3798
  %v3817 = vmul.f32 %v3703, %v3800
  %v3818 = vmul.f32 %v3705, %v3802
  %v3819 = vpack.c.bf16 %v3805, %v3803
  %v3820 = vpack.c.bf16 %v3806, %v3804
  %v3821 = vpack.c.bf16 %v3809, %v3807
  %v3822 = vpack.c.bf16 %v3810, %v3808
  %v3823 = vpack.c.bf16 %v3813, %v3811
  %v3824 = vpack.c.bf16 %v3814, %v3812
  %v3825 = vpack.c.bf16 %v3817, %v3815
  %v3826 = vpack.c.bf16 %v3818, %v3816
  %v3835 = vunpack.c.l.b16 %v3819
  %v3836 = vunpack.c.l.b16 %v3820
  %v3837 = vunpack.c.h.b16 %v3819
  %v3838 = vunpack.c.h.b16 %v3820
  %v3839 = vunpack.c.l.b16 %v3821
  %v3840 = vunpack.c.l.b16 %v3822
  %v3841 = vunpack.c.h.b16 %v3821
  %v3842 = vunpack.c.h.b16 %v3822
  %v3843 = vunpack.c.l.b16 %v3823
  %v3844 = vunpack.c.l.b16 %v3824
  %v3845 = vunpack.c.h.b16 %v3823
  %v3846 = vunpack.c.h.b16 %v3824
  %v3847 = vunpack.c.l.b16 %v3825
  %v3848 = vunpack.c.l.b16 %v3826
  %v3849 = vunpack.c.h.b16 %v3825
  %v3850 = vunpack.c.h.b16 %v3826
  %v3851 = vld [vmem:[%s3] sm:$0xff]
  %v3852 = vld [vmem:[%s3 + $0x8] sm:$0xff]
  %v3853 = vld [vmem:[%s3 + $0x10] sm:$0xff]
  %v3854 = vld [vmem:[%s3 + $0x18] sm:$0xff]
  %v3855 = vld [vmem:[%s3 + $0x20] sm:$0xff]
  %v3856 = vld [vmem:[%s3 + $0x28] sm:$0xff]
  %v3857 = vld [vmem:[%s3 + $0x30] sm:$0xff]
  %v3858 = vld [vmem:[%s3 + $0x38] sm:$0xff]
  %v3859 = vld [vmem:[%s3 + $0x40] sm:$0xff]
  %v3860 = vld [vmem:[%s3 + $0x48] sm:$0xff]
  %v3861 = vld [vmem:[%s3 + $0x50] sm:$0xff]
  %v3862 = vld [vmem:[%s3 + $0x58] sm:$0xff]
  %v3863 = vld [vmem:[%s3 + $0x60] sm:$0xff]
  %v3864 = vld [vmem:[%s3 + $0x68] sm:$0xff]
  %v3865 = vld [vmem:[%s3 + $0x70] sm:$0xff]
  %v3866 = vld [vmem:[%s3 + $0x78] sm:$0xff]
  %v3867 = vld [vmem:[%s3 + $0x80] sm:$0xff]
  %v3868 = vld [vmem:[%s3 + $0x88] sm:$0xff]
  %v3869 = vld [vmem:[%s3 + $0x90] sm:$0xff]
  %v3870 = vld [vmem:[%s3 + $0x98] sm:$0xff]
  %v3871 = vld [vmem:[%s3 + $0xa0] sm:$0xff]
  %v3872 = vld [vmem:[%s3 + $0xa8] sm:$0xff]
  %v3873 = vld [vmem:[%s3 + $0xb0] sm:$0xff]
  %v3874 = vld [vmem:[%s3 + $0xb8] sm:$0xff]
  %v3875 = vld [vmem:[%s3 + $0xc0] sm:$0xff]
  %v3876 = vld [vmem:[%s3 + $0xc8] sm:$0xff]
  %v3877 = vld [vmem:[%s3 + $0xd0] sm:$0xff]
  %v3878 = vld [vmem:[%s3 + $0xd8] sm:$0xff]
  %v3879 = vld [vmem:[%s3 + $0xe0] sm:$0xff]
  %v3880 = vld [vmem:[%s3 + $0xe8] sm:$0xff]
  %v3881 = vld [vmem:[%s3 + $0xf0] sm:$0xff]
  %v3882 = vld [vmem:[%s3 + $0xf8] sm:$0xff]
  %v3883 = vld [vmem:[%s3 + $0x100] sm:$0xff]
  %v3884 = vld [vmem:[%s3 + $0x108] sm:$0xff]
  %v3885 = vld [vmem:[%s3 + $0x110] sm:$0xff]
  %v3886 = vld [vmem:[%s3 + $0x118] sm:$0xff]
  %v3887 = vld [vmem:[%s3 + $0x120] sm:$0xff]
  %v3888 = vld [vmem:[%s3 + $0x128] sm:$0xff]
  %v3889 = vld [vmem:[%s3 + $0x130] sm:$0xff]
  %v3890 = vld [vmem:[%s3 + $0x138] sm:$0xff]
  %v3891 = vld [vmem:[%s3 + $0x140] sm:$0xff]
  %v3892 = vld [vmem:[%s3 + $0x148] sm:$0xff]
  %v3893 = vld [vmem:[%s3 + $0x150] sm:$0xff]
  %v3894 = vld [vmem:[%s3 + $0x158] sm:$0xff]
  %v3895 = vld [vmem:[%s3 + $0x160] sm:$0xff]
  %v3896 = vld [vmem:[%s3 + $0x168] sm:$0xff]
  %v3897 = vld [vmem:[%s3 + $0x170] sm:$0xff]
  %v3898 = vld [vmem:[%s3 + $0x178] sm:$0xff]
  %v3899 = vld [vmem:[%s3 + $0x180] sm:$0xff]
  %v3900 = vld [vmem:[%s3 + $0x188] sm:$0xff]
  %v3901 = vld [vmem:[%s3 + $0x190] sm:$0xff]
  %v3902 = vld [vmem:[%s3 + $0x198] sm:$0xff]
  %v3903 = vld [vmem:[%s3 + $0x1a0] sm:$0xff]
  %v3904 = vld [vmem:[%s3 + $0x1a8] sm:$0xff]
  %v3905 = vld [vmem:[%s3 + $0x1b0] sm:$0xff]
  %v3906 = vld [vmem:[%s3 + $0x1b8] sm:$0xff]
  %v3907 = vld [vmem:[%s3 + $0x1c0] sm:$0xff]
  %v3908 = vld [vmem:[%s3 + $0x1c8] sm:$0xff]
  %v3909 = vld [vmem:[%s3 + $0x1d0] sm:$0xff]
  %v3910 = vld [vmem:[%s3 + $0x1d8] sm:$0xff]
  %v3911 = vld [vmem:[%s3 + $0x1e0] sm:$0xff]
  %v3912 = vld [vmem:[%s3 + $0x1e8] sm:$0xff]
  %v3913 = vld [vmem:[%s3 + $0x1f0] sm:$0xff]
  %v3914 = vld [vmem:[%s3 + $0x1f8] sm:$0xff]
  %v3915 = vld [vmem:[%s3 + $0x200] sm:$0xff]
  %v3916 = vld [vmem:[%s3 + $0x208] sm:$0xff]
  %v3917 = vld [vmem:[%s3 + $0x210] sm:$0xff]
  %v3918 = vld [vmem:[%s3 + $0x218] sm:$0xff]
  %v3919 = vld [vmem:[%s3 + $0x220] sm:$0xff]
  %v3920 = vld [vmem:[%s3 + $0x228] sm:$0xff]
  %v3921 = vld [vmem:[%s3 + $0x230] sm:$0xff]
  %v3922 = vld [vmem:[%s3 + $0x238] sm:$0xff]
  %v3923 = vld [vmem:[%s3 + $0x240] sm:$0xff]
  %v3924 = vld [vmem:[%s3 + $0x248] sm:$0xff]
  %v3925 = vld [vmem:[%s3 + $0x250] sm:$0xff]
  %v3926 = vld [vmem:[%s3 + $0x258] sm:$0xff]
  %v3927 = vld [vmem:[%s3 + $0x260] sm:$0xff]
  %v3928 = vld [vmem:[%s3 + $0x268] sm:$0xff]
  %v3929 = vld [vmem:[%s3 + $0x270] sm:$0xff]
  %v3930 = vld [vmem:[%s3 + $0x278] sm:$0xff]
  %v3931 = vld [vmem:[%s3 + $0x280] sm:$0xff]
  %v3932 = vld [vmem:[%s3 + $0x288] sm:$0xff]
  %v3933 = vld [vmem:[%s3 + $0x290] sm:$0xff]
  %v3934 = vld [vmem:[%s3 + $0x298] sm:$0xff]
  %v3935 = vld [vmem:[%s3 + $0x2a0] sm:$0xff]
  %v3936 = vld [vmem:[%s3 + $0x2a8] sm:$0xff]
  %v3937 = vld [vmem:[%s3 + $0x2b0] sm:$0xff]
  %v3938 = vld [vmem:[%s3 + $0x2b8] sm:$0xff]
  %v3939 = vld [vmem:[%s3 + $0x2c0] sm:$0xff]
  %v3940 = vld [vmem:[%s3 + $0x2c8] sm:$0xff]
  %v3941 = vld [vmem:[%s3 + $0x2d0] sm:$0xff]
  %v3942 = vld [vmem:[%s3 + $0x2d8] sm:$0xff]
  %v3943 = vld [vmem:[%s3 + $0x2e0] sm:$0xff]
  %v3944 = vld [vmem:[%s3 + $0x2e8] sm:$0xff]
  %v3945 = vld [vmem:[%s3 + $0x2f0] sm:$0xff]
  %v3946 = vld [vmem:[%s3 + $0x2f8] sm:$0xff]
  %v3947 = vld [vmem:[%s3 + $0x300] sm:$0xff]
  %v3948 = vld [vmem:[%s3 + $0x308] sm:$0xff]
  %v3949 = vld [vmem:[%s3 + $0x310] sm:$0xff]
  %v3950 = vld [vmem:[%s3 + $0x318] sm:$0xff]
  %v3951 = vld [vmem:[%s3 + $0x320] sm:$0xff]
  %v3952 = vld [vmem:[%s3 + $0x328] sm:$0xff]
  %v3953 = vld [vmem:[%s3 + $0x330] sm:$0xff]
  %v3954 = vld [vmem:[%s3 + $0x338] sm:$0xff]
  %v3955 = vld [vmem:[%s3 + $0x340] sm:$0xff]
  %v3956 = vld [vmem:[%s3 + $0x348] sm:$0xff]
  %v3957 = vld [vmem:[%s3 + $0x350] sm:$0xff]
  %v3958 = vld [vmem:[%s3 + $0x358] sm:$0xff]
  %v3959 = vld [vmem:[%s3 + $0x360] sm:$0xff]
  %v3960 = vld [vmem:[%s3 + $0x368] sm:$0xff]
  %v3961 = vld [vmem:[%s3 + $0x370] sm:$0xff]
  %v3962 = vld [vmem:[%s3 + $0x378] sm:$0xff]
  %v3963 = vld [vmem:[%s3 + $0x380] sm:$0xff]
  %v3964 = vld [vmem:[%s3 + $0x388] sm:$0xff]
  %v3965 = vld [vmem:[%s3 + $0x390] sm:$0xff]
  %v3966 = vld [vmem:[%s3 + $0x398] sm:$0xff]
  %v3967 = vld [vmem:[%s3 + $0x3a0] sm:$0xff]
  %v3968 = vld [vmem:[%s3 + $0x3a8] sm:$0xff]
  %v3969 = vld [vmem:[%s3 + $0x3b0] sm:$0xff]
  %v3970 = vld [vmem:[%s3 + $0x3b8] sm:$0xff]
  %v3971 = vld [vmem:[%s3 + $0x3c0] sm:$0xff]
  %v3972 = vld [vmem:[%s3 + $0x3c8] sm:$0xff]
  %v3973 = vld [vmem:[%s3 + $0x3d0] sm:$0xff]
  %v3974 = vld [vmem:[%s3 + $0x3d8] sm:$0xff]
  %v3975 = vld [vmem:[%s3 + $0x3e0] sm:$0xff]
  %v3976 = vld [vmem:[%s3 + $0x3e8] sm:$0xff]
  %v3977 = vld [vmem:[%s3 + $0x3f0] sm:$0xff]
  %v3978 = vld [vmem:[%s3 + $0x3f8] sm:$0xff]
  %v3979 = vld [vmem:[%s4] sm:$0x3]
  %v3981 = vlaneseq
  %v3982 = vshrl.u32 %v3981, 7
  %v3983 = vsub.s32 0, %v3982
  %v3984 = vrot.slane %v3979, %v3983
  %v3985 = vlaneseq
  %v3986 = vshrl.u32 %v3985, 7
  %v3987 = vsub.s32 1, %v3986
  %v3988 = vrot.slane %v3979, %v3987
  %v3991 = vpack.c.b16 %v3839, %v3835
  %v3992 = vpack.c.b16 %v3840, %v3836
  %v3993 = vpack.c.b16 %v3841, %v3837
  %v3994 = vpack.c.b16 %v3842, %v3838
  %v3995 = vpack.c.b16 %v3843, %v3839
  %v3996 = vpack.c.b16 %v3844, %v3840
  %v3997 = vpack.c.b16 %v3845, %v3841
  %v3998 = vpack.c.b16 %v3846, %v3842
  %v3999 = vpack.c.b16 %v3843, %v3843
  %v4000 = vpack.c.b16 %v3844, %v3844
  %v4001 = vpack.c.b16 %v3845, %v3845
  %v4002 = vpack.c.b16 %v3846, %v3846
  %v4003 = vpack.c.b16 %v3847, %v3847
  %v4004 = vpack.c.b16 %v3848, %v3848
  %v4005 = vpack.c.b16 %v3849, %v3849
  %v4006 = vpack.c.b16 %v3850, %v3850
  %v4151 = vunpack.c.l.b16 %v3851
  %v4152 = vunpack.c.h.b16 %v3851
  %v4153 = vunpack.c.l.b16 %v3852
  %v4154 = vunpack.c.h.b16 %v3852
  %v4155 = vunpack.c.l.b16 %v3853
  %v4156 = vunpack.c.h.b16 %v3853
  %v4157 = vunpack.c.l.b16 %v3854
  %v4158 = vunpack.c.h.b16 %v3854
  %v4159 = vunpack.c.l.b16 %v3855
  %v4160 = vunpack.c.h.b16 %v3855
  %v4161 = vunpack.c.l.b16 %v3856
  %v4162 = vunpack.c.h.b16 %v3856
  %v4163 = vunpack.c.l.b16 %v3857
  %v4164 = vunpack.c.h.b16 %v3857
  %v4165 = vunpack.c.l.b16 %v3858
  %v4166 = vunpack.c.h.b16 %v3858
  %v4167 = vunpack.c.l.b16 %v3859
  %v4168 = vunpack.c.h.b16 %v3859
  %v4169 = vunpack.c.l.b16 %v3860
  %v4170 = vunpack.c.h.b16 %v3860
  %v4171 = vunpack.c.l.b16 %v3861
  %v4172 = vunpack.c.h.b16 %v3861
  %v4173 = vunpack.c.l.b16 %v3862
  %v4174 = vunpack.c.h.b16 %v3862
  %v4175 = vunpack.c.l.b16 %v3863
  %v4176 = vunpack.c.h.b16 %v3863
  %v4177 = vunpack.c.l.b16 %v3864
  %v4178 = vunpack.c.h.b16 %v3864
  %v4179 = vunpack.c.l.b16 %v3865
  %v4180 = vunpack.c.h.b16 %v3865
  %v4181 = vunpack.c.l.b16 %v3866
  %v4182 = vunpack.c.h.b16 %v3866
  %v4183 = vunpack.c.l.b16 %v3867
  %v4184 = vunpack.c.h.b16 %v3867
  %v4185 = vunpack.c.l.b16 %v3868
  %v4186 = vunpack.c.h.b16 %v3868
  %v4187 = vunpack.c.l.b16 %v3869
  %v4188 = vunpack.c.h.b16 %v3869
  %v4189 = vunpack.c.l.b16 %v3870
  %v4190 = vunpack.c.h.b16 %v3870
  %v4191 = vunpack.c.l.b16 %v3871
  %v4192 = vunpack.c.h.b16 %v3871
  %v4193 = vunpack.c.l.b16 %v3872
  %v4194 = vunpack.c.h.b16 %v3872
  %v4195 = vunpack.c.l.b16 %v3873
  %v4196 = vunpack.c.h.b16 %v3873
  %v4197 = vunpack.c.l.b16 %v3874
  %v4198 = vunpack.c.h.b16 %v3874
  %v4199 = vunpack.c.l.b16 %v3875
  %v4200 = vunpack.c.h.b16 %v3875
  %v4201 = vunpack.c.l.b16 %v3876
  %v4202 = vunpack.c.h.b16 %v3876
  %v4203 = vunpack.c.l.b16 %v3877
  %v4204 = vunpack.c.h.b16 %v3877
  %v4205 = vunpack.c.l.b16 %v3878
  %v4206 = vunpack.c.h.b16 %v3878
  %v4207 = vunpack.c.l.b16 %v3879
  %v4208 = vunpack.c.h.b16 %v3879
  %v4209 = vunpack.c.l.b16 %v3880
  %v4210 = vunpack.c.h.b16 %v3880
  %v4211 = vunpack.c.l.b16 %v3881
  %v4212 = vunpack.c.h.b16 %v3881
  %v4213 = vunpack.c.l.b16 %v3882
  %v4214 = vunpack.c.h.b16 %v3882
  %v4215 = vunpack.c.l.b16 %v3883
  %v4216 = vunpack.c.h.b16 %v3883
  %v4217 = vunpack.c.l.b16 %v3884
  %v4218 = vunpack.c.h.b16 %v3884
  %v4219 = vunpack.c.l.b16 %v3885
  %v4220 = vunpack.c.h.b16 %v3885
  %v4221 = vunpack.c.l.b16 %v3886
  %v4222 = vunpack.c.h.b16 %v3886
  %v4223 = vunpack.c.l.b16 %v3887
  %v4224 = vunpack.c.h.b16 %v3887
  %v4225 = vunpack.c.l.b16 %v3888
  %v4226 = vunpack.c.h.b16 %v3888
  %v4227 = vunpack.c.l.b16 %v3889
  %v4228 = vunpack.c.h.b16 %v3889
  %v4229 = vunpack.c.l.b16 %v3890
  %v4230 = vunpack.c.h.b16 %v3890
  %v4231 = vunpack.c.l.b16 %v3891
  %v4232 = vunpack.c.h.b16 %v3891
  %v4233 = vunpack.c.l.b16 %v3892
  %v4234 = vunpack.c.h.b16 %v3892
  %v4235 = vunpack.c.l.b16 %v3893
  %v4236 = vunpack.c.h.b16 %v3893
  %v4237 = vunpack.c.l.b16 %v3894
  %v4238 = vunpack.c.h.b16 %v3894
  %v4239 = vunpack.c.l.b16 %v3895
  %v4240 = vunpack.c.h.b16 %v3895
  %v4241 = vunpack.c.l.b16 %v3896
  %v4242 = vunpack.c.h.b16 %v3896
  %v4243 = vunpack.c.l.b16 %v3897
  %v4244 = vunpack.c.h.b16 %v3897
  %v4245 = vunpack.c.l.b16 %v3898
  %v4246 = vunpack.c.h.b16 %v3898
  %v4247 = vunpack.c.l.b16 %v3899
  %v4248 = vunpack.c.h.b16 %v3899
  %v4249 = vunpack.c.l.b16 %v3900
  %v4250 = vunpack.c.h.b16 %v3900
  %v4251 = vunpack.c.l.b16 %v3901
  %v4252 = vunpack.c.h.b16 %v3901
  %v4253 = vunpack.c.l.b16 %v3902
  %v4254 = vunpack.c.h.b16 %v3902
  %v4255 = vunpack.c.l.b16 %v3903
  %v4256 = vunpack.c.h.b16 %v3903
  %v4257 = vunpack.c.l.b16 %v3904
  %v4258 = vunpack.c.h.b16 %v3904
  %v4259 = vunpack.c.l.b16 %v3905
  %v4260 = vunpack.c.h.b16 %v3905
  %v4261 = vunpack.c.l.b16 %v3906
  %v4262 = vunpack.c.h.b16 %v3906
  %v4263 = vunpack.c.l.b16 %v3907
  %v4264 = vunpack.c.h.b16 %v3907
  %v4265 = vunpack.c.l.b16 %v3908
  %v4266 = vunpack.c.h.b16 %v3908
  %v4267 = vunpack.c.l.b16 %v3909
  %v4268 = vunpack.c.h.b16 %v3909
  %v4269 = vunpack.c.l.b16 %v3910
  %v4270 = vunpack.c.h.b16 %v3910
  %v4271 = vunpack.c.l.b16 %v3911
  %v4272 = vunpack.c.h.b16 %v3911
  %v4273 = vunpack.c.l.b16 %v3912
  %v4274 = vunpack.c.h.b16 %v3912
  %v4275 = vunpack.c.l.b16 %v3913
  %v4276 = vunpack.c.h.b16 %v3913
  %v4277 = vunpack.c.l.b16 %v3914
  %v4278 = vunpack.c.h.b16 %v3914
  %v4279 = vunpack.c.l.b16 %v3915
  %v4280 = vunpack.c.h.b16 %v3915
  %v4281 = vunpack.c.l.b16 %v3916
  %v4282 = vunpack.c.h.b16 %v3916
  %v4283 = vunpack.c.l.b16 %v3917
  %v4284 = vunpack.c.h.b16 %v3917
  %v4285 = vunpack.c.l.b16 %v3918
  %v4286 = vunpack.c.h.b16 %v3918
  %v4287 = vunpack.c.l.b16 %v3919
  %v4288 = vunpack.c.h.b16 %v3919
  %v4289 = vunpack.c.l.b16 %v3920
  %v4290 = vunpack.c.h.b16 %v3920
  %v4291 = vunpack.c.l.b16 %v3921
  %v4292 = vunpack.c.h.b16 %v3921
  %v4293 = vunpack.c.l.b16 %v3922
  %v4294 = vunpack.c.h.b16 %v3922
  %v4295 = vunpack.c.l.b16 %v3923
  %v4296 = vunpack.c.h.b16 %v3923
  %v4297 = vunpack.c.l.b16 %v3924
  %v4298 = vunpack.c.h.b16 %v3924
  %v4299 = vunpack.c.l.b16 %v3925
  %v4300 = vunpack.c.h.b16 %v3925
  %v4301 = vunpack.c.l.b16 %v3926
  %v4302 = vunpack.c.h.b16 %v3926
  %v4303 = vunpack.c.l.b16 %v3927
  %v4304 = vunpack.c.h.b16 %v3927
  %v4305 = vunpack.c.l.b16 %v3928
  %v4306 = vunpack.c.h.b16 %v3928
  %v4307 = vunpack.c.l.b16 %v3929
  %v4308 = vunpack.c.h.b16 %v3929
  %v4309 = vunpack.c.l.b16 %v3930
  %v4310 = vunpack.c.h.b16 %v3930
  %v4311 = vunpack.c.l.b16 %v3931
  %v4312 = vunpack.c.h.b16 %v3931
  %v4313 = vunpack.c.l.b16 %v3932
  %v4314 = vunpack.c.h.b16 %v3932
  %v4315 = vunpack.c.l.b16 %v3933
  %v4316 = vunpack.c.h.b16 %v3933
  %v4317 = vunpack.c.l.b16 %v3934
  %v4318 = vunpack.c.h.b16 %v3934
  %v4319 = vunpack.c.l.b16 %v3935
  %v4320 = vunpack.c.h.b16 %v3935
  %v4321 = vunpack.c.l.b16 %v3936
  %v4322 = vunpack.c.h.b16 %v3936
  %v4323 = vunpack.c.l.b16 %v3937
  %v4324 = vunpack.c.h.b16 %v3937
  %v4325 = vunpack.c.l.b16 %v3938
  %v4326 = vunpack.c.h.b16 %v3938
  %v4327 = vunpack.c.l.b16 %v3939
  %v4328 = vunpack.c.h.b16 %v3939
  %v4329 = vunpack.c.l.b16 %v3940
  %v4330 = vunpack.c.h.b16 %v3940
  %v4331 = vunpack.c.l.b16 %v3941
  %v4332 = vunpack.c.h.b16 %v3941
  %v4333 = vunpack.c.l.b16 %v3942
  %v4334 = vunpack.c.h.b16 %v3942
  %v4335 = vunpack.c.l.b16 %v3943
  %v4336 = vunpack.c.h.b16 %v3943
  %v4337 = vunpack.c.l.b16 %v3944
  %v4338 = vunpack.c.h.b16 %v3944
  %v4339 = vunpack.c.l.b16 %v3945
  %v4340 = vunpack.c.h.b16 %v3945
  %v4341 = vunpack.c.l.b16 %v3946
  %v4342 = vunpack.c.h.b16 %v3946
  %v4343 = vunpack.c.l.b16 %v3947
  %v4344 = vunpack.c.h.b16 %v3947
  %v4345 = vunpack.c.l.b16 %v3948
  %v4346 = vunpack.c.h.b16 %v3948
  %v4347 = vunpack.c.l.b16 %v3949
  %v4348 = vunpack.c.h.b16 %v3949
  %v4349 = vunpack.c.l.b16 %v3950
  %v4350 = vunpack.c.h.b16 %v3950
  %v4351 = vunpack.c.l.b16 %v3951
  %v4352 = vunpack.c.h.b16 %v3951
  %v4353 = vunpack.c.l.b16 %v3952
  %v4354 = vunpack.c.h.b16 %v3952
  %v4355 = vunpack.c.l.b16 %v3953
  %v4356 = vunpack.c.h.b16 %v3953
  %v4357 = vunpack.c.l.b16 %v3954
  %v4358 = vunpack.c.h.b16 %v3954
  %v4359 = vunpack.c.l.b16 %v3955
  %v4360 = vunpack.c.h.b16 %v3955
  %v4361 = vunpack.c.l.b16 %v3956
  %v4362 = vunpack.c.h.b16 %v3956
  %v4363 = vunpack.c.l.b16 %v3957
  %v4364 = vunpack.c.h.b16 %v3957
  %v4365 = vunpack.c.l.b16 %v3958
  %v4366 = vunpack.c.h.b16 %v3958
  %v4367 = vunpack.c.l.b16 %v3959
  %v4368 = vunpack.c.h.b16 %v3959
  %v4369 = vunpack.c.l.b16 %v3960
  %v4370 = vunpack.c.h.b16 %v3960
  %v4371 = vunpack.c.l.b16 %v3961
  %v4372 = vunpack.c.h.b16 %v3961
  %v4373 = vunpack.c.l.b16 %v3962
  %v4374 = vunpack.c.h.b16 %v3962
  %v4375 = vunpack.c.l.b16 %v3963
  %v4376 = vunpack.c.h.b16 %v3963
  %v4377 = vunpack.c.l.b16 %v3964
  %v4378 = vunpack.c.h.b16 %v3964
  %v4379 = vunpack.c.l.b16 %v3965
  %v4380 = vunpack.c.h.b16 %v3965
  %v4381 = vunpack.c.l.b16 %v3966
  %v4382 = vunpack.c.h.b16 %v3966
  %v4383 = vunpack.c.l.b16 %v3967
  %v4384 = vunpack.c.h.b16 %v3967
  %v4385 = vunpack.c.l.b16 %v3968
  %v4386 = vunpack.c.h.b16 %v3968
  %v4387 = vunpack.c.l.b16 %v3969
  %v4388 = vunpack.c.h.b16 %v3969
  %v4389 = vunpack.c.l.b16 %v3970
  %v4390 = vunpack.c.h.b16 %v3970
  %v4391 = vunpack.c.l.b16 %v3971
  %v4392 = vunpack.c.h.b16 %v3971
  %v4393 = vunpack.c.l.b16 %v3972
  %v4394 = vunpack.c.h.b16 %v3972
  %v4395 = vunpack.c.l.b16 %v3973
  %v4396 = vunpack.c.h.b16 %v3973
  %v4397 = vunpack.c.l.b16 %v3974
  %v4398 = vunpack.c.h.b16 %v3974
  %v4399 = vunpack.c.l.b16 %v3975
  %v4400 = vunpack.c.h.b16 %v3975
  %v4401 = vunpack.c.l.b16 %v3976
  %v4402 = vunpack.c.h.b16 %v3976
  %v4403 = vunpack.c.l.b16 %v3977
  %v4404 = vunpack.c.h.b16 %v3977
  %v4405 = vunpack.c.l.b16 %v3978
  %v4406 = vunpack.c.h.b16 %v3978
  %v4407 = vpack.c.b16 %v4153, %v4151
  %v4408 = vpack.c.b16 %v4154, %v4152
  %v4409 = vpack.c.b16 %v4157, %v4155
  %v4410 = vpack.c.b16 %v4158, %v4156
  %v4411 = vpack.c.b16 %v4161, %v4159
  %v4412 = vpack.c.b16 %v4162, %v4160
  %v4413 = vpack.c.b16 %v4165, %v4163
  %v4414 = vpack.c.b16 %v4166, %v4164
  %v4415 = vpack.c.b16 %v4169, %v4167
  %v4416 = vpack.c.b16 %v4170, %v4168
  %v4417 = vpack.c.b16 %v4173, %v4171
  %v4418 = vpack.c.b16 %v4174, %v4172
  %v4419 = vpack.c.b16 %v4177, %v4175
  %v4420 = vpack.c.b16 %v4178, %v4176
  %v4421 = vpack.c.b16 %v4181, %v4179
  %v4422 = vpack.c.b16 %v4182, %v4180
  %v4423 = vpack.c.b16 %v4185, %v4183
  %v4424 = vpack.c.b16 %v4186, %v4184
  %v4425 = vpack.c.b16 %v4189, %v4187
  %v4426 = vpack.c.b16 %v4190, %v4188
  %v4427 = vpack.c.b16 %v4193, %v4191
  %v4428 = vpack.c.b16 %v4194, %v4192
  %v4429 = vpack.c.b16 %v4197, %v4195
  %v4430 = vpack.c.b16 %v4198, %v4196
  %v4431 = vpack.c.b16 %v4201, %v4199
  %v4432 = vpack.c.b16 %v4202, %v4200
  %v4433 = vpack.c.b16 %v4205, %v4203
  %v4434 = vpack.c.b16 %v4206, %v4204
  %v4435 = vpack.c.b16 %v4209, %v4207
  %v4436 = vpack.c.b16 %v4210, %v4208
  %v4437 = vpack.c.b16 %v4213, %v4211
  %v4438 = vpack.c.b16 %v4214, %v4212
  %v4439 = vpack.c.b16 %v4217, %v4215
  %v4440 = vpack.c.b16 %v4218, %v4216
  %v4441 = vpack.c.b16 %v4221, %v4219
  %v4442 = vpack.c.b16 %v4222, %v4220
  %v4443 = vpack.c.b16 %v4225, %v4223
  %v4444 = vpack.c.b16 %v4226, %v4224
  %v4445 = vpack.c.b16 %v4229, %v4227
  %v4446 = vpack.c.b16 %v4230, %v4228
  %v4447 = vpack.c.b16 %v4233, %v4231
  %v4448 = vpack.c.b16 %v4234, %v4232
  %v4449 = vpack.c.b16 %v4237, %v4235
  %v4450 = vpack.c.b16 %v4238, %v4236
  %v4451 = vpack.c.b16 %v4241, %v4239
  %v4452 = vpack.c.b16 %v4242, %v4240
  %v4453 = vpack.c.b16 %v4245, %v4243
  %v4454 = vpack.c.b16 %v4246, %v4244
  %v4455 = vpack.c.b16 %v4249, %v4247
  %v4456 = vpack.c.b16 %v4250, %v4248
  %v4457 = vpack.c.b16 %v4253, %v4251
  %v4458 = vpack.c.b16 %v4254, %v4252
  %v4459 = vpack.c.b16 %v4257, %v4255
  %v4460 = vpack.c.b16 %v4258, %v4256
  %v4461 = vpack.c.b16 %v4261, %v4259
  %v4462 = vpack.c.b16 %v4262, %v4260
  %v4463 = vpack.c.b16 %v4265, %v4263
  %v4464 = vpack.c.b16 %v4266, %v4264
  %v4465 = vpack.c.b16 %v4269, %v4267
  %v4466 = vpack.c.b16 %v4270, %v4268
  %v4467 = vpack.c.b16 %v4273, %v4271
  %v4468 = vpack.c.b16 %v4274, %v4272
  %v4469 = vpack.c.b16 %v4277, %v4275
  %v4470 = vpack.c.b16 %v4278, %v4276
  %v4471 = vpack.c.b16 %v4281, %v4279
  %v4472 = vpack.c.b16 %v4282, %v4280
  %v4473 = vpack.c.b16 %v4285, %v4283
  %v4474 = vpack.c.b16 %v4286, %v4284
  %v4475 = vpack.c.b16 %v4289, %v4287
  %v4476 = vpack.c.b16 %v4290, %v4288
  %v4477 = vpack.c.b16 %v4293, %v4291
  %v4478 = vpack.c.b16 %v4294, %v4292
  %v4479 = vpack.c.b16 %v4297, %v4295
  %v4480 = vpack.c.b16 %v4298, %v4296
  %v4481 = vpack.c.b16 %v4301, %v4299
  %v4482 = vpack.c.b16 %v4302, %v4300
  %v4483 = vpack.c.b16 %v4305, %v4303
  %v4484 = vpack.c.b16 %v4306, %v4304
  %v4485 = vpack.c.b16 %v4309, %v4307
  %v4486 = vpack.c.b16 %v4310, %v4308
  %v4487 = vpack.c.b16 %v4313, %v4311
  %v4488 = vpack.c.b16 %v4314, %v4312
  %v4489 = vpack.c.b16 %v4317, %v4315
  %v4490 = vpack.c.b16 %v4318, %v4316
  %v4491 = vpack.c.b16 %v4321, %v4319
  %v4492 = vpack.c.b16 %v4322, %v4320
  %v4493 = vpack.c.b16 %v4325, %v4323
  %v4494 = vpack.c.b16 %v4326, %v4324
  %v4495 = vpack.c.b16 %v4329, %v4327
  %v4496 = vpack.c.b16 %v4330, %v4328
  %v4497 = vpack.c.b16 %v4333, %v4331
  %v4498 = vpack.c.b16 %v4334, %v4332
  %v4499 = vpack.c.b16 %v4337, %v4335
  %v4500 = vpack.c.b16 %v4338, %v4336
  %v4501 = vpack.c.b16 %v4341, %v4339
  %v4502 = vpack.c.b16 %v4342, %v4340
  %v4503 = vpack.c.b16 %v4345, %v4343
  %v4504 = vpack.c.b16 %v4346, %v4344
  %v4505 = vpack.c.b16 %v4349, %v4347
  %v4506 = vpack.c.b16 %v4350, %v4348
  %v4507 = vpack.c.b16 %v4353, %v4351
  %v4508 = vpack.c.b16 %v4354, %v4352
  %v4509 = vpack.c.b16 %v4357, %v4355
  %v4510 = vpack.c.b16 %v4358, %v4356
  %v4511 = vpack.c.b16 %v4361, %v4359
  %v4512 = vpack.c.b16 %v4362, %v4360
  %v4513 = vpack.c.b16 %v4365, %v4363
  %v4514 = vpack.c.b16 %v4366, %v4364
  %v4515 = vpack.c.b16 %v4369, %v4367
  %v4516 = vpack.c.b16 %v4370, %v4368
  %v4517 = vpack.c.b16 %v4373, %v4371
  %v4518 = vpack.c.b16 %v4374, %v4372
  %v4519 = vpack.c.b16 %v4377, %v4375
  %v4520 = vpack.c.b16 %v4378, %v4376
  %v4521 = vpack.c.b16 %v4381, %v4379
  %v4522 = vpack.c.b16 %v4382, %v4380
  %v4523 = vpack.c.b16 %v4385, %v4383
  %v4524 = vpack.c.b16 %v4386, %v4384
  %v4525 = vpack.c.b16 %v4389, %v4387
  %v4526 = vpack.c.b16 %v4390, %v4388
  %v4527 = vpack.c.b16 %v4393, %v4391
  %v4528 = vpack.c.b16 %v4394, %v4392
  %v4529 = vpack.c.b16 %v4397, %v4395
  %v4530 = vpack.c.b16 %v4398, %v4396
  %v4531 = vpack.c.b16 %v4401, %v4399
  %v4532 = vpack.c.b16 %v4402, %v4400
  %v4533 = vpack.c.b16 %v4405, %v4403
  %v4534 = vpack.c.b16 %v4406, %v4404
  %4663 = vmatprep.subr.bf16.mxu0 %v4422
  %4664 = vmatpush1.bf16.msra.mxu0 %v4421
  %4665 = vmatprep.subr.bf16.mxu0 %v4420
  %4666 = vmatpush1.bf16.msra.mxu0 %v4419
  %4667 = vmatprep.subr.bf16.mxu0 %v4418
  %4668 = vmatpush1.bf16.msra.mxu0 %v4417
  %4669 = vmatprep.subr.bf16.mxu0 %v4416
  %4670 = vmatpush1.bf16.msra.mxu0 %v4415
  %4671 = vmatprep.subr.bf16.mxu0 %v4414
  %4672 = vmatpush1.bf16.msra.mxu0 %v4413
  %4673 = vmatprep.subr.bf16.mxu0 %v4412
  %4674 = vmatpush1.bf16.msra.mxu0 %v4411
  %4675 = vmatprep.subr.bf16.mxu0 %v4410
  %4676 = vmatpush1.bf16.msra.mxu0 %v4409
  %4677 = vmatprep.subr.bf16.mxu0 %v4408
  %4678 = vmatpush1.bf16.msra.mxu0 %v4407
  %4679 = vmatprep.subr.bf16.mxu0 %v4438
  %4680 = vmatpush2.bf16.msra.mxu0 %v4437
  %4681 = vmatprep.subr.bf16.mxu0 %v4436
  %4682 = vmatpush2.bf16.msra.mxu0 %v4435
  %4683 = vmatprep.subr.bf16.mxu0 %v4434
  %4684 = vmatpush2.bf16.msra.mxu0 %v4433
  %4685 = vmatprep.subr.bf16.mxu0 %v4432
  %4686 = vmatpush2.bf16.msra.mxu0 %v4431
  %4687 = vmatprep.subr.bf16.mxu0 %v4430
  %4688 = vmatpush2.bf16.msra.mxu0 %v4429
  %4689 = vmatprep.subr.bf16.mxu0 %v4428
  %4690 = vmatpush2.bf16.msra.mxu0 %v4427
  %4691 = vmatprep.subr.bf16.mxu0 %v4426
  %4692 = vmatpush2.bf16.msra.mxu0 %v4425
  %4693 = vmatprep.subr.bf16.mxu0 %v4424
  %4694 = vmatpush2.bf16.msra.mxu0 %v4423
  %4695 = vmatprep.mubr.bf16.mxu0 %v3992
  %4696 = vmatmul.mubr.bf16.gmra.mxu0 %v3991
  %v4697 = vpop.f32.mrf.mxu0
  %v4698 = vadd.f32 %v3984, %v4697
  %v4699 = vpop.f32.mrf.mxu0
  %v4700 = vadd.f32 %v3988, %v4699
  %v4701 = vpop.f32.mrf.mxu0
  %v4702 = vadd.f32 %v3984, %v4701
  %v4703 = vpop.f32.mrf.mxu0
  %v4704 = vadd.f32 %v3988, %v4703
  %4705 = vmatprep.mubr.bf16.mxu0 %v4000
  %4706 = vmatmul.mubr.bf16.gmra.mxu0 %v3999
  %v4707 = vpop.f32.mrf.mxu0
  %v4708 = vadd.f32 %v3984, %v4707
  %v4709 = vpop.f32.mrf.mxu0
  %v4710 = vadd.f32 %v3988, %v4709
  %v4711 = vpop.f32.mrf.mxu0
  %v4712 = vpop.f32.mrf.mxu0
  %4713 = vdwg.mxu0
  %4714 = vmatprep.subr.bf16.mxu0 %v4454
  %4715 = vmatpush1.bf16.msra.mxu0 %v4453
  %4716 = vmatprep.subr.bf16.mxu0 %v4452
  %4717 = vmatpush1.bf16.msra.mxu0 %v4451
  %4718 = vmatprep.subr.bf16.mxu0 %v4450
  %4719 = vmatpush1.bf16.msra.mxu0 %v4449
  %4720 = vmatprep.subr.bf16.mxu0 %v4448
  %4721 = vmatpush1.bf16.msra.mxu0 %v4447
  %4722 = vmatprep.subr.bf16.mxu0 %v4446
  %4723 = vmatpush1.bf16.msra.mxu0 %v4445
  %4724 = vmatprep.subr.bf16.mxu0 %v4444
  %4725 = vmatpush1.bf16.msra.mxu0 %v4443
  %4726 = vmatprep.subr.bf16.mxu0 %v4442
  %4727 = vmatpush1.bf16.msra.mxu0 %v4441
  %4728 = vmatprep.subr.bf16.mxu0 %v4440
  %4729 = vmatpush1.bf16.msra.mxu0 %v4439
  %4730 = vmatprep.subr.bf16.mxu0 %v4470
  %4731 = vmatpush2.bf16.msra.mxu0 %v4469
  %4732 = vmatprep.subr.bf16.mxu0 %v4468
  %4733 = vmatpush2.bf16.msra.mxu0 %v4467
  %4734 = vmatprep.subr.bf16.mxu0 %v4466
  %4735 = vmatpush2.bf16.msra.mxu0 %v4465
  %4736 = vmatprep.subr.bf16.mxu0 %v4464
  %4737 = vmatpush2.bf16.msra.mxu0 %v4463
  %4738 = vmatprep.subr.bf16.mxu0 %v4462
  %4739 = vmatpush2.bf16.msra.mxu0 %v4461
  %4740 = vmatprep.subr.bf16.mxu0 %v4460
  %4741 = vmatpush2.bf16.msra.mxu0 %v4459
  %4742 = vmatprep.subr.bf16.mxu0 %v4458
  %4743 = vmatpush2.bf16.msra.mxu0 %v4457
  %4744 = vmatprep.subr.bf16.mxu0 %v4456
  %4745 = vmatpush2.bf16.msra.mxu0 %v4455
  %4746 = vmatprep.mubr.bf16.mxu0 %v3994
  %4747 = vmatmul.mubr.bf16.gmra.mxu0 %v3993
  %v4748 = vpop.f32.mrf.mxu0
  %v4749 = vadd.f32 %v4698, %v4748
  %v4750 = vpop.f32.mrf.mxu0
  %v4751 = vadd.f32 %v4700, %v4750
  %v4752 = vpop.f32.mrf.mxu0
  %v4753 = vadd.f32 %v4702, %v4752
  %v4754 = vpop.f32.mrf.mxu0
  %v4755 = vadd.f32 %v4704, %v4754
  %4756 = vmatprep.mubr.bf16.mxu0 %v4002
  %4757 = vmatmul.mubr.bf16.gmra.mxu0 %v4001
  %v4758 = vpop.f32.mrf.mxu0
  %v4759 = vadd.f32 %v4708, %v4758
  %v4760 = vpop.f32.mrf.mxu0
  %v4761 = vadd.f32 %v4710, %v4760
  %v4762 = vpop.f32.mrf.mxu0
  %v4763 = vpop.f32.mrf.mxu0
  %4764 = vdwg.mxu0
  %4765 = vmatprep.subr.bf16.mxu0 %v4486
  %4766 = vmatpush1.bf16.msra.mxu0 %v4485
  %4767 = vmatprep.subr.bf16.mxu0 %v4484
  %4768 = vmatpush1.bf16.msra.mxu0 %v4483
  %4769 = vmatprep.subr.bf16.mxu0 %v4482
  %4770 = vmatpush1.bf16.msra.mxu0 %v4481
  %4771 = vmatprep.subr.bf16.mxu0 %v4480
  %4772 = vmatpush1.bf16.msra.mxu0 %v4479
  %4773 = vmatprep.subr.bf16.mxu0 %v4478
  %4774 = vmatpush1.bf16.msra.mxu0 %v4477
  %4775 = vmatprep.subr.bf16.mxu0 %v4476
  %4776 = vmatpush1.bf16.msra.mxu0 %v4475
  %4777 = vmatprep.subr.bf16.mxu0 %v4474
  %4778 = vmatpush1.bf16.msra.mxu0 %v4473
  %4779 = vmatprep.subr.bf16.mxu0 %v4472
  %4780 = vmatpush1.bf16.msra.mxu0 %v4471
  %4781 = vmatprep.subr.bf16.mxu0 %v4502
  %4782 = vmatpush2.bf16.msra.mxu0 %v4501
  %4783 = vmatprep.subr.bf16.mxu0 %v4500
  %4784 = vmatpush2.bf16.msra.mxu0 %v4499
  %4785 = vmatprep.subr.bf16.mxu0 %v4498
  %4786 = vmatpush2.bf16.msra.mxu0 %v4497
  %4787 = vmatprep.subr.bf16.mxu0 %v4496
  %4788 = vmatpush2.bf16.msra.mxu0 %v4495
  %4789 = vmatprep.subr.bf16.mxu0 %v4494
  %4790 = vmatpush2.bf16.msra.mxu0 %v4493
  %4791 = vmatprep.subr.bf16.mxu0 %v4492
  %4792 = vmatpush2.bf16.msra.mxu0 %v4491
  %4793 = vmatprep.subr.bf16.mxu0 %v4490
  %4794 = vmatpush2.bf16.msra.mxu0 %v4489
  %4795 = vmatprep.subr.bf16.mxu0 %v4488
  %4796 = vmatpush2.bf16.msra.mxu0 %v4487
  %4797 = vmatprep.mubr.bf16.mxu0 %v3996
  %4798 = vmatmul.mubr.bf16.gmra.mxu0 %v3995
  %v4799 = vpop.f32.mrf.mxu0
  %v4800 = vadd.f32 %v4749, %v4799
  %v4801 = vpop.f32.mrf.mxu0
  %v4802 = vadd.f32 %v4751, %v4801
  %v4803 = vpop.f32.mrf.mxu0
  %v4804 = vadd.f32 %v4753, %v4803
  %v4805 = vpop.f32.mrf.mxu0
  %v4806 = vadd.f32 %v4755, %v4805
  %4807 = vmatprep.mubr.bf16.mxu0 %v4004
  %4808 = vmatmul.mubr.bf16.gmra.mxu0 %v4003
  %v4809 = vpop.f32.mrf.mxu0
  %v4810 = vadd.f32 %v4759, %v4809
  %v4811 = vpop.f32.mrf.mxu0
  %v4812 = vadd.f32 %v4761, %v4811
  %v4813 = vpop.f32.mrf.mxu0
  %v4814 = vpop.f32.mrf.mxu0
  %4815 = vdwg.mxu0
  %4816 = vmatprep.subr.bf16.mxu0 %v4518
  %4817 = vmatpush1.bf16.msra.mxu0 %v4517
  %4818 = vmatprep.subr.bf16.mxu0 %v4516
  %4819 = vmatpush1.bf16.msra.mxu0 %v4515
  %4820 = vmatprep.subr.bf16.mxu0 %v4514
  %4821 = vmatpush1.bf16.msra.mxu0 %v4513
  %4822 = vmatprep.subr.bf16.mxu0 %v4512
  %4823 = vmatpush1.bf16.msra.mxu0 %v4511
  %4824 = vmatprep.subr.bf16.mxu0 %v4510
  %4825 = vmatpush1.bf16.msra.mxu0 %v4509
  %4826 = vmatprep.subr.bf16.mxu0 %v4508
  %4827 = vmatpush1.bf16.msra.mxu0 %v4507
  %4828 = vmatprep.subr.bf16.mxu0 %v4506
  %4829 = vmatpush1.bf16.msra.mxu0 %v4505
  %4830 = vmatprep.subr.bf16.mxu0 %v4504
  %4831 = vmatpush1.bf16.msra.mxu0 %v4503
  %4832 = vmatprep.subr.bf16.mxu0 %v4534
  %4833 = vmatpush2.bf16.msra.mxu0 %v4533
  %4834 = vmatprep.subr.bf16.mxu0 %v4532
  %4835 = vmatpush2.bf16.msra.mxu0 %v4531
  %4836 = vmatprep.subr.bf16.mxu0 %v4530
  %4837 = vmatpush2.bf16.msra.mxu0 %v4529
  %4838 = vmatprep.subr.bf16.mxu0 %v4528
  %4839 = vmatpush2.bf16.msra.mxu0 %v4527
  %4840 = vmatprep.subr.bf16.mxu0 %v4526
  %4841 = vmatpush2.bf16.msra.mxu0 %v4525
  %4842 = vmatprep.subr.bf16.mxu0 %v4524
  %4843 = vmatpush2.bf16.msra.mxu0 %v4523
  %4844 = vmatprep.subr.bf16.mxu0 %v4522
  %4845 = vmatpush2.bf16.msra.mxu0 %v4521
  %4846 = vmatprep.subr.bf16.mxu0 %v4520
  %4847 = vmatpush2.bf16.msra.mxu0 %v4519
  %4848 = vmatprep.mubr.bf16.mxu0 %v3998
  %4849 = vmatmul.mubr.bf16.gmra.mxu0 %v3997
  %v4850 = vpop.f32.mrf.mxu0
  %v4851 = vadd.f32 %v4800, %v4850
  %v4852 = vpop.f32.mrf.mxu0
  %v4853 = vadd.f32 %v4802, %v4852
  %v4854 = vpop.f32.mrf.mxu0
  %v4855 = vadd.f32 %v4804, %v4854
  %v4856 = vpop.f32.mrf.mxu0
  %v4857 = vadd.f32 %v4806, %v4856
  %4858 = vmatprep.mubr.bf16.mxu0 %v4006
  %4859 = vmatmul.mubr.bf16.gmra.mxu0 %v4005
  %v4860 = vpop.f32.mrf.mxu0
  %v4861 = vadd.f32 %v4810, %v4860
  %v4862 = vpop.f32.mrf.mxu0
  %v4863 = vadd.f32 %v4812, %v4862
  %v4864 = vpop.f32.mrf.mxu0
  %v4865 = vpop.f32.mrf.mxu0
  %4866 = vdwg.mxu0
  %v4867 = vxor.u32 %v4851, 2147483648
  %v4868 = vxor.u32 %v4853, 2147483648
  %v4869 = vxor.u32 %v4855, 2147483648
  %v4870 = vxor.u32 %v4857, 2147483648
  %v4871 = vxor.u32 %v4861, 2147483648
  %v4872 = vxor.u32 %v4863, 2147483648
  %v4873 = vmul.f32 %v4867, 1.442695
  %v4874 = vpow.pop %v4873
  %v4875 = vmul.f32 %v4868, 1.442695
  %v4876 = vpow.pop %v4875
  %v4877 = vmul.f32 %v4869, 1.442695
  %v4878 = vpow.pop %v4877
  %v4879 = vmul.f32 %v4870, 1.442695
  %v4880 = vpow.pop %v4879
  %v4881 = vmul.f32 %v4871, 1.442695
  %v4882 = vpow.pop %v4881
  %v4883 = vmul.f32 %v4872, 1.442695
  %v4884 = vpow.pop %v4883
  %v4885 = vadd.f32 %v4874, 1.0
  %v4886 = vadd.f32 %v4876, 1.0
  %v4887 = vadd.f32 %v4878, 1.0
  %v4888 = vadd.f32 %v4880, 1.0
  %v4889 = vadd.f32 %v4882, 1.0
  %v4890 = vadd.f32 %v4884, 1.0
  %v4891 = vrcp.pop %v4885
  %v4892 = vmul.f32 1.0, %v4891
  %v4893 = vrcp.pop %v4886
  %v4894 = vmul.f32 1.0, %v4893
  %v4895 = vrcp.pop %v4887
  %v4896 = vmul.f32 1.0, %v4895
  %v4897 = vrcp.pop %v4888
  %v4898 = vmul.f32 1.0, %v4897
  %v4899 = vrcp.pop %v4889
  %v4900 = vmul.f32 1.0, %v4899
  %v4901 = vrcp.pop %v4890
  %v4902 = vmul.f32 1.0, %v4901
  %v4903 = vmul.f32 %v4851, %v4892
  %v4904 = vmul.f32 %v4853, %v4894
  %v4905 = vmul.f32 %v4855, %v4896
  %v4906 = vmul.f32 %v4857, %v4898
  %v4907 = vmul.f32 %v4861, %v4900
  %v4908 = vmul.f32 %v4863, %v4902
  %v4909 = vpack.c.bf16 %v4905, %v4903
  %v4910 = vpack.c.bf16 %v4906, %v4904
  %v4911 = vpack.c.bf16 %v4907, %v4907
  %v4912 = vpack.c.bf16 %v4908, %v4908
  %v4917 = vunpack.c.l.b16 %v4909
  %v4918 = vunpack.c.l.b16 %v4910
  %v4919 = vunpack.c.h.b16 %v4909
  %v4920 = vunpack.c.h.b16 %v4910
  %v4921 = vunpack.c.l.b16 %v4911
  %v4922 = vunpack.c.l.b16 %v4912
  %v4923 = vpack.c.b16 %v4917, %v4917
  %v4924 = vpack.c.b16 %v4918, %v4918
  %v4926 = vpack.c.b16 %v4919, %v4919
  %v4927 = vpack.c.b16 %v4920, %v4920
  %4928 = vrot.lane.b32.xlu0 %v4926, 64
  %v4929 = vpop.permute.xlu0 %4928
  %4930 = vrot.lane.b32.xlu0 %v4927, 64
  %v4931 = vpop.permute.xlu0 %4930
  %vm4932 = vcmask 523264
  %v4933 = vsel %vm4932, %v4929, %v4931
  %v4935 = vpack.c.b16 %v4921, %v4921
  %v4936 = vpack.c.b16 %v4922, %v4922
  %v4940 = vsel %vm312, %v4924, %v4929
  %v4942 = vld [vmem:[%s5] sm:$0xf]
  %v4943 = vld [vmem:[%s5 + $0x4] sm:$0xf]
  %v4944 = vld [vmem:[%s5 + $0x8] sm:$0xf]
  %v4945 = vld [vmem:[%s5 + $0xc] sm:$0xf]
  %v4946 = vld [vmem:[%s5 + $0x10] sm:$0xf]
  %v4947 = vld [vmem:[%s5 + $0x14] sm:$0xf]
  %v4948 = vld [vmem:[%s5 + $0x18] sm:$0xf]
  %v4949 = vld [vmem:[%s5 + $0x1c] sm:$0xf]
  %v4950 = vld [vmem:[%s5 + $0x20] sm:$0xf]
  %v4951 = vld [vmem:[%s5 + $0x24] sm:$0xf]
  %v4952 = vld [vmem:[%s5 + $0x28] sm:$0xf]
  %v4953 = vld [vmem:[%s5 + $0x2c] sm:$0xf]
  %v4954 = vld [vmem:[%s5 + $0x30] sm:$0xf]
  %v4955 = vld [vmem:[%s5 + $0x34] sm:$0xf]
  %v4956 = vld [vmem:[%s5 + $0x38] sm:$0xf]
  %v4957 = vld [vmem:[%s5 + $0x3c] sm:$0xf]
  %v4958 = vld [vmem:[%s5 + $0x40] sm:$0xf]
  %v4959 = vld [vmem:[%s5 + $0x44] sm:$0xf]
  %v4960 = vld [vmem:[%s5 + $0x48] sm:$0xf]
  %v4961 = vld [vmem:[%s5 + $0x4c] sm:$0xf]
  %v4962 = vld [vmem:[%s5 + $0x50] sm:$0xf]
  %v4963 = vld [vmem:[%s5 + $0x54] sm:$0xf]
  %v4964 = vld [vmem:[%s5 + $0x58] sm:$0xf]
  %v4965 = vld [vmem:[%s5 + $0x5c] sm:$0xf]
  %v4966 = vld [vmem:[%s5 + $0x60] sm:$0xf]
  %v4967 = vld [vmem:[%s5 + $0x64] sm:$0xf]
  %v4968 = vld [vmem:[%s5 + $0x68] sm:$0xf]
  %v4969 = vld [vmem:[%s5 + $0x6c] sm:$0xf]
  %v4970 = vld [vmem:[%s5 + $0x70] sm:$0xf]
  %v4971 = vld [vmem:[%s5 + $0x74] sm:$0xf]
  %v4972 = vld [vmem:[%s5 + $0x78] sm:$0xf]
  %v4973 = vld [vmem:[%s5 + $0x7c] sm:$0xf]
  %v4974 = vld [vmem:[%s5 + $0x80] sm:$0xf]
  %v4975 = vld [vmem:[%s5 + $0x84] sm:$0xf]
  %v4976 = vld [vmem:[%s5 + $0x88] sm:$0xf]
  %v4977 = vld [vmem:[%s5 + $0x8c] sm:$0xf]
  %v4978 = vld [vmem:[%s5 + $0x90] sm:$0xf]
  %v4979 = vld [vmem:[%s5 + $0x94] sm:$0xf]
  %v4980 = vld [vmem:[%s5 + $0x98] sm:$0xf]
  %v4981 = vld [vmem:[%s5 + $0x9c] sm:$0xf]
  %v4982 = vld [vmem:[%s5 + $0xa0] sm:$0xf]
  %v4983 = vld [vmem:[%s5 + $0xa4] sm:$0xf]
  %v4984 = vld [vmem:[%s5 + $0xa8] sm:$0xf]
  %v4985 = vld [vmem:[%s5 + $0xac] sm:$0xf]
  %v4986 = vld [vmem:[%s5 + $0xb0] sm:$0xf]
  %v4987 = vld [vmem:[%s5 + $0xb4] sm:$0xf]
  %v4988 = vld [vmem:[%s5 + $0xb8] sm:$0xf]
  %v4989 = vld [vmem:[%s5 + $0xbc] sm:$0xf]
  %v4990 = vld [vmem:[%s5 + $0xc0] sm:$0xf]
  %v4991 = vld [vmem:[%s5 + $0xc4] sm:$0xf]
  %v4992 = vld [vmem:[%s5 + $0xc8] sm:$0xf]
  %v4993 = vld [vmem:[%s5 + $0xcc] sm:$0xf]
  %v4994 = vld [vmem:[%s5 + $0xd0] sm:$0xf]
  %v4995 = vld [vmem:[%s5 + $0xd4] sm:$0xf]
  %v4996 = vld [vmem:[%s5 + $0xd8] sm:$0xf]
  %v4997 = vld [vmem:[%s5 + $0xdc] sm:$0xf]
  %v4998 = vld [vmem:[%s5 + $0xe0] sm:$0xf]
  %v4999 = vld [vmem:[%s5 + $0xe4] sm:$0xf]
  %v5000 = vld [vmem:[%s5 + $0xe8] sm:$0xf]
  %v5001 = vld [vmem:[%s5 + $0xec] sm:$0xf]
  %v5002 = vld [vmem:[%s5 + $0xf0] sm:$0xf]
  %v5003 = vld [vmem:[%s5 + $0xf4] sm:$0xf]
  %v5004 = vld [vmem:[%s5 + $0xf8] sm:$0xf]
  %v5005 = vld [vmem:[%s5 + $0xfc] sm:$0xf]
  %v5006 = vld [vmem:[%s5 + $0x100] sm:$0xf]
  %v5007 = vld [vmem:[%s5 + $0x104] sm:$0xf]
  %v5008 = vld [vmem:[%s5 + $0x108] sm:$0xf]
  %v5009 = vld [vmem:[%s5 + $0x10c] sm:$0xf]
  %v5010 = vld [vmem:[%s5 + $0x110] sm:$0xf]
  %v5011 = vld [vmem:[%s5 + $0x114] sm:$0xf]
  %v5012 = vld [vmem:[%s5 + $0x118] sm:$0xf]
  %v5013 = vld [vmem:[%s5 + $0x11c] sm:$0xf]
  %v5014 = vld [vmem:[%s6] sm:$0x1]
  %v5016 = vlaneseq
  %v5017 = vshrl.u32 %v5016, 7
  %v5018 = vsub.s32 0, %v5017
  %v5019 = vrot.slane %v5014, %v5018
  %v5093 = vunpack.c.l.b16 %v4942
  %v5094 = vunpack.c.l.b16 %v4943
  %v5095 = vunpack.c.l.b16 %v4944
  %v5096 = vunpack.c.l.b16 %v4945
  %v5097 = vunpack.c.l.b16 %v4946
  %v5098 = vunpack.c.l.b16 %v4947
  %v5099 = vunpack.c.l.b16 %v4948
  %v5100 = vunpack.c.l.b16 %v4949
  %v5101 = vunpack.c.l.b16 %v4950
  %v5102 = vunpack.c.l.b16 %v4951
  %v5103 = vunpack.c.l.b16 %v4952
  %v5104 = vunpack.c.l.b16 %v4953
  %v5105 = vunpack.c.l.b16 %v4954
  %v5106 = vunpack.c.l.b16 %v4955
  %v5107 = vunpack.c.l.b16 %v4956
  %v5108 = vunpack.c.l.b16 %v4957
  %v5109 = vunpack.c.l.b16 %v4958
  %v5110 = vunpack.c.l.b16 %v4959
  %v5111 = vunpack.c.l.b16 %v4960
  %v5112 = vunpack.c.l.b16 %v4961
  %v5113 = vunpack.c.l.b16 %v4962
  %v5114 = vunpack.c.l.b16 %v4963
  %v5115 = vunpack.c.l.b16 %v4964
  %v5116 = vunpack.c.l.b16 %v4965
  %v5117 = vunpack.c.l.b16 %v4966
  %v5118 = vunpack.c.l.b16 %v4967
  %v5119 = vunpack.c.l.b16 %v4968
  %v5120 = vunpack.c.l.b16 %v4969
  %v5121 = vunpack.c.l.b16 %v4970
  %v5122 = vunpack.c.l.b16 %v4971
  %v5123 = vunpack.c.l.b16 %v4972
  %v5124 = vunpack.c.l.b16 %v4973
  %v5125 = vunpack.c.l.b16 %v4974
  %v5126 = vunpack.c.l.b16 %v4975
  %v5127 = vunpack.c.l.b16 %v4976
  %v5128 = vunpack.c.l.b16 %v4977
  %v5129 = vunpack.c.l.b16 %v4978
  %v5130 = vunpack.c.l.b16 %v4979
  %v5131 = vunpack.c.l.b16 %v4980
  %v5132 = vunpack.c.l.b16 %v4981
  %v5133 = vunpack.c.l.b16 %v4982
  %v5134 = vunpack.c.l.b16 %v4983
  %v5135 = vunpack.c.l.b16 %v4984
  %v5136 = vunpack.c.l.b16 %v4985
  %v5137 = vunpack.c.l.b16 %v4986
  %v5138 = vunpack.c.l.b16 %v4987
  %v5139 = vunpack.c.l.b16 %v4988
  %v5140 = vunpack.c.l.b16 %v4989
  %v5141 = vunpack.c.l.b16 %v4990
  %v5142 = vunpack.c.l.b16 %v4991
  %v5143 = vunpack.c.l.b16 %v4992
  %v5144 = vunpack.c.l.b16 %v4993
  %v5145 = vunpack.c.l.b16 %v4994
  %v5146 = vunpack.c.l.b16 %v4995
  %v5147 = vunpack.c.l.b16 %v4996
  %v5148 = vunpack.c.l.b16 %v4997
  %v5149 = vunpack.c.l.b16 %v4998
  %v5150 = vunpack.c.l.b16 %v4999
  %v5151 = vunpack.c.l.b16 %v5000
  %v5152 = vunpack.c.l.b16 %v5001
  %v5153 = vunpack.c.l.b16 %v5002
  %v5154 = vunpack.c.l.b16 %v5003
  %v5155 = vunpack.c.l.b16 %v5004
  %v5156 = vunpack.c.l.b16 %v5005
  %v5157 = vunpack.c.l.b16 %v5006
  %v5158 = vunpack.c.l.b16 %v5007
  %v5159 = vunpack.c.l.b16 %v5008
  %v5160 = vunpack.c.l.b16 %v5009
  %v5161 = vunpack.c.l.b16 %v5010
  %v5162 = vunpack.c.l.b16 %v5011
  %v5163 = vunpack.c.l.b16 %v5012
  %v5164 = vunpack.c.l.b16 %v5013
  %v5165 = vpack.c.b16 %v5094, %v5093
  %v5166 = vpack.c.b16 %v5096, %v5095
  %v5167 = vpack.c.b16 %v5098, %v5097
  %v5168 = vpack.c.b16 %v5100, %v5099
  %v5169 = vpack.c.b16 %v5102, %v5101
  %v5170 = vpack.c.b16 %v5104, %v5103
  %v5171 = vpack.c.b16 %v5106, %v5105
  %v5172 = vpack.c.b16 %v5108, %v5107
  %v5173 = vpack.c.b16 %v5110, %v5109
  %v5174 = vpack.c.b16 %v5112, %v5111
  %v5175 = vpack.c.b16 %v5114, %v5113
  %v5176 = vpack.c.b16 %v5116, %v5115
  %v5177 = vpack.c.b16 %v5118, %v5117
  %v5178 = vpack.c.b16 %v5120, %v5119
  %v5179 = vpack.c.b16 %v5122, %v5121
  %v5180 = vpack.c.b16 %v5124, %v5123
  %v5181 = vpack.c.b16 %v5126, %v5125
  %v5182 = vpack.c.b16 %v5128, %v5127
  %v5183 = vpack.c.b16 %v5130, %v5129
  %v5184 = vpack.c.b16 %v5132, %v5131
  %v5185 = vpack.c.b16 %v5134, %v5133
  %v5186 = vpack.c.b16 %v5136, %v5135
  %v5187 = vpack.c.b16 %v5138, %v5137
  %v5188 = vpack.c.b16 %v5140, %v5139
  %v5189 = vpack.c.b16 %v5142, %v5141
  %v5190 = vpack.c.b16 %v5144, %v5143
  %v5191 = vpack.c.b16 %v5146, %v5145
  %v5192 = vpack.c.b16 %v5148, %v5147
  %v5193 = vpack.c.b16 %v5150, %v5149
  %v5194 = vpack.c.b16 %v5152, %v5151
  %v5195 = vpack.c.b16 %v5154, %v5153
  %v5196 = vpack.c.b16 %v5156, %v5155
  %v5197 = vpack.c.b16 %v5158, %v5157
  %v5198 = vpack.c.b16 %v5160, %v5159
  %v5199 = vpack.c.b16 %v5162, %v5161
  %v5200 = vpack.c.b16 %v5164, %v5163
  %v5238 = vsel %vm312, %v4936, 0
  %5240 = vmatprep.subr.bf16.mxu0 0
  %5241 = vmatpush1.bf16.msra.mxu0 %v5172
  %5242 = vmatprep.subr.bf16.mxu0 0
  %5243 = vmatpush1.bf16.msra.mxu0 %v5171
  %5244 = vmatprep.subr.bf16.mxu0 0
  %5245 = vmatpush1.bf16.msra.mxu0 %v5170
  %5246 = vmatprep.subr.bf16.mxu0 0
  %5247 = vmatpush1.bf16.msra.mxu0 %v5169
  %5248 = vmatprep.subr.bf16.mxu0 0
  %5249 = vmatpush1.bf16.msra.mxu0 %v5168
  %5250 = vmatprep.subr.bf16.mxu0 0
  %5251 = vmatpush1.bf16.msra.mxu0 %v5167
  %5252 = vmatprep.subr.bf16.mxu0 0
  %5253 = vmatpush1.bf16.msra.mxu0 %v5166
  %5254 = vmatprep.subr.bf16.mxu0 0
  %5255 = vmatpush1.bf16.msra.mxu0 %v5165
  %5256 = vmatprep.subr.bf16.mxu0 0
  %5257 = vmatpush2.bf16.msra.mxu0 %v5180
  %5258 = vmatprep.subr.bf16.mxu0 0
  %5259 = vmatpush2.bf16.msra.mxu0 %v5179
  %5260 = vmatprep.subr.bf16.mxu0 0
  %5261 = vmatpush2.bf16.msra.mxu0 %v5178
  %5262 = vmatprep.subr.bf16.mxu0 0
  %5263 = vmatpush2.bf16.msra.mxu0 %v5177
  %5264 = vmatprep.subr.bf16.mxu0 0
  %5265 = vmatpush2.bf16.msra.mxu0 %v5176
  %5266 = vmatprep.subr.bf16.mxu0 0
  %5267 = vmatpush2.bf16.msra.mxu0 %v5175
  %5268 = vmatprep.subr.bf16.mxu0 0
  %5269 = vmatpush2.bf16.msra.mxu0 %v5174
  %5270 = vmatprep.subr.bf16.mxu0 0
  %5271 = vmatpush2.bf16.msra.mxu0 %v5173
  %5272 = vmatprep.mubr.bf16.mxu0 %v4940
  %5273 = vmatmul.mubr.bf16.gmra.mxu0 %v4923
  %v5274 = vpop.f32.mrf.mxu0
  %v5275 = vadd.f32 %v5019, %v5274
  %v5276 = vpop.f32.mrf.mxu0
  %v5277 = vpop.f32.mrf.mxu0
  %v5278 = vpop.f32.mrf.mxu0
  %5279 = vdwg.mxu0
  %5280 = vmatprep.subr.bf16.mxu0 0
  %5281 = vmatpush1.bf16.msra.mxu0 %v5188
  %5282 = vmatprep.subr.bf16.mxu0 0
  %5283 = vmatpush1.bf16.msra.mxu0 %v5187
  %5284 = vmatprep.subr.bf16.mxu0 0
  %5285 = vmatpush1.bf16.msra.mxu0 %v5186
  %5286 = vmatprep.subr.bf16.mxu0 0
  %5287 = vmatpush1.bf16.msra.mxu0 %v5185
  %5288 = vmatprep.subr.bf16.mxu0 0
  %5289 = vmatpush1.bf16.msra.mxu0 %v5184
  %5290 = vmatprep.subr.bf16.mxu0 0
  %5291 = vmatpush1.bf16.msra.mxu0 %v5183
  %5292 = vmatprep.subr.bf16.mxu0 0
  %5293 = vmatpush1.bf16.msra.mxu0 %v5182
  %5294 = vmatprep.subr.bf16.mxu0 0
  %5295 = vmatpush1.bf16.msra.mxu0 %v5181
  %5296 = vmatprep.subr.bf16.mxu0 0
  %5297 = vmatpush2.bf16.msra.mxu0 %v5196
  %5298 = vmatprep.subr.bf16.mxu0 0
  %5299 = vmatpush2.bf16.msra.mxu0 %v5195
  %5300 = vmatprep.subr.bf16.mxu0 0
  %5301 = vmatpush2.bf16.msra.mxu0 %v5194
  %5302 = vmatprep.subr.bf16.mxu0 0
  %5303 = vmatpush2.bf16.msra.mxu0 %v5193
  %5304 = vmatprep.subr.bf16.mxu0 0
  %5305 = vmatpush2.bf16.msra.mxu0 %v5192
  %5306 = vmatprep.subr.bf16.mxu0 0
  %5307 = vmatpush2.bf16.msra.mxu0 %v5191
  %5308 = vmatprep.subr.bf16.mxu0 0
  %5309 = vmatpush2.bf16.msra.mxu0 %v5190
  %5310 = vmatprep.subr.bf16.mxu0 0
  %5311 = vmatpush2.bf16.msra.mxu0 %v5189
  %5312 = vmatprep.mubr.bf16.mxu0 %v4935
  %5313 = vmatmul.mubr.bf16.gmra.mxu0 %v4933
  %v5314 = vpop.f32.mrf.mxu0
  %v5315 = vadd.f32 %v5275, %v5314
  %v5316 = vpop.f32.mrf.mxu0
  %v5317 = vpop.f32.mrf.mxu0
  %v5318 = vpop.f32.mrf.mxu0
  %5319 = vdwg.mxu0
  %5320 = vmatprep.subr.bf16.mxu0 0
  %5321 = vmatpush1.bf16.msra.mxu0 0
  %5322 = vmatprep.subr.bf16.mxu0 0
  %5323 = vmatpush1.bf16.msra.mxu0 0
  %5324 = vmatprep.subr.bf16.mxu0 0
  %5325 = vmatpush1.bf16.msra.mxu0 0
  %5326 = vmatprep.subr.bf16.mxu0 0
  %5327 = vmatpush1.bf16.msra.mxu0 0
  %5328 = vmatprep.subr.bf16.mxu0 0
  %5329 = vmatpush1.bf16.msra.mxu0 %v5200
  %5330 = vmatprep.subr.bf16.mxu0 0
  %5331 = vmatpush1.bf16.msra.mxu0 %v5199
  %5332 = vmatprep.subr.bf16.mxu0 0
  %5333 = vmatpush1.bf16.msra.mxu0 %v5198
  %5334 = vmatprep.subr.bf16.mxu0 0
  %5335 = vmatpush1.bf16.msra.mxu0 %v5197
  %5336 = vmatprep.subr.bf16.mxu0 0
  %5337 = vmatpush2.bf16.msra.mxu0 0
  %5338 = vmatprep.subr.bf16.mxu0 0
  %5339 = vmatpush2.bf16.msra.mxu0 0
  %5340 = vmatprep.subr.bf16.mxu0 0
  %5341 = vmatpush2.bf16.msra.mxu0 0
  %5342 = vmatprep.subr.bf16.mxu0 0
  %5343 = vmatpush2.bf16.msra.mxu0 0
  %5344 = vmatprep.subr.bf16.mxu0 0
  %5345 = vmatpush2.bf16.msra.mxu0 0
  %5346 = vmatprep.subr.bf16.mxu0 0
  %5347 = vmatpush2.bf16.msra.mxu0 0
  %5348 = vmatprep.subr.bf16.mxu0 0
  %5349 = vmatpush2.bf16.msra.mxu0 0
  %5350 = vmatprep.subr.bf16.mxu0 0
  %5351 = vmatpush2.bf16.msra.mxu0 0
  %5352 = vmatprep.mubr.bf16.mxu0 0
  %5353 = vmatmul.mubr.bf16.gmra.mxu0 %v5238
  %v5354 = vpop.f32.mrf.mxu0
  %v5355 = vadd.f32 %v5315, %v5354
  %v5356 = vpop.f32.mrf.mxu0
  %v5357 = vpop.f32.mrf.mxu0
  %v5358 = vpop.f32.mrf.mxu0
  %5359 = vdwg.mxu0
  %v5360 = vxor.u32 %v5355, 2147483648
  %v5361 = vmul.f32 %v5360, 1.442695
  %v5362 = vpow.pop %v5361
  %v5363 = vadd.f32 %v5362, 1.0
  %v5364 = vrcp.pop %v5363
  %v5365 = vmul.f32 1.0, %v5364
  %v5366 = vmul.f32 %v5355, %v5365
  %v5367 = vpack.c.bf16 %v5366, %v5366
  %v5368 = vld [vmem:[%s7] sm:$0xff]
  %v5369 = vld [vmem:[%s7 + $0x8] sm:$0xff]
  %v5370 = vld [vmem:[%s7 + $0x10] sm:$0xff]
  %v5371 = vld [vmem:[%s7 + $0x18] sm:$0xff]
  %v5372 = vld [vmem:[%s7 + $0x20] sm:$0xff]
  %v5373 = vld [vmem:[%s7 + $0x28] sm:$0xff]
  %v5374 = vld [vmem:[%s7 + $0x30] sm:$0xff]
  %v5375 = vld [vmem:[%s7 + $0x38] sm:$0xff]
  %v5376 = vld [vmem:[%s7 + $0x40] sm:$0xff]
  %v5377 = vld [vmem:[%s7 + $0x48] sm:$0xff]
  %v5378 = vld [vmem:[%s7 + $0x50] sm:$0xff]
  %v5379 = vld [vmem:[%s7 + $0x58] sm:$0xff]
  %v5380 = vld [vmem:[%s7 + $0x60] sm:$0xff]
  %v5381 = vld [vmem:[%s7 + $0x68] sm:$0xff]
  %v5382 = vld [vmem:[%s7 + $0x70] sm:$0xff]
  %v5383 = vld [vmem:[%s7 + $0x78] sm:$0xff]
  %v5384 = vld [vmem:[%s8] sm:$0xf]
  %v5386 = vlaneseq
  %v5387 = vshrl.u32 %v5386, 7
  %v5388 = vsub.s32 0, %v5387
  %v5389 = vrot.slane %v5384, %v5388
  %v5390 = vlaneseq
  %v5391 = vshrl.u32 %v5390, 7
  %v5392 = vsub.s32 1, %v5391
  %v5393 = vrot.slane %v5384, %v5392
  %v5394 = vlaneseq
  %v5395 = vshrl.u32 %v5394, 7
  %v5396 = vsub.s32 2, %v5395
  %v5397 = vrot.slane %v5384, %v5396
  %v5398 = vlaneseq
  %v5399 = vshrl.u32 %v5398, 7
  %v5400 = vsub.s32 3, %v5399
  %v5401 = vrot.slane %v5384, %v5400
  %v5422 = vunpack.c.l.b16 %v5368
  %v5423 = vunpack.c.h.b16 %v5368
  %v5424 = vunpack.c.l.b16 %v5369
  %v5425 = vunpack.c.h.b16 %v5369
  %v5426 = vunpack.c.l.b16 %v5370
  %v5427 = vunpack.c.h.b16 %v5370
  %v5428 = vunpack.c.l.b16 %v5371
  %v5429 = vunpack.c.h.b16 %v5371
  %v5430 = vunpack.c.l.b16 %v5372
  %v5431 = vunpack.c.h.b16 %v5372
  %v5432 = vunpack.c.l.b16 %v5373
  %v5433 = vunpack.c.h.b16 %v5373
  %v5434 = vunpack.c.l.b16 %v5374
  %v5435 = vunpack.c.h.b16 %v5374
  %v5436 = vunpack.c.l.b16 %v5375
  %v5437 = vunpack.c.h.b16 %v5375
  %v5438 = vunpack.c.l.b16 %v5376
  %v5439 = vunpack.c.h.b16 %v5376
  %v5440 = vunpack.c.l.b16 %v5377
  %v5441 = vunpack.c.h.b16 %v5377
  %v5442 = vunpack.c.l.b16 %v5378
  %v5443 = vunpack.c.h.b16 %v5378
  %v5444 = vunpack.c.l.b16 %v5379
  %v5445 = vunpack.c.h.b16 %v5379
  %v5446 = vunpack.c.l.b16 %v5380
  %v5447 = vunpack.c.h.b16 %v5380
  %v5448 = vunpack.c.l.b16 %v5381
  %v5449 = vunpack.c.h.b16 %v5381
  %v5450 = vunpack.c.l.b16 %v5382
  %v5451 = vunpack.c.h.b16 %v5382
  %v5452 = vunpack.c.l.b16 %v5383
  %v5453 = vunpack.c.h.b16 %v5383
  %v5454 = vpack.c.b16 %v5426, %v5422
  %v5455 = vpack.c.b16 %v5427, %v5423
  %v5456 = vpack.c.b16 %v5428, %v5424
  %v5457 = vpack.c.b16 %v5429, %v5425
  %v5458 = vpack.c.b16 %v5434, %v5430
  %v5459 = vpack.c.b16 %v5435, %v5431
  %v5460 = vpack.c.b16 %v5436, %v5432
  %v5461 = vpack.c.b16 %v5437, %v5433
  %v5462 = vpack.c.b16 %v5442, %v5438
  %v5463 = vpack.c.b16 %v5443, %v5439
  %v5464 = vpack.c.b16 %v5444, %v5440
  %v5465 = vpack.c.b16 %v5445, %v5441
  %v5466 = vpack.c.b16 %v5450, %v5446
  %v5467 = vpack.c.b16 %v5451, %v5447
  %v5468 = vpack.c.b16 %v5452, %v5448
  %v5469 = vpack.c.b16 %v5453, %v5449
  %v5487 = vsel %vm312, %v5367, 0
  %5489 = vmatprep.subr.bf16.mxu0 0
  %5490 = vmatpush1.bf16.msra.mxu0 0
  %5491 = vmatprep.subr.bf16.mxu0 0
  %5492 = vmatpush1.bf16.msra.mxu0 0
  %5493 = vmatprep.subr.bf16.mxu0 0
  %5494 = vmatpush1.bf16.msra.mxu0 0
  %5495 = vmatprep.subr.bf16.mxu0 0
  %5496 = vmatpush1.bf16.msra.mxu0 0
  %5497 = vmatprep.subr.bf16.mxu0 %v5467
  %5498 = vmatpush1.bf16.msra.mxu0 %v5466
  %5499 = vmatprep.subr.bf16.mxu0 %v5463
  %5500 = vmatpush1.bf16.msra.mxu0 %v5462
  %5501 = vmatprep.subr.bf16.mxu0 %v5459
  %5502 = vmatpush1.bf16.msra.mxu0 %v5458
  %5503 = vmatprep.subr.bf16.mxu0 %v5455
  %5504 = vmatpush1.bf16.msra.mxu0 %v5454
  %5505 = vmatprep.subr.bf16.mxu0 0
  %5506 = vmatpush2.bf16.msra.mxu0 0
  %5507 = vmatprep.subr.bf16.mxu0 0
  %5508 = vmatpush2.bf16.msra.mxu0 0
  %5509 = vmatprep.subr.bf16.mxu0 0
  %5510 = vmatpush2.bf16.msra.mxu0 0
  %5511 = vmatprep.subr.bf16.mxu0 0
  %5512 = vmatpush2.bf16.msra.mxu0 0
  %5513 = vmatprep.subr.bf16.mxu0 0
  %5514 = vmatpush2.bf16.msra.mxu0 0
  %5515 = vmatprep.subr.bf16.mxu0 0
  %5516 = vmatpush2.bf16.msra.mxu0 0
  %5517 = vmatprep.subr.bf16.mxu0 0
  %5518 = vmatpush2.bf16.msra.mxu0 0
  %5519 = vmatprep.subr.bf16.mxu0 0
  %5520 = vmatpush2.bf16.msra.mxu0 0
  %5521 = vmatprep.mubr.bf16.mxu0 0
  %5522 = vmatmul.mubr.bf16.gmra.mxu0 %v5487
  %v5523 = vpop.f32.mrf.mxu0
  %v5524 = vadd.f32 %v5389, %v5523
  %v5525 = vpop.f32.mrf.mxu0
  %v5526 = vadd.f32 %v5393, %v5525
  %v5527 = vpop.f32.mrf.mxu0
  %v5528 = vpop.f32.mrf.mxu0
  %5529 = vdwg.mxu0
  %5530 = vmatprep.subr.bf16.mxu0 0
  %5531 = vmatpush1.bf16.msra.mxu0 0
  %5532 = vmatprep.subr.bf16.mxu0 0
  %5533 = vmatpush1.bf16.msra.mxu0 0
  %5534 = vmatprep.subr.bf16.mxu0 0
  %5535 = vmatpush1.bf16.msra.mxu0 0
  %5536 = vmatprep.subr.bf16.mxu0 0
  %5537 = vmatpush1.bf16.msra.mxu0 0
  %5538 = vmatprep.subr.bf16.mxu0 %v5469
  %5539 = vmatpush1.bf16.msra.mxu0 %v5468
  %5540 = vmatprep.subr.bf16.mxu0 %v5465
  %5541 = vmatpush1.bf16.msra.mxu0 %v5464
  %5542 = vmatprep.subr.bf16.mxu0 %v5461
  %5543 = vmatpush1.bf16.msra.mxu0 %v5460
  %5544 = vmatprep.subr.bf16.mxu0 %v5457
  %5545 = vmatpush1.bf16.msra.mxu0 %v5456
  %5546 = vmatprep.subr.bf16.mxu0 0
  %5547 = vmatpush2.bf16.msra.mxu0 0
  %5548 = vmatprep.subr.bf16.mxu0 0
  %5549 = vmatpush2.bf16.msra.mxu0 0
  %5550 = vmatprep.subr.bf16.mxu0 0
  %5551 = vmatpush2.bf16.msra.mxu0 0
  %5552 = vmatprep.subr.bf16.mxu0 0
  %5553 = vmatpush2.bf16.msra.mxu0 0
  %5554 = vmatprep.subr.bf16.mxu0 0
  %5555 = vmatpush2.bf16.msra.mxu0 0
  %5556 = vmatprep.subr.bf16.mxu0 0
  %5557 = vmatpush2.bf16.msra.mxu0 0
  %5558 = vmatprep.subr.bf16.mxu0 0
  %5559 = vmatpush2.bf16.msra.mxu0 0
  %5560 = vmatprep.subr.bf16.mxu0 0
  %5561 = vmatpush2.bf16.msra.mxu0 0
  %5562 = vmatprep.mubr.bf16.mxu0 0
  %5563 = vmatmul.mubr.bf16.gmra.mxu0 %v5487
  %v5564 = vpop.f32.mrf.mxu0
  %v5565 = vadd.f32 %v5397, %v5564
  %v5566 = vpop.f32.mrf.mxu0
  %v5567 = vadd.f32 %v5401, %v5566
  %v5568 = vpop.f32.mrf.mxu0
  %v5569 = vpop.f32.mrf.mxu0
  %5570 = vdwg.mxu0
  %v5571 = vxor.u32 %v5524, 2147483648
  %v5572 = vxor.u32 %v5526, 2147483648
  %v5573 = vxor.u32 %v5565, 2147483648
  %v5574 = vxor.u32 %v5567, 2147483648
  %v5575 = vmul.f32 %v5571, 1.442695
  %v5576 = vpow.pop %v5575
  %v5577 = vmul.f32 %v5572, 1.442695
  %v5578 = vpow.pop %v5577
  %v5579 = vmul.f32 %v5573, 1.442695
  %v5580 = vpow.pop %v5579
  %v5581 = vmul.f32 %v5574, 1.442695
  %v5582 = vpow.pop %v5581
  %v5583 = vadd.f32 %v5576, 1.0
  %v5584 = vadd.f32 %v5578, 1.0
  %v5585 = vadd.f32 %v5580, 1.0
  %v5586 = vadd.f32 %v5582, 1.0
  %v5587 = vrcp.pop %v5583
  %v5588 = vmul.f32 1.0, %v5587
  %v5589 = vrcp.pop %v5584
  %v5590 = vmul.f32 1.0, %v5589
  %v5591 = vrcp.pop %v5585
  %v5592 = vmul.f32 1.0, %v5591
  %v5593 = vrcp.pop %v5586
  %v5594 = vmul.f32 1.0, %v5593
  %v5595 = vmul.f32 %v5524, %v5588
  %v5596 = vmul.f32 %v5526, %v5590
  %v5597 = vmul.f32 %v5565, %v5592
  %v5598 = vmul.f32 %v5567, %v5594
  %v5599 = vpack.c.bf16 %v5595, %v5595
  %v5600 = vpack.c.bf16 %v5596, %v5596
  %v5601 = vpack.c.bf16 %v5597, %v5597
  %v5602 = vpack.c.bf16 %v5598, %v5598
  %v5603 = vld [vmem:[%s9] sm:$0xf]
  %v5604 = vld [vmem:[%s9 + $0x4] sm:$0xf]
  %v5605 = vld [vmem:[%s9 + $0x8] sm:$0xf]
  %v5606 = vld [vmem:[%s9 + $0xc] sm:$0xf]
  %v5607 = vld [vmem:[%s9 + $0x10] sm:$0xf]
  %v5608 = vld [vmem:[%s9 + $0x14] sm:$0xf]
  %v5609 = vld [vmem:[%s9 + $0x18] sm:$0xf]
  %v5610 = vld [vmem:[%s9 + $0x1c] sm:$0xf]
  %v5611 = vld [vmem:[%s9 + $0x20] sm:$0xf]
  %v5612 = vld [vmem:[%s9 + $0x24] sm:$0xf]
  %v5613 = vld [vmem:[%s9 + $0x28] sm:$0xf]
  %v5614 = vld [vmem:[%s9 + $0x2c] sm:$0xf]
  %v5615 = vld [vmem:[%s9 + $0x30] sm:$0xf]
  %v5616 = vld [vmem:[%s9 + $0x34] sm:$0xf]
  %v5617 = vld [vmem:[%s9 + $0x38] sm:$0xf]
  %v5618 = vld [vmem:[%s9 + $0x3c] sm:$0xf]
  %v5619 = vld [vmem:[%s9 + $0x40] sm:$0xf]
  %v5620 = vld [vmem:[%s9 + $0x44] sm:$0xf]
  %v5621 = vld [vmem:[%s9 + $0x48] sm:$0xf]
  %v5622 = vld [vmem:[%s9 + $0x4c] sm:$0xf]
  %v5623 = vld [vmem:[%s9 + $0x50] sm:$0xf]
  %v5624 = vld [vmem:[%s9 + $0x54] sm:$0xf]
  %v5625 = vld [vmem:[%s9 + $0x58] sm:$0xf]
  %v5626 = vld [vmem:[%s9 + $0x5c] sm:$0xf]
  %v5627 = vld [vmem:[%s9 + $0x60] sm:$0xf]
  %v5628 = vld [vmem:[%s9 + $0x64] sm:$0xf]
  %v5629 = vld [vmem:[%s9 + $0x68] sm:$0xf]
  %v5630 = vld [vmem:[%s9 + $0x6c] sm:$0xf]
  %v5631 = vld [vmem:[%s9 + $0x70] sm:$0xf]
  %v5632 = vld [vmem:[%s9 + $0x74] sm:$0xf]
  %v5633 = vld [vmem:[%s9 + $0x78] sm:$0xf]
  %v5634 = vld [vmem:[%s9 + $0x7c] sm:$0xf]
  %v5635 = vld [vmem:[%s9 + $0x80] sm:$0xf]
  %v5636 = vld [vmem:[%s9 + $0x84] sm:$0xf]
  %v5637 = vld [vmem:[%s9 + $0x88] sm:$0xf]
  %v5638 = vld [vmem:[%s9 + $0x8c] sm:$0xf]
  %v5639 = vld [vmem:[%s9 + $0x90] sm:$0xf]
  %v5640 = vld [vmem:[%s9 + $0x94] sm:$0xf]
  %v5641 = vld [vmem:[%s9 + $0x98] sm:$0xf]
  %v5642 = vld [vmem:[%s9 + $0x9c] sm:$0xf]
  %v5643 = vld [vmem:[%s9 + $0xa0] sm:$0xf]
  %v5644 = vld [vmem:[%s9 + $0xa4] sm:$0xf]
  %v5645 = vld [vmem:[%s9 + $0xa8] sm:$0xf]
  %v5646 = vld [vmem:[%s9 + $0xac] sm:$0xf]
  %v5647 = vld [vmem:[%s9 + $0xb0] sm:$0xf]
  %v5648 = vld [vmem:[%s9 + $0xb4] sm:$0xf]
  %v5649 = vld [vmem:[%s9 + $0xb8] sm:$0xf]
  %v5650 = vld [vmem:[%s9 + $0xbc] sm:$0xf]
  %v5651 = vld [vmem:[%s9 + $0xc0] sm:$0xf]
  %v5652 = vld [vmem:[%s9 + $0xc4] sm:$0xf]
  %v5653 = vld [vmem:[%s9 + $0xc8] sm:$0xf]
  %v5654 = vld [vmem:[%s9 + $0xcc] sm:$0xf]
  %v5655 = vld [vmem:[%s9 + $0xd0] sm:$0xf]
  %v5656 = vld [vmem:[%s9 + $0xd4] sm:$0xf]
  %v5657 = vld [vmem:[%s9 + $0xd8] sm:$0xf]
  %v5658 = vld [vmem:[%s9 + $0xdc] sm:$0xf]
  %v5659 = vld [vmem:[%s9 + $0xe0] sm:$0xf]
  %v5660 = vld [vmem:[%s9 + $0xe4] sm:$0xf]
  %v5661 = vld [vmem:[%s9 + $0xe8] sm:$0xf]
  %v5662 = vld [vmem:[%s9 + $0xec] sm:$0xf]
  %v5663 = vld [vmem:[%s9 + $0xf0] sm:$0xf]
  %v5664 = vld [vmem:[%s9 + $0xf4] sm:$0xf]
  %v5665 = vld [vmem:[%s9 + $0xf8] sm:$0xf]
  %v5666 = vld [vmem:[%s9 + $0xfc] sm:$0xf]
  %v5667 = vld [vmem:[%s10] sm:$0x1]
  %v5669 = vlaneseq
  %v5670 = vshrl.u32 %v5669, 7
  %v5671 = vsub.s32 0, %v5670
  %v5672 = vrot.slane %v5667, %v5671
  %v5738 = vunpack.c.l.b16 %v5603
  %v5739 = vunpack.c.l.b16 %v5604
  %v5740 = vunpack.c.l.b16 %v5605
  %v5741 = vunpack.c.l.b16 %v5606
  %v5742 = vunpack.c.l.b16 %v5607
  %v5743 = vunpack.c.l.b16 %v5608
  %v5744 = vunpack.c.l.b16 %v5609
  %v5745 = vunpack.c.l.b16 %v5610
  %v5746 = vunpack.c.l.b16 %v5611
  %v5747 = vunpack.c.l.b16 %v5612
  %v5748 = vunpack.c.l.b16 %v5613
  %v5749 = vunpack.c.l.b16 %v5614
  %v5750 = vunpack.c.l.b16 %v5615
  %v5751 = vunpack.c.l.b16 %v5616
  %v5752 = vunpack.c.l.b16 %v5617
  %v5753 = vunpack.c.l.b16 %v5618
  %v5754 = vunpack.c.l.b16 %v5619
  %v5755 = vunpack.c.l.b16 %v5620
  %v5756 = vunpack.c.l.b16 %v5621
  %v5757 = vunpack.c.l.b16 %v5622
  %v5758 = vunpack.c.l.b16 %v5623
  %v5759 = vunpack.c.l.b16 %v5624
  %v5760 = vunpack.c.l.b16 %v5625
  %v5761 = vunpack.c.l.b16 %v5626
  %v5762 = vunpack.c.l.b16 %v5627
  %v5763 = vunpack.c.l.b16 %v5628
  %v5764 = vunpack.c.l.b16 %v5629
  %v5765 = vunpack.c.l.b16 %v5630
  %v5766 = vunpack.c.l.b16 %v5631
  %v5767 = vunpack.c.l.b16 %v5632
  %v5768 = vunpack.c.l.b16 %v5633
  %v5769 = vunpack.c.l.b16 %v5634
  %v5770 = vunpack.c.l.b16 %v5635
  %v5771 = vunpack.c.l.b16 %v5636
  %v5772 = vunpack.c.l.b16 %v5637
  %v5773 = vunpack.c.l.b16 %v5638
  %v5774 = vunpack.c.l.b16 %v5639
  %v5775 = vunpack.c.l.b16 %v5640
  %v5776 = vunpack.c.l.b16 %v5641
  %v5777 = vunpack.c.l.b16 %v5642
  %v5778 = vunpack.c.l.b16 %v5643
  %v5779 = vunpack.c.l.b16 %v5644
  %v5780 = vunpack.c.l.b16 %v5645
  %v5781 = vunpack.c.l.b16 %v5646
  %v5782 = vunpack.c.l.b16 %v5647
  %v5783 = vunpack.c.l.b16 %v5648
  %v5784 = vunpack.c.l.b16 %v5649
  %v5785 = vunpack.c.l.b16 %v5650
  %v5786 = vunpack.c.l.b16 %v5651
  %v5787 = vunpack.c.l.b16 %v5652
  %v5788 = vunpack.c.l.b16 %v5653
  %v5789 = vunpack.c.l.b16 %v5654
  %v5790 = vunpack.c.l.b16 %v5655
  %v5791 = vunpack.c.l.b16 %v5656
  %v5792 = vunpack.c.l.b16 %v5657
  %v5793 = vunpack.c.l.b16 %v5658
  %v5794 = vunpack.c.l.b16 %v5659
  %v5795 = vunpack.c.l.b16 %v5660
  %v5796 = vunpack.c.l.b16 %v5661
  %v5797 = vunpack.c.l.b16 %v5662
  %v5798 = vunpack.c.l.b16 %v5663
  %v5799 = vunpack.c.l.b16 %v5664
  %v5800 = vunpack.c.l.b16 %v5665
  %v5801 = vunpack.c.l.b16 %v5666
  %v5802 = vpack.c.b16 %v5739, %v5738
  %v5803 = vpack.c.b16 %v5741, %v5740
  %v5804 = vpack.c.b16 %v5743, %v5742
  %v5805 = vpack.c.b16 %v5745, %v5744
  %v5806 = vpack.c.b16 %v5747, %v5746
  %v5807 = vpack.c.b16 %v5749, %v5748
  %v5808 = vpack.c.b16 %v5751, %v5750
  %v5809 = vpack.c.b16 %v5753, %v5752
  %v5810 = vpack.c.b16 %v5755, %v5754
  %v5811 = vpack.c.b16 %v5757, %v5756
  %v5812 = vpack.c.b16 %v5759, %v5758
  %v5813 = vpack.c.b16 %v5761, %v5760
  %v5814 = vpack.c.b16 %v5763, %v5762
  %v5815 = vpack.c.b16 %v5765, %v5764
  %v5816 = vpack.c.b16 %v5767, %v5766
  %v5817 = vpack.c.b16 %v5769, %v5768
  %v5818 = vpack.c.b16 %v5771, %v5770
  %v5819 = vpack.c.b16 %v5773, %v5772
  %v5820 = vpack.c.b16 %v5775, %v5774
  %v5821 = vpack.c.b16 %v5777, %v5776
  %v5822 = vpack.c.b16 %v5779, %v5778
  %v5823 = vpack.c.b16 %v5781, %v5780
  %v5824 = vpack.c.b16 %v5783, %v5782
  %v5825 = vpack.c.b16 %v5785, %v5784
  %v5826 = vpack.c.b16 %v5787, %v5786
  %v5827 = vpack.c.b16 %v5789, %v5788
  %v5828 = vpack.c.b16 %v5791, %v5790
  %v5829 = vpack.c.b16 %v5793, %v5792
  %v5830 = vpack.c.b16 %v5795, %v5794
  %v5831 = vpack.c.b16 %v5797, %v5796
  %v5832 = vpack.c.b16 %v5799, %v5798
  %v5833 = vpack.c.b16 %v5801, %v5800
  %5866 = vmatprep.subr.bf16.mxu0 0
  %5867 = vmatpush1.bf16.msra.mxu0 %v5809
  %5868 = vmatprep.subr.bf16.mxu0 0
  %5869 = vmatpush1.bf16.msra.mxu0 %v5808
  %5870 = vmatprep.subr.bf16.mxu0 0
  %5871 = vmatpush1.bf16.msra.mxu0 %v5807
  %5872 = vmatprep.subr.bf16.mxu0 0
  %5873 = vmatpush1.bf16.msra.mxu0 %v5806
  %5874 = vmatprep.subr.bf16.mxu0 0
  %5875 = vmatpush1.bf16.msra.mxu0 %v5805
  %5876 = vmatprep.subr.bf16.mxu0 0
  %5877 = vmatpush1.bf16.msra.mxu0 %v5804
  %5878 = vmatprep.subr.bf16.mxu0 0
  %5879 = vmatpush1.bf16.msra.mxu0 %v5803
  %5880 = vmatprep.subr.bf16.mxu0 0
  %5881 = vmatpush1.bf16.msra.mxu0 %v5802
  %5882 = vmatprep.subr.bf16.mxu0 0
  %5883 = vmatpush2.bf16.msra.mxu0 %v5817
  %5884 = vmatprep.subr.bf16.mxu0 0
  %5885 = vmatpush2.bf16.msra.mxu0 %v5816
  %5886 = vmatprep.subr.bf16.mxu0 0
  %5887 = vmatpush2.bf16.msra.mxu0 %v5815
  %5888 = vmatprep.subr.bf16.mxu0 0
  %5889 = vmatpush2.bf16.msra.mxu0 %v5814
  %5890 = vmatprep.subr.bf16.mxu0 0
  %5891 = vmatpush2.bf16.msra.mxu0 %v5813
  %5892 = vmatprep.subr.bf16.mxu0 0
  %5893 = vmatpush2.bf16.msra.mxu0 %v5812
  %5894 = vmatprep.subr.bf16.mxu0 0
  %5895 = vmatpush2.bf16.msra.mxu0 %v5811
  %5896 = vmatprep.subr.bf16.mxu0 0
  %5897 = vmatpush2.bf16.msra.mxu0 %v5810
  %5898 = vmatprep.mubr.bf16.mxu0 %v5600
  %5899 = vmatmul.mubr.bf16.gmra.mxu0 %v5599
  %v5900 = vpop.f32.mrf.mxu0
  %v5901 = vadd.f32 %v5672, %v5900
  %v5902 = vpop.f32.mrf.mxu0
  %v5903 = vpop.f32.mrf.mxu0
  %v5904 = vpop.f32.mrf.mxu0
  %5905 = vdwg.mxu0
  %5906 = vmatprep.subr.bf16.mxu0 0
  %5907 = vmatpush1.bf16.msra.mxu0 %v5825
  %5908 = vmatprep.subr.bf16.mxu0 0
  %5909 = vmatpush1.bf16.msra.mxu0 %v5824
  %5910 = vmatprep.subr.bf16.mxu0 0
  %5911 = vmatpush1.bf16.msra.mxu0 %v5823
  %5912 = vmatprep.subr.bf16.mxu0 0
  %5913 = vmatpush1.bf16.msra.mxu0 %v5822
  %5914 = vmatprep.subr.bf16.mxu0 0
  %5915 = vmatpush1.bf16.msra.mxu0 %v5821
  %5916 = vmatprep.subr.bf16.mxu0 0
  %5917 = vmatpush1.bf16.msra.mxu0 %v5820
  %5918 = vmatprep.subr.bf16.mxu0 0
  %5919 = vmatpush1.bf16.msra.mxu0 %v5819
  %5920 = vmatprep.subr.bf16.mxu0 0
  %5921 = vmatpush1.bf16.msra.mxu0 %v5818
  %5922 = vmatprep.subr.bf16.mxu0 0
  %5923 = vmatpush2.bf16.msra.mxu0 %v5833
  %5924 = vmatprep.subr.bf16.mxu0 0
  %5925 = vmatpush2.bf16.msra.mxu0 %v5832
  %5926 = vmatprep.subr.bf16.mxu0 0
  %5927 = vmatpush2.bf16.msra.mxu0 %v5831
  %5928 = vmatprep.subr.bf16.mxu0 0
  %5929 = vmatpush2.bf16.msra.mxu0 %v5830
  %5930 = vmatprep.subr.bf16.mxu0 0
  %5931 = vmatpush2.bf16.msra.mxu0 %v5829
  %5932 = vmatprep.subr.bf16.mxu0 0
  %5933 = vmatpush2.bf16.msra.mxu0 %v5828
  %5934 = vmatprep.subr.bf16.mxu0 0
  %5935 = vmatpush2.bf16.msra.mxu0 %v5827
  %5936 = vmatprep.subr.bf16.mxu0 0
  %5937 = vmatpush2.bf16.msra.mxu0 %v5826
  %5938 = vmatprep.mubr.bf16.mxu0 %v5602
  %5939 = vmatmul.mubr.bf16.gmra.mxu0 %v5601
  %v5940 = vpop.f32.mrf.mxu0
  %v5941 = vadd.f32 %v5901, %v5940
  %v5942 = vpop.f32.mrf.mxu0
  %v5943 = vpop.f32.mrf.mxu0
  %v5944 = vpop.f32.mrf.mxu0
  %5945 = vdwg.mxu0
  %5947 = vrot.lane.b32.xlu0 %v5941, 122
  %v5948 = vpop.permute.xlu0 %5947
  %vm5950 = vcmask 1024
  %v5951 = vsel %vm5950, %v5948, 0.0
  %5952 = vadd.xlane.f32.xlu0 %v5951
  %v5953 = vpop.xlane.xlu0 %5952
  %v5954 = vrot.slane %v5953, 4
  %v5955 = vadd.f32 %v5953, %v5954
  %v5956 = vrot.slane %v5955, 2
  %v5957 = vadd.f32 %v5955, %v5956
  %v5958 = vrot.slane %v5957, 1
  %v5959 = vadd.f32 %v5957, %v5958
  %s5960 = vtos %v5959
  %v5961 = vrcp.pop 2.0
  %s5962 = vtos %v5961
  %s5963 = smul.f32 %s5960, %s5962
  %v5964 = vstv %s5963
  %v5965 = vsub.f32 %v5941, %v5964
  %5967 = vset.pattern.permute.xlu0 6
  %5968 = vperm.xlu0 %5967, %v5965
  %v5969 = vpop.permute.xlu0 %5968
  %v5971 = vadd.f32 %v5941, %v5969
  %5972 = vst [vmem:[%s11] sm:$0xff] %v5971
  // Predicated region
  $region46: #{dueling_dqn_forward.1} parent=0 // pred_check
    _
  $region47: #{dueling_dqn_forward.1} parent=0 // pred_check_branch
    %5974 = sbr.rel (0) target = $region49
  $region48: #{dueling_dqn_forward.1} parent=0 // pred_region
    _
  $region49: #{dueling_dqn_forward.1} parent=0 // pred_fallthru
    _
  // Predicated region
  $region50: #{dueling_dqn_forward.1} parent=0 // pred_check
    _
  $region51: #{dueling_dqn_forward.1} parent=0 // pred_check_branch
    %5976 = sbr.rel (0) target = $region53
  $region52: #{dueling_dqn_forward.1} parent=0 // pred_region
    _
  $region53: #{dueling_dqn_forward.1} parent=0 // pred_fallthru
    _

</llo_original>
